<compile_context>
chip_gen: v6e
topology: v6e:2x2x1
jax: 0.10.0
libtpu: 0.0.40
codegen_flags: <defaults>
</compile_context>

<pallas_src>
import functools
import math

import jax
import jax.numpy as jnp
from jax.experimental import pallas as pl
from jax.experimental.pallas import tpu as pltpu


def _round_up(x, m):
    return ((x + m - 1) // m) * m


def _self_attention_kernel(q_ref, k_ref, v_ref, tmat_ref, segsum_ref,
                           wfc_ref, bfc_ref, o_ref, *, heads, scale):
    """Fused per-block forward: head-axis attention + fc_out.

    q/k/v: (BN, E) f32.
    tmat:  (H, E, E) 0/1 matrices; (x @ tmat[j])[n, i*D+d] = x[n, j*D+d]
           (broadcast head j into every head segment).
    segsum:(E, E) 0/1 block-diagonal; (x @ segsum)[n, i*D+d'] = sum_d x[n, i*D+d]
           (per-segment sum, broadcast back over the segment's D lanes).
    wfc:   (E, O_pad), bfc: (1, O_pad), o: (BN, O_pad).
    """
    qs = q_ref[...] * scale          # fold softmax scale into q once (VPU)
    k = k_ref[...]
    v = v_ref[...]
    segsum = segsum_ref[...]

    # Scores: s[j][n, i*D+d'] = scale * <q_head_i, k_head_j>, broadcast over
    # the D lanes of query segment i.  All reductions run on the MXU via the
    # 0/1 matrices -> no cross-lane (XLU) reduces, no lane-offset slicing.
    s = []
    for j in range(heads):           # static unroll, H is tiny
        kb = jnp.dot(k, tmat_ref[j], preferred_element_type=jnp.float32)
        s.append(jnp.dot(qs * kb, segsum, preferred_element_type=jnp.float32))

    # Numerically stable softmax over the H key heads: elementwise across the
    # H dense (BN, E) score slabs (VPU/EUP only).
    m = s[0]
    for j in range(1, heads):
        m = jnp.maximum(m, s[j])

    denom = jnp.zeros_like(m)
    ctx = jnp.zeros_like(qs)
    for j in range(heads):
        e = jnp.exp(s[j] - m)
        denom = denom + e
        vb = jnp.dot(v, tmat_ref[j], preferred_element_type=jnp.float32)
        ctx = ctx + e * vb           # ctx built directly in head-major (BN, E)
    ctx = ctx * pl.reciprocal(denom)   # exact reciprocal (EUP has slack)

    # fc_out on the MXU; output slab is lane-dense (O_pad multiple of 128).
    o_ref[...] = (
        jnp.dot(ctx, wfc_ref[...], preferred_element_type=jnp.float32)
        + bfc_ref[...]
    )


def init_self_attention_params(key, embed_size, heads, output_emb):
    """Mirrors SelfAttention.__init__ (nn.Linear default init), weights (in, out)."""
    assert embed_size % heads == 0, "Embedding size needs to be divisible by heads"
    head_dim = embed_size // heads
    ks = jax.random.split(key, 5)

    def linear_w(k, fan_in, fan_out):
        limit = 1.0 / math.sqrt(fan_in)
        return jax.random.uniform(k, (fan_in, fan_out), jnp.float32, -limit, limit)

    p = {
        "heads": heads,
        "embed_size": embed_size,
        "head_dim": head_dim,
        "output_emb": output_emb,
    }
    # Declared in the PyTorch __init__ but never applied in forward(); kept for parity.
    p["values_W"] = linear_w(ks[0], head_dim, head_dim)
    p["keys_W"] = linear_w(ks[1], head_dim, head_dim)
    p["queries_W"] = linear_w(ks[2], head_dim, head_dim)
    # fc_out
    fc_w = linear_w(ks[3], embed_size, output_emb)
    limit = 1.0 / math.sqrt(embed_size)
    fc_b = jax.random.uniform(ks[4], (output_emb,), jnp.float32, -limit, limit)
    p["fc_W"] = fc_w
    p["fc_b"] = fc_b

    # Lane-dense padding of the fc output dim to a multiple of 128 (once, at init).
    o_pad = max(128, _round_up(output_emb, 128))
    p["fc_W_padded"] = jnp.zeros((embed_size, o_pad), jnp.float32).at[:, :output_emb].set(fc_w)
    p["fc_b_padded"] = jnp.zeros((1, o_pad), jnp.float32).at[:, :output_emb].set(fc_b)

    # Constant 0/1 matrices that move the head-axis score/combine reductions
    # onto the MXU (built once at init, zero runtime cost).
    lane = jnp.arange(embed_size)
    seg = lane // head_dim
    off = lane % head_dim
    off_eq = off[:, None] == off[None, :]
    p["attn_tmat"] = jnp.stack(
        [jnp.where((seg[:, None] == j) & off_eq, 1.0, 0.0) for j in range(heads)]
    ).astype(jnp.float32)                                        # (H, E, E)
    p["attn_segsum"] = (seg[:, None] == seg[None, :]).astype(jnp.float32)  # (E, E)
    return p


def self_attention_forward(params, values, keys, query, mask=None):
    """Matches SelfAttention.forward for mask=None."""
    # TODO(synk): mask branch (energy.masked_fill(mask == 0, -1e20)) not implemented;
    # only the mask=None path is supported by this kernel.
    if mask is not None:
        raise NotImplementedError("mask path not implemented in the Pallas kernel")

    heads = params["heads"]
    embed_size = params["embed_size"]
    output_emb = params["output_emb"]
    wfc = params["fc_W_padded"]          # (E, O_pad)
    bfc = params["fc_b_padded"]          # (1, O_pad)
    tmat = params["attn_tmat"]           # (H, E, E)
    segsum = params["attn_segsum"]       # (E, E)
    o_pad = wfc.shape[1]

    n_rows, e = query.shape
    assert e == embed_size

    # Big row blocks amortize the ~0.35us per-grid-step overhead and give the
    # fc matmul M=256; capped at 256 to bound vreg/VMEM pressure.  Rows are
    # zero-padded to a multiple of the block (padded rows produce a harmless
    # uniform softmax over zero values and are sliced away).
    bn = min(256, _round_up(n_rows, 8))
    n_pad = _round_up(n_rows, bn)
    if n_pad != n_rows:
        pad = ((0, n_pad - n_rows), (0, 0))
        query = jnp.pad(query, pad)
        keys = jnp.pad(keys, pad)
        values = jnp.pad(values, pad)
    grid = (n_pad // bn,)

    kernel = functools.partial(
        _self_attention_kernel,
        heads=heads, scale=1.0 / math.sqrt(embed_size))

    out_padded = pl.pallas_call(
        kernel,
        out_shape=jax.ShapeDtypeStruct((n_pad, o_pad), jnp.float32),
        grid_spec=pltpu.PrefetchScalarGridSpec(
            num_scalar_prefetch=0,
            grid=grid,
            in_specs=[
                pl.BlockSpec((bn, embed_size), lambda b: (b, 0)),   # query
                pl.BlockSpec((bn, embed_size), lambda b: (b, 0)),   # keys
                pl.BlockSpec((bn, embed_size), lambda b: (b, 0)),   # values
                pl.BlockSpec((heads, embed_size, embed_size), lambda b: (0, 0, 0)),
                pl.BlockSpec((embed_size, embed_size), lambda b: (0, 0)),
                pl.BlockSpec((embed_size, o_pad), lambda b: (0, 0)),
                pl.BlockSpec((1, o_pad), lambda b: (0, 0)),
            ],
            out_specs=pl.BlockSpec((bn, o_pad), lambda b: (b, 0)),
        ),
        # TODO(synk): switch to pltpu.CORE_PARALLEL on v7x (2 TCs) for large N.
        compiler_params=pltpu.CompilerParams(
            dimension_semantics=("parallel",)),
    )(query, keys, values, tmat, segsum, wfc, bfc)

    out = out_padded
    if n_pad != n_rows:
        out = out[:n_rows]
    if o_pad != output_emb:
        out = out[:, :output_emb]
    return out


def _reference_forward(params, values, keys, query):
    """Pure-JAX reference reproducing the PyTorch forward (mask=None)."""
    heads = params["heads"]
    d = params["head_dim"]
    e = params["embed_size"]
    n = query.shape[0]
    hp = jax.lax.Precision.HIGHEST
    v = values.reshape(n, heads, d)
    k = keys.reshape(n, heads, d)
    q = query.reshape(n, heads, d)
    energy = jnp.einsum("nid,njd->nij", q, k, precision=hp)
    attn = jax.nn.softmax(energy / (e ** 0.5), axis=-1)
    ctx = jnp.einsum("nij,njd->nid", attn, v, precision=hp).reshape(n, e)
    return jnp.dot(ctx, params["fc_W"], precision=hp) + params["fc_b"]


if __name__ == "__main__":
    embed_size = 32
    heads = 4
    output_emb = 32
    n_rows = 1024        # 4 row blocks of 256

    key = jax.random.PRNGKey(0)
    k_param, k_v, k_k, k_q = jax.random.split(key, 4)
    params = init_self_attention_params(k_param, embed_size, heads, output_emb)

    values = jax.random.normal(k_v, (n_rows, embed_size), jnp.float32)
    keys = jax.random.normal(k_k, (n_rows, embed_size), jnp.float32)
    query = jax.random.normal(k_q, (n_rows, embed_size), jnp.float32)

    out = self_attention_forward(params, values, keys, query, mask=None)
    out = jax.block_until_ready(out)

    ref = _reference_forward(params, values, keys, query)
    assert out.shape == (n_rows, output_emb), out.shape
    max_err = float(jnp.max(jnp.abs(out - ref)))
    # Exact reciprocal now; remaining slack only covers f32-on-MXU pass
    # decomposition differences vs the high-precision reference.
    assert jnp.allclose(out, ref, atol=3e-3, rtol=3e-3), \
        f"mismatch vs reference (max abs err {max_err})"

    print("KERNEL_OK")
</pallas_src>

<mosaic_0001>
module attributes {stable_mosaic.version = 11 : i64} {
  func.func @_self_attention_kernel(%arg0: i32, %arg1: memref<256x32xf32, #tpu.memory_space<vmem>>, %arg2: memref<256x32xf32, #tpu.memory_space<vmem>>, %arg3: memref<256x32xf32, #tpu.memory_space<vmem>>, %arg4: memref<4x32x32xf32, #tpu.memory_space<vmem>>, %arg5: memref<32x32xf32, #tpu.memory_space<vmem>>, %arg6: memref<32x128xf32, #tpu.memory_space<vmem>>, %arg7: memref<1x128xf32, #tpu.memory_space<vmem>>, %arg8: memref<256x128xf32, #tpu.memory_space<vmem>>) attributes {dimension_semantics = [#tpu.dimension_semantics<parallel>], iteration_bounds = array<i64: 4>, scalar_prefetch = 0 : i64, scratch_operands = 0 : i64, tpu.core_type = #tpu.core_type<tc>, window_params = [{transform_indices = @transform_0, window_bounds = array<i64: 256, 32>}, {transform_indices = @transform_1, window_bounds = array<i64: 256, 32>}, {transform_indices = @transform_2, window_bounds = array<i64: 256, 32>}, {pipeline_mode = #tpu.pipeline_mode<synchronous>, transform_indices = @transform_3, window_bounds = array<i64: 4, 32, 32>}, {pipeline_mode = #tpu.pipeline_mode<synchronous>, transform_indices = @transform_4, window_bounds = array<i64: 32, 32>}, {pipeline_mode = #tpu.pipeline_mode<synchronous>, transform_indices = @transform_5, window_bounds = array<i64: 32, 128>}, {pipeline_mode = #tpu.pipeline_mode<synchronous>, transform_indices = @transform_6, window_bounds = array<i64: 1, 128>}, {transform_indices = @transform_7, window_bounds = array<i64: 256, 128>}]} {
    %c0 = arith.constant 0 : index
    %c0_0 = arith.constant 0 : index
    %0 = vector.load %arg1[%c0, %c0_0] : memref<256x32xf32, #tpu.memory_space<vmem>>, vector<256x32xf32>
    %cst = arith.constant 0.176776692 : f32
    %1 = vector.broadcast %cst : f32 to vector<256x32xf32>
    %2 = arith.mulf %0, %1 : vector<256x32xf32>
    %c0_1 = arith.constant 0 : index
    %c0_2 = arith.constant 0 : index
    %3 = vector.load %arg2[%c0_1, %c0_2] : memref<256x32xf32, #tpu.memory_space<vmem>>, vector<256x32xf32>
    %c0_3 = arith.constant 0 : index
    %c0_4 = arith.constant 0 : index
    %4 = vector.load %arg3[%c0_3, %c0_4] : memref<256x32xf32, #tpu.memory_space<vmem>>, vector<256x32xf32>
    %c0_5 = arith.constant 0 : index
    %c0_6 = arith.constant 0 : index
    %5 = vector.load %arg5[%c0_5, %c0_6] : memref<32x32xf32, #tpu.memory_space<vmem>>, vector<32x32xf32>
    %c0_7 = arith.constant 0 : index
    %c0_8 = arith.constant 0 : index
    %c0_9 = arith.constant 0 : index
    %6 = vector.load %arg4[%c0_7, %c0_8, %c0_9] : memref<4x32x32xf32, #tpu.memory_space<vmem>>, vector<1x32x32xf32>
    %7 = vector.shape_cast %6 : vector<1x32x32xf32> to vector<32x32xf32>
    %cst_10 = arith.constant dense<0.000000e+00> : vector<256x32xf32>
    %8 = tpu.matmul %3, %7, %cst_10 {dimension_numbers = #tpu.dot_dimension_numbers<[1], [0], [0], [1], [0, 0, 1, 1], [], []>} : vector<256x32xf32>, vector<32x32xf32>, vector<256x32xf32> -> vector<256x32xf32>
    %9 = arith.mulf %2, %8 : vector<256x32xf32>
    %cst_11 = arith.constant dense<0.000000e+00> : vector<256x32xf32>
    %10 = tpu.matmul %9, %5, %cst_11 {dimension_numbers = #tpu.dot_dimension_numbers<[1], [0], [0], [1], [0, 0, 1, 1], [], []>} : vector<256x32xf32>, vector<32x32xf32>, vector<256x32xf32> -> vector<256x32xf32>
    %c1 = arith.constant 1 : index
    %c0_12 = arith.constant 0 : index
    %c0_13 = arith.constant 0 : index
    %11 = vector.load %arg4[%c1, %c0_12, %c0_13] : memref<4x32x32xf32, #tpu.memory_space<vmem>>, vector<1x32x32xf32>
    %12 = vector.shape_cast %11 : vector<1x32x32xf32> to vector<32x32xf32>
    %cst_14 = arith.constant dense<0.000000e+00> : vector<256x32xf32>
    %13 = tpu.matmul %3, %12, %cst_14 {dimension_numbers = #tpu.dot_dimension_numbers<[1], [0], [0], [1], [0, 0, 1, 1], [], []>} : vector<256x32xf32>, vector<32x32xf32>, vector<256x32xf32> -> vector<256x32xf32>
    %14 = arith.mulf %2, %13 : vector<256x32xf32>
    %cst_15 = arith.constant dense<0.000000e+00> : vector<256x32xf32>
    %15 = tpu.matmul %14, %5, %cst_15 {dimension_numbers = #tpu.dot_dimension_numbers<[1], [0], [0], [1], [0, 0, 1, 1], [], []>} : vector<256x32xf32>, vector<32x32xf32>, vector<256x32xf32> -> vector<256x32xf32>
    %c2 = arith.constant 2 : index
    %c0_16 = arith.constant 0 : index
    %c0_17 = arith.constant 0 : index
    %16 = vector.load %arg4[%c2, %c0_16, %c0_17] : memref<4x32x32xf32, #tpu.memory_space<vmem>>, vector<1x32x32xf32>
    %17 = vector.shape_cast %16 : vector<1x32x32xf32> to vector<32x32xf32>
    %cst_18 = arith.constant dense<0.000000e+00> : vector<256x32xf32>
    %18 = tpu.matmul %3, %17, %cst_18 {dimension_numbers = #tpu.dot_dimension_numbers<[1], [0], [0], [1], [0, 0, 1, 1], [], []>} : vector<256x32xf32>, vector<32x32xf32>, vector<256x32xf32> -> vector<256x32xf32>
    %19 = arith.mulf %2, %18 : vector<256x32xf32>
    %cst_19 = arith.constant dense<0.000000e+00> : vector<256x32xf32>
    %20 = tpu.matmul %19, %5, %cst_19 {dimension_numbers = #tpu.dot_dimension_numbers<[1], [0], [0], [1], [0, 0, 1, 1], [], []>} : vector<256x32xf32>, vector<32x32xf32>, vector<256x32xf32> -> vector<256x32xf32>
    %c3 = arith.constant 3 : index
    %c0_20 = arith.constant 0 : index
    %c0_21 = arith.constant 0 : index
    %21 = vector.load %arg4[%c3, %c0_20, %c0_21] : memref<4x32x32xf32, #tpu.memory_space<vmem>>, vector<1x32x32xf32>
    %22 = vector.shape_cast %21 : vector<1x32x32xf32> to vector<32x32xf32>
    %cst_22 = arith.constant dense<0.000000e+00> : vector<256x32xf32>
    %23 = tpu.matmul %3, %22, %cst_22 {dimension_numbers = #tpu.dot_dimension_numbers<[1], [0], [0], [1], [0, 0, 1, 1], [], []>} : vector<256x32xf32>, vector<32x32xf32>, vector<256x32xf32> -> vector<256x32xf32>
    %24 = arith.mulf %2, %23 : vector<256x32xf32>
    %cst_23 = arith.constant dense<0.000000e+00> : vector<256x32xf32>
    %25 = tpu.matmul %24, %5, %cst_23 {dimension_numbers = #tpu.dot_dimension_numbers<[1], [0], [0], [1], [0, 0, 1, 1], [], []>} : vector<256x32xf32>, vector<32x32xf32>, vector<256x32xf32> -> vector<256x32xf32>
    %26 = arith.maximumf %10, %15 : vector<256x32xf32>
    %27 = arith.maximumf %26, %20 : vector<256x32xf32>
    %28 = arith.maximumf %27, %25 : vector<256x32xf32>
    %cst_24 = arith.constant 0.000000e+00 : f32
    %29 = vector.broadcast %cst_24 : f32 to vector<256x32xf32>
    %cst_25 = arith.constant 0.000000e+00 : f32
    %30 = vector.broadcast %cst_25 : f32 to vector<256x32xf32>
    %31 = arith.subf %10, %28 : vector<256x32xf32>
    %32 = math.exp %31 : vector<256x32xf32>
    %33 = arith.addf %29, %32 : vector<256x32xf32>
    %c0_26 = arith.constant 0 : index
    %c0_27 = arith.constant 0 : index
    %c0_28 = arith.constant 0 : index
    %34 = vector.load %arg4[%c0_26, %c0_27, %c0_28] : memref<4x32x32xf32, #tpu.memory_space<vmem>>, vector<1x32x32xf32>
    %35 = vector.shape_cast %34 : vector<1x32x32xf32> to vector<32x32xf32>
    %cst_29 = arith.constant dense<0.000000e+00> : vector<256x32xf32>
    %36 = tpu.matmul %4, %35, %cst_29 {dimension_numbers = #tpu.dot_dimension_numbers<[1], [0], [0], [1], [0, 0, 1, 1], [], []>} : vector<256x32xf32>, vector<32x32xf32>, vector<256x32xf32> -> vector<256x32xf32>
    %37 = arith.mulf %32, %36 : vector<256x32xf32>
    %38 = arith.addf %30, %37 : vector<256x32xf32>
    %39 = arith.subf %15, %28 : vector<256x32xf32>
    %40 = math.exp %39 : vector<256x32xf32>
    %41 = arith.addf %33, %40 : vector<256x32xf32>
    %c1_30 = arith.constant 1 : index
    %c0_31 = arith.constant 0 : index
    %c0_32 = arith.constant 0 : index
    %42 = vector.load %arg4[%c1_30, %c0_31, %c0_32] : memref<4x32x32xf32, #tpu.memory_space<vmem>>, vector<1x32x32xf32>
    %43 = vector.shape_cast %42 : vector<1x32x32xf32> to vector<32x32xf32>
    %cst_33 = arith.constant dense<0.000000e+00> : vector<256x32xf32>
    %44 = tpu.matmul %4, %43, %cst_33 {dimension_numbers = #tpu.dot_dimension_numbers<[1], [0], [0], [1], [0, 0, 1, 1], [], []>} : vector<256x32xf32>, vector<32x32xf32>, vector<256x32xf32> -> vector<256x32xf32>
    %45 = arith.mulf %40, %44 : vector<256x32xf32>
    %46 = arith.addf %38, %45 : vector<256x32xf32>
    %47 = arith.subf %20, %28 : vector<256x32xf32>
    %48 = math.exp %47 : vector<256x32xf32>
    %49 = arith.addf %41, %48 : vector<256x32xf32>
    %c2_34 = arith.constant 2 : index
    %c0_35 = arith.constant 0 : index
    %c0_36 = arith.constant 0 : index
    %50 = vector.load %arg4[%c2_34, %c0_35, %c0_36] : memref<4x32x32xf32, #tpu.memory_space<vmem>>, vector<1x32x32xf32>
    %51 = vector.shape_cast %50 : vector<1x32x32xf32> to vector<32x32xf32>
    %cst_37 = arith.constant dense<0.000000e+00> : vector<256x32xf32>
    %52 = tpu.matmul %4, %51, %cst_37 {dimension_numbers = #tpu.dot_dimension_numbers<[1], [0], [0], [1], [0, 0, 1, 1], [], []>} : vector<256x32xf32>, vector<32x32xf32>, vector<256x32xf32> -> vector<256x32xf32>
    %53 = arith.mulf %48, %52 : vector<256x32xf32>
    %54 = arith.addf %46, %53 : vector<256x32xf32>
    %55 = arith.subf %25, %28 : vector<256x32xf32>
    %56 = math.exp %55 : vector<256x32xf32>
    %57 = arith.addf %49, %56 : vector<256x32xf32>
    %c3_38 = arith.constant 3 : index
    %c0_39 = arith.constant 0 : index
    %c0_40 = arith.constant 0 : index
    %58 = vector.load %arg4[%c3_38, %c0_39, %c0_40] : memref<4x32x32xf32, #tpu.memory_space<vmem>>, vector<1x32x32xf32>
    %59 = vector.shape_cast %58 : vector<1x32x32xf32> to vector<32x32xf32>
    %cst_41 = arith.constant dense<0.000000e+00> : vector<256x32xf32>
    %60 = tpu.matmul %4, %59, %cst_41 {dimension_numbers = #tpu.dot_dimension_numbers<[1], [0], [0], [1], [0, 0, 1, 1], [], []>} : vector<256x32xf32>, vector<32x32xf32>, vector<256x32xf32> -> vector<256x32xf32>
    %61 = arith.mulf %56, %60 : vector<256x32xf32>
    %62 = arith.addf %54, %61 : vector<256x32xf32>
    %63 = tpu.reciprocal %57 : vector<256x32xf32> -> vector<256x32xf32>
    %64 = arith.mulf %62, %63 : vector<256x32xf32>
    %c0_42 = arith.constant 0 : index
    %c0_43 = arith.constant 0 : index
    %65 = vector.load %arg6[%c0_42, %c0_43] : memref<32x128xf32, #tpu.memory_space<vmem>>, vector<32x128xf32>
    %cst_44 = arith.constant dense<0.000000e+00> : vector<256x128xf32>
    %66 = tpu.matmul %64, %65, %cst_44 {dimension_numbers = #tpu.dot_dimension_numbers<[1], [0], [0], [1], [0, 0, 1, 1], [], []>} : vector<256x32xf32>, vector<32x128xf32>, vector<256x128xf32> -> vector<256x128xf32>
    %c0_45 = arith.constant 0 : index
    %c0_46 = arith.constant 0 : index
    %67 = vector.load %arg7[%c0_45, %c0_46] : memref<1x128xf32, #tpu.memory_space<vmem>>, vector<1x128xf32>
    %68 = vector.broadcast %67 : vector<1x128xf32> to vector<256x128xf32>
    %69 = arith.addf %66, %68 : vector<256x128xf32>
    %c0_47 = arith.constant 0 : index
    %c0_48 = arith.constant 0 : index
    %70 = vector.load %arg8[%c0_47, %c0_48] : memref<256x128xf32, #tpu.memory_space<vmem>>, vector<256x128xf32>
    tpu.vector_store %arg8[%c0_47, %c0_48], %69 {strides = array<i32>} : memref<256x128xf32, #tpu.memory_space<vmem>>, vector<256x128xf32>,
    return
  }
  func.func @transform_0(%arg0: i32) -> (i32, i32) {
    %c0_i32 = arith.constant 0 : i32
    %c0_i32_0 = arith.constant 0 : i32
    return %arg0, %c0_i32 : i32, i32
  }
  func.func @transform_1(%arg0: i32) -> (i32, i32) {
    %c0_i32 = arith.constant 0 : i32
    %c0_i32_0 = arith.constant 0 : i32
    return %arg0, %c0_i32 : i32, i32
  }
  func.func @transform_2(%arg0: i32) -> (i32, i32) {
    %c0_i32 = arith.constant 0 : i32
    %c0_i32_0 = arith.constant 0 : i32
    return %arg0, %c0_i32 : i32, i32
  }
  func.func @transform_3(%arg0: i32) -> (i32, i32, i32) {
    %c0_i32 = arith.constant 0 : i32
    %c0_i32_0 = arith.constant 0 : i32
    %c0_i32_1 = arith.constant 0 : i32
    %c0_i32_2 = arith.constant 0 : i32
    return %c0_i32, %c0_i32_0, %c0_i32_1 : i32, i32, i32
  }
  func.func @transform_4(%arg0: i32) -> (i32, i32) {
    %c0_i32 = arith.constant 0 : i32
    %c0_i32_0 = arith.constant 0 : i32
    %c0_i32_1 = arith.constant 0 : i32
    return %c0_i32, %c0_i32_0 : i32, i32
  }
  func.func @transform_5(%arg0: i32) -> (i32, i32) {
    %c0_i32 = arith.constant 0 : i32
    %c0_i32_0 = arith.constant 0 : i32
    %c0_i32_1 = arith.constant 0 : i32
    return %c0_i32, %c0_i32_0 : i32, i32
  }
  func.func @transform_6(%arg0: i32) -> (i32, i32) {
    %c0_i32 = arith.constant 0 : i32
    %c0_i32_0 = arith.constant 0 : i32
    %c0_i32_1 = arith.constant 0 : i32
    return %c0_i32, %c0_i32_0 : i32, i32
  }
  func.func @transform_7(%arg0: i32) -> (i32, i32) {
    %c0_i32 = arith.constant 0 : i32
    %c0_i32_0 = arith.constant 0 : i32
    return %arg0, %c0_i32 : i32, i32
  }
}

</mosaic_0001>

<llo_original>
// kernel: tpu_custom_call.1
$region0: #{tpu_custom_call.1}
  #allocation0 [shape = 'u32[]', space=smem, size = 0x4, offset = 0x4, fixed_abs, tag = 'smem constant byte address 0x4 - core index']
  #allocation1 [shape = 'u32[144,128]{1,0:T(1,128)}', space=vmem, size = 0x12000, scoped, tag = 'internal scratch']
  %s0 = inlined_call_operand.vmem [shape: f32[1024,32], index: 0, kind: input, shape index: {}]
  %s1 = inlined_call_operand.vmem [shape: f32[1024,32], index: 1, kind: input, shape index: {}]
  %s2 = inlined_call_operand.vmem [shape: f32[1024,32], index: 2, kind: input, shape index: {}]
  %s3 = inlined_call_operand.vmem [shape: f32[4,32,32], index: 3, kind: input, shape index: {}]
  %s4 = inlined_call_operand.vmem [shape: f32[32,32], index: 4, kind: input, shape index: {}]
  %s5 = inlined_call_operand.vmem [shape: f32[32,128], index: 5, kind: input, shape index: {}]
  %s6 = inlined_call_operand.vmem [shape: f32[1,128], index: 6, kind: input, shape index: {}]
  %s7 = inlined_call_operand.hbm [shape: f32[1024,128], index: 7, kind: output, shape index: {}]
  %s8 = sld [smem:[#allocation0]]
  $region61: #{tpu_custom_call.1} parent=0
    _
  %s10 = ssub.s32 1, %s8
  %s11 = scalar_select 0, %s10, %s8
  $region1: #{tpu_custom_call.1} parent=0
    #allocation2 [shape = 'u8[262144]{0}', space=vmem, size = 0x40000, scoped, tag = 'output window, operand 0']
    #allocation3 [shape = 's32[2]{0}', space=sflag, size = 0x8, scoped, tag = 'scoped memory for tpu_custom_call.1']
    %12 = vsyncpa [#allocation3], 0
    %s13 = scalar_lea.sflag [#allocation3], 1
    %14 = vsyncpa %s13, 0
    loop: start=0, step=1, limit=6
    $region2: #{tpu_custom_call.1} parent=1 // loop_pre_header
      _
    $region3: #{tpu_custom_call.1} parent=1 // loop_header
      %s16 = sphi 0, %s20
      %p17 = scmp.ge.s32.totalorder %s16, 6
      %s26 = sphi 0, %s28
      %s29 = sphi 0, %s26
      %s30 = sphi 0, %s29
      %s46 = sphi 0, %s30
      %s52 = sphi 0, %s54
      %s55 = sphi 0, %s52
      %s56 = sphi 0, %s55
      %s72 = sphi 0, %s56
      %s78 = sphi 0, %s80
      %s81 = sphi 0, %s78
      %s82 = sphi 0, %s81
      %s98 = sphi 0, %s82
      %s102 = sphi 0, %s102
      %s104 = sphi 0, %s102
      %s105 = sphi 0, %s104
      %s119 = sphi 0, %s105
      %s123 = sphi 0, %s123
      %s125 = sphi 0, %s123
      %s126 = sphi 0, %s125
      %s140 = sphi 0, %s126
      %s144 = sphi 0, %s144
      %s146 = sphi 0, %s144
      %s147 = sphi 0, %s146
      %s161 = sphi 0, %s147
      %s165 = sphi 0, %s165
      %s167 = sphi 0, %s165
      %s168 = sphi 0, %s167
      %s182 = sphi 0, %s168
      %s188 = sphi 0, %s190
      %s191 = sphi 0, %s188
      %s192 = sphi 0, %s191
      %s208 = sphi 0, %s192
    $region4: #{tpu_custom_call.1} parent=1 // loop_header_branch
      %19 = sbr.rel (%p17) target = $region8
    $region5: #{tpu_custom_call.1} parent=1 // loop_body
      %s21 = ssub.s32 %s16, 1
      %s22 = ssub.s32 %s16, 2
      %s23 = sadd.s32 %s16, 1
      %s24 = ssub.s32 %s16, %s23
      %p25 = scmp.eq.s32.totalorder %s24, 0
      %s27 = sadd.s32 %s26, 1
      %s28 = scalar_select %p25, %s26, %s27
      %p31 = pneg %p25
      %p32 = scmp.eq.s32.totalorder %s16, 3
      %p33 = por %p31, %p32
      %p34 = scmp.ne.s32.totalorder %s26, %s29
      %p35 = scmp.eq.s32.totalorder %s16, 0
      %p36 = por %p34, %p35
      %p37 = scmp.ne.s32.totalorder %s26, %s29
      %p38 = scmp.eq.s32.totalorder %s21, 3
      %p39 = por %p37, %p38
      %p40 = scmp.ne.s32.totalorder %s29, %s30
      %p41 = scmp.eq.s32.totalorder %s21, 0
      %p42 = por %p40, %p41
      %p43 = scmp.ne.s32.totalorder %s29, %s30
      %p44 = scmp.eq.s32.totalorder %s22, 3
      %p45 = por %p43, %p44
      %p47 = scmp.ne.s32.totalorder %s30, %s46
      %p48 = scmp.eq.s32.totalorder %s22, 0
      %p49 = por %p47, %p48
      %s50 = ssub.s32 %s16, %s23
      %p51 = scmp.eq.s32.totalorder %s50, 0
      %s53 = sadd.s32 %s52, 1
      %s54 = scalar_select %p51, %s52, %s53
      %p57 = pneg %p51
      %p58 = scmp.eq.s32.totalorder %s16, 3
      %p59 = por %p57, %p58
      %p60 = scmp.ne.s32.totalorder %s52, %s55
      %p61 = scmp.eq.s32.totalorder %s16, 0
      %p62 = por %p60, %p61
      %p63 = scmp.ne.s32.totalorder %s52, %s55
      %p64 = scmp.eq.s32.totalorder %s21, 3
      %p65 = por %p63, %p64
      %p66 = scmp.ne.s32.totalorder %s55, %s56
      %p67 = scmp.eq.s32.totalorder %s21, 0
      %p68 = por %p66, %p67
      %p69 = scmp.ne.s32.totalorder %s55, %s56
      %p70 = scmp.eq.s32.totalorder %s22, 3
      %p71 = por %p69, %p70
      %p73 = scmp.ne.s32.totalorder %s56, %s72
      %p74 = scmp.eq.s32.totalorder %s22, 0
      %p75 = por %p73, %p74
      %s76 = ssub.s32 %s16, %s23
      %p77 = scmp.eq.s32.totalorder %s76, 0
      %s79 = sadd.s32 %s78, 1
      %s80 = scalar_select %p77, %s78, %s79
      %p83 = pneg %p77
      %p84 = scmp.eq.s32.totalorder %s16, 3
      %p85 = por %p83, %p84
      %p86 = scmp.ne.s32.totalorder %s78, %s81
      %p87 = scmp.eq.s32.totalorder %s16, 0
      %p88 = por %p86, %p87
      %p89 = scmp.ne.s32.totalorder %s78, %s81
      %p90 = scmp.eq.s32.totalorder %s21, 3
      %p91 = por %p89, %p90
      %p92 = scmp.ne.s32.totalorder %s81, %s82
      %p93 = scmp.eq.s32.totalorder %s21, 0
      %p94 = por %p92, %p93
      %p95 = scmp.ne.s32.totalorder %s81, %s82
      %p96 = scmp.eq.s32.totalorder %s22, 3
      %p97 = por %p95, %p96
      %p99 = scmp.ne.s32.totalorder %s82, %s98
      %p100 = scmp.eq.s32.totalorder %s22, 0
      %p101 = por %p99, %p100
      %s103 = sadd.s32 %s102, 1
      %p106 = scmp.eq.s32.totalorder %s16, 3
      %p107 = scmp.ne.s32.totalorder %s102, %s104
      %p108 = scmp.eq.s32.totalorder %s16, 0
      %p109 = por %p107, %p108
      %p110 = scmp.ne.s32.totalorder %s102, %s104
      %p111 = scmp.eq.s32.totalorder %s21, 3
      %p112 = por %p110, %p111
      %p113 = scmp.ne.s32.totalorder %s104, %s105
      %p114 = scmp.eq.s32.totalorder %s21, 0
      %p115 = por %p113, %p114
      %p116 = scmp.ne.s32.totalorder %s104, %s105
      %p117 = scmp.eq.s32.totalorder %s22, 3
      %p118 = por %p116, %p117
      %p120 = scmp.ne.s32.totalorder %s105, %s119
      %p121 = scmp.eq.s32.totalorder %s22, 0
      %p122 = por %p120, %p121
      %s124 = sadd.s32 %s123, 1
      %p127 = scmp.eq.s32.totalorder %s16, 3
      %p128 = scmp.ne.s32.totalorder %s123, %s125
      %p129 = scmp.eq.s32.totalorder %s16, 0
      %p130 = por %p128, %p129
      %p131 = scmp.ne.s32.totalorder %s123, %s125
      %p132 = scmp.eq.s32.totalorder %s21, 3
      %p133 = por %p131, %p132
      %p134 = scmp.ne.s32.totalorder %s125, %s126
      %p135 = scmp.eq.s32.totalorder %s21, 0
      %p136 = por %p134, %p135
      %p137 = scmp.ne.s32.totalorder %s125, %s126
      %p138 = scmp.eq.s32.totalorder %s22, 3
      %p139 = por %p137, %p138
      %p141 = scmp.ne.s32.totalorder %s126, %s140
      %p142 = scmp.eq.s32.totalorder %s22, 0
      %p143 = por %p141, %p142
      %s145 = sadd.s32 %s144, 1
      %p148 = scmp.eq.s32.totalorder %s16, 3
      %p149 = scmp.ne.s32.totalorder %s144, %s146
      %p150 = scmp.eq.s32.totalorder %s16, 0
      %p151 = por %p149, %p150
      %p152 = scmp.ne.s32.totalorder %s144, %s146
      %p153 = scmp.eq.s32.totalorder %s21, 3
      %p154 = por %p152, %p153
      %p155 = scmp.ne.s32.totalorder %s146, %s147
      %p156 = scmp.eq.s32.totalorder %s21, 0
      %p157 = por %p155, %p156
      %p158 = scmp.ne.s32.totalorder %s146, %s147
      %p159 = scmp.eq.s32.totalorder %s22, 3
      %p160 = por %p158, %p159
      %p162 = scmp.ne.s32.totalorder %s147, %s161
      %p163 = scmp.eq.s32.totalorder %s22, 0
      %p164 = por %p162, %p163
      %s166 = sadd.s32 %s165, 1
      %p169 = scmp.eq.s32.totalorder %s16, 3
      %p170 = scmp.ne.s32.totalorder %s165, %s167
      %p171 = scmp.eq.s32.totalorder %s16, 0
      %p172 = por %p170, %p171
      %p173 = scmp.ne.s32.totalorder %s165, %s167
      %p174 = scmp.eq.s32.totalorder %s21, 3
      %p175 = por %p173, %p174
      %p176 = scmp.ne.s32.totalorder %s167, %s168
      %p177 = scmp.eq.s32.totalorder %s21, 0
      %p178 = por %p176, %p177
      %p179 = scmp.ne.s32.totalorder %s167, %s168
      %p180 = scmp.eq.s32.totalorder %s22, 3
      %p181 = por %p179, %p180
      %p183 = scmp.ne.s32.totalorder %s168, %s182
      %p184 = scmp.eq.s32.totalorder %s22, 0
      %p185 = por %p183, %p184
      %s186 = ssub.s32 %s16, %s23
      %p187 = scmp.eq.s32.totalorder %s186, 0
      %s189 = sadd.s32 %s188, 1
      %s190 = scalar_select %p187, %s188, %s189
      %p193 = pneg %p187
      %p194 = scmp.eq.s32.totalorder %s16, 3
      %p195 = por %p193, %p194
      %p196 = scmp.ne.s32.totalorder %s188, %s191
      %p197 = scmp.eq.s32.totalorder %s16, 0
      %p198 = por %p196, %p197
      %p199 = scmp.ne.s32.totalorder %s188, %s191
      %p200 = scmp.eq.s32.totalorder %s21, 3
      %p201 = por %p199, %p200
      %p202 = scmp.ne.s32.totalorder %s191, %s192
      %p203 = scmp.eq.s32.totalorder %s21, 0
      %p204 = por %p202, %p203
      %p205 = scmp.ne.s32.totalorder %s191, %s192
      %p206 = scmp.eq.s32.totalorder %s22, 3
      %p207 = por %p205, %p206
      %p209 = scmp.ne.s32.totalorder %s192, %s208
      %p210 = scmp.eq.s32.totalorder %s22, 0
      %p211 = por %p209, %p210
      %p212 = scmp.le.s32.totalorder 1, %s16
      %p213 = scmp.lt.s32.totalorder %s16, 5
      %p214 = pnand %p212, %p213
      %p215 = pneg %p214
      // Predicated region
      $region9: #{tpu_custom_call.1} parent=5 // pred_check
        _
      $region10: #{tpu_custom_call.1} parent=5 // pred_check_branch
        %217 = sbr.rel (%p214) target = $region12
      $region11: #{tpu_custom_call.1} parent=5 // pred_region
        %s218 = ssub.s32 %s16, 1
        // Predicated region
        $region13: #{tpu_custom_call.1} parent=11 // pred_check
          %p219 = pneg %p115
        $region14: #{tpu_custom_call.1} parent=11 // pred_check_branch
          %221 = sbr.rel (%p219) target = $region16
        $region15: #{tpu_custom_call.1} parent=11 // pred_region
          _
        $region16: #{tpu_custom_call.1} parent=11 // pred_fallthru
          _
        // Predicated region
        $region17: #{tpu_custom_call.1} parent=11 // pred_check
          %p222 = pneg %p136
        $region18: #{tpu_custom_call.1} parent=11 // pred_check_branch
          %224 = sbr.rel (%p222) target = $region20
        $region19: #{tpu_custom_call.1} parent=11 // pred_region
          _
        $region20: #{tpu_custom_call.1} parent=11 // pred_fallthru
          _
        // Predicated region
        $region21: #{tpu_custom_call.1} parent=11 // pred_check
          %p225 = pneg %p157
        $region22: #{tpu_custom_call.1} parent=11 // pred_check_branch
          %227 = sbr.rel (%p225) target = $region24
        $region23: #{tpu_custom_call.1} parent=11 // pred_region
          _
        $region24: #{tpu_custom_call.1} parent=11 // pred_fallthru
          _
        // Predicated region
        $region25: #{tpu_custom_call.1} parent=11 // pred_check
          %p228 = pneg %p178
        $region26: #{tpu_custom_call.1} parent=11 // pred_check_branch
          %230 = sbr.rel (%p228) target = $region28
        $region27: #{tpu_custom_call.1} parent=11 // pred_region
          _
        $region28: #{tpu_custom_call.1} parent=11 // pred_fallthru
          _
      $region12: #{tpu_custom_call.1} parent=5 // pred_fallthru
        _
      %p231 = scmp.lt.s32.totalorder %s16, 4
      // Predicated region
      $region29: #{tpu_custom_call.1} parent=5 // pred_check
        %p232 = pneg %p231
      $region30: #{tpu_custom_call.1} parent=5 // pred_check_branch
        %234 = sbr.rel (%p232) target = $region32
      $region31: #{tpu_custom_call.1} parent=5 // pred_region
        // Predicated region
        $region33: #{tpu_custom_call.1} parent=31 // pred_check
          %p235 = pneg %p36
        $region34: #{tpu_custom_call.1} parent=31 // pred_check_branch
          %237 = sbr.rel (%p235) target = $region36
        $region35: #{tpu_custom_call.1} parent=31 // pred_region
          %s238 = smul.u32 32, %s16
          %p239 = scmp.lt.s32.totalorder %s238, 127
          %s240 = scalar_select %p239, %s238, 127
          %s241 = smul.addr %s240, 8
          %s242 = scalar_lea.vmem %s0, %s241
          %s243 = smul.u32 32, %s16
        $region36: #{tpu_custom_call.1} parent=31 // pred_fallthru
          _
        // Predicated region
        $region37: #{tpu_custom_call.1} parent=31 // pred_check
          %p244 = pneg %p62
        $region38: #{tpu_custom_call.1} parent=31 // pred_check_branch
          %246 = sbr.rel (%p244) target = $region40
        $region39: #{tpu_custom_call.1} parent=31 // pred_region
          %s247 = smul.u32 32, %s16
          %p248 = scmp.lt.s32.totalorder %s247, 127
          %s249 = scalar_select %p248, %s247, 127
          %s250 = smul.addr %s249, 8
          %s251 = scalar_lea.vmem %s1, %s250
          %s252 = smul.u32 32, %s16
        $region40: #{tpu_custom_call.1} parent=31 // pred_fallthru
          _
        // Predicated region
        $region41: #{tpu_custom_call.1} parent=31 // pred_check
          %p253 = pneg %p88
        $region42: #{tpu_custom_call.1} parent=31 // pred_check_branch
          %255 = sbr.rel (%p253) target = $region44
        $region43: #{tpu_custom_call.1} parent=31 // pred_region
          %s256 = smul.u32 32, %s16
          %p257 = scmp.lt.s32.totalorder %s256, 127
          %s258 = scalar_select %p257, %s256, 127
          %s259 = smul.addr %s258, 8
          %s260 = scalar_lea.vmem %s2, %s259
          %s261 = smul.u32 32, %s16
        $region44: #{tpu_custom_call.1} parent=31 // pred_fallthru
          _
      $region32: #{tpu_custom_call.1} parent=5 // pred_fallthru
        _
      %p262 = scmp.le.s32.totalorder 1, %s16
      %p263 = scmp.lt.s32.totalorder %s16, 5
      %p264 = pnand %p262, %p263
      %p265 = pneg %p264
      // Predicated region
      $region45: #{tpu_custom_call.1} parent=5 // pred_check
        _
      $region46: #{tpu_custom_call.1} parent=5 // pred_check_branch
        %267 = sbr.rel (%p264) target = $region48
      $region47: #{tpu_custom_call.1} parent=5 // pred_region
        %s268 = ssub.s32 %s16, 1
        %s269 = smul.u32 32, %s21
        %p270 = scmp.lt.s32.totalorder %s269, 127
        %s271 = scalar_select %p270, %s269, 127
        %s272 = smul.addr %s271, 8
        %s273 = scalar_lea.vmem %s0, %s272
        %p274 = pneg %p42
        %p275 = pneg %p39
        %s276 = smul.u32 32, %s21
        %p277 = scmp.lt.s32.totalorder %s276, 127
        %s278 = scalar_select %p277, %s276, 127
        %s279 = smul.addr %s278, 8
        %s280 = scalar_lea.vmem %s1, %s279
        %p281 = pneg %p68
        %p282 = pneg %p65
        %s283 = smul.u32 32, %s21
        %p284 = scmp.lt.s32.totalorder %s283, 127
        %s285 = scalar_select %p284, %s283, 127
        %s286 = smul.addr %s285, 8
        %s287 = scalar_lea.vmem %s2, %s286
        %p288 = pneg %p94
        %p289 = pneg %p91
        %p290 = pneg %p115
        %p291 = pneg %p112
        %p292 = pneg %p136
        %p293 = pneg %p133
        %p294 = pneg %p157
        %p295 = pneg %p154
        %p296 = pneg %p178
        %p297 = pneg %p175
        %p298 = pneg %p204
        %p299 = pneg %p201
        %s300 = sand.u32 %s191, 1
        %s301 = scalar_lea.sflag [#allocation3], %s300
        %s302 = sand.u32 %s191, 1
        %s303 = smul.addr %s302, 256
        %s304 = scalar_lea.vmem [#allocation2], %s303
        %s305 = smul.u32 32, %s21
        %p306 = scmp.lt.s32.totalorder %s305, 127
        %s307 = scalar_select %p306, %s305, 127
        %s308 = smul.addr %s307, 8
        %s309 = scalar_lea.vmem %s0, %s308
        %s310 = smul.u32 32, %s21
        %s311 = smul.u32 32, %s21
        %p312 = scmp.lt.s32.totalorder %s311, 127
        %s313 = scalar_select %p312, %s311, 127
        %s314 = smul.addr %s313, 8
        %s315 = scalar_lea.vmem %s1, %s314
        %s316 = smul.u32 32, %s21
        %s317 = smul.u32 32, %s21
        %p318 = scmp.lt.s32.totalorder %s317, 127
        %s319 = scalar_select %p318, %s317, 127
        %s320 = smul.addr %s319, 8
        %s321 = scalar_lea.vmem %s2, %s320
        %s322 = smul.u32 32, %s21
        %s323 = smul.u32 32, %s21
        %v324 = vld [vmem:[%s309] sm:$0xff]
        %v325 = vld [vmem:[%s309 + $0x8] sm:$0xff]
        %v326 = vld [vmem:[%s309 + $0x10] sm:$0xff]
        %v327 = vld [vmem:[%s309 + $0x18] sm:$0xff]
        %v328 = vld [vmem:[%s309 + $0x20] sm:$0xff]
        %v329 = vld [vmem:[%s309 + $0x28] sm:$0xff]
        %v330 = vld [vmem:[%s309 + $0x30] sm:$0xff]
        %v331 = vld [vmem:[%s309 + $0x38] sm:$0xff]
        %v332 = vld [vmem:[%s309 + $0x40] sm:$0xff]
        %v333 = vld [vmem:[%s309 + $0x48] sm:$0xff]
        %v334 = vld [vmem:[%s309 + $0x50] sm:$0xff]
        %v335 = vld [vmem:[%s309 + $0x58] sm:$0xff]
        %v336 = vld [vmem:[%s309 + $0x60] sm:$0xff]
        %v337 = vld [vmem:[%s309 + $0x68] sm:$0xff]
        %v338 = vld [vmem:[%s309 + $0x70] sm:$0xff]
        %v339 = vld [vmem:[%s309 + $0x78] sm:$0xff]
        %v340 = vld [vmem:[%s309 + $0x80] sm:$0xff]
        %v341 = vld [vmem:[%s309 + $0x88] sm:$0xff]
        %v342 = vld [vmem:[%s309 + $0x90] sm:$0xff]
        %v343 = vld [vmem:[%s309 + $0x98] sm:$0xff]
        %v344 = vld [vmem:[%s309 + $0xa0] sm:$0xff]
        %v345 = vld [vmem:[%s309 + $0xa8] sm:$0xff]
        %v346 = vld [vmem:[%s309 + $0xb0] sm:$0xff]
        %v347 = vld [vmem:[%s309 + $0xb8] sm:$0xff]
        %v348 = vld [vmem:[%s309 + $0xc0] sm:$0xff]
        %v349 = vld [vmem:[%s309 + $0xc8] sm:$0xff]
        %v350 = vld [vmem:[%s309 + $0xd0] sm:$0xff]
        %v351 = vld [vmem:[%s309 + $0xd8] sm:$0xff]
        %v352 = vld [vmem:[%s309 + $0xe0] sm:$0xff]
        %v353 = vld [vmem:[%s309 + $0xe8] sm:$0xff]
        %v354 = vld [vmem:[%s309 + $0xf0] sm:$0xff]
        %v355 = vld [vmem:[%s309 + $0xf8] sm:$0xff]
        %v356 = vmul.f32 %v324, 0.17677669
        %v357 = vmul.f32 %v325, 0.17677669
        %v358 = vmul.f32 %v326, 0.17677669
        %v359 = vmul.f32 %v327, 0.17677669
        %v360 = vmul.f32 %v328, 0.17677669
        %v361 = vmul.f32 %v329, 0.17677669
        %v362 = vmul.f32 %v330, 0.17677669
        %v363 = vmul.f32 %v331, 0.17677669
        %v364 = vmul.f32 %v332, 0.17677669
        %v365 = vmul.f32 %v333, 0.17677669
        %v366 = vmul.f32 %v334, 0.17677669
        %v367 = vmul.f32 %v335, 0.17677669
        %v368 = vmul.f32 %v336, 0.17677669
        %v369 = vmul.f32 %v337, 0.17677669
        %v370 = vmul.f32 %v338, 0.17677669
        %v371 = vmul.f32 %v339, 0.17677669
        %v372 = vmul.f32 %v340, 0.17677669
        %v373 = vmul.f32 %v341, 0.17677669
        %v374 = vmul.f32 %v342, 0.17677669
        %v375 = vmul.f32 %v343, 0.17677669
        %v376 = vmul.f32 %v344, 0.17677669
        %v377 = vmul.f32 %v345, 0.17677669
        %v378 = vmul.f32 %v346, 0.17677669
        %v379 = vmul.f32 %v347, 0.17677669
        %v380 = vmul.f32 %v348, 0.17677669
        %v381 = vmul.f32 %v349, 0.17677669
        %v382 = vmul.f32 %v350, 0.17677669
        %v383 = vmul.f32 %v351, 0.17677669
        %v384 = vmul.f32 %v352, 0.17677669
        %v385 = vmul.f32 %v353, 0.17677669
        %v386 = vmul.f32 %v354, 0.17677669
        %v387 = vmul.f32 %v355, 0.17677669
        %v388 = vld [vmem:[%s315] sm:$0xff]
        %v389 = vld [vmem:[%s315 + $0x8] sm:$0xff]
        %v390 = vld [vmem:[%s315 + $0x10] sm:$0xff]
        %v391 = vld [vmem:[%s315 + $0x18] sm:$0xff]
        %v392 = vld [vmem:[%s315 + $0x20] sm:$0xff]
        %v393 = vld [vmem:[%s315 + $0x28] sm:$0xff]
        %v394 = vld [vmem:[%s315 + $0x30] sm:$0xff]
        %v395 = vld [vmem:[%s315 + $0x38] sm:$0xff]
        %v396 = vld [vmem:[%s315 + $0x40] sm:$0xff]
        %v397 = vld [vmem:[%s315 + $0x48] sm:$0xff]
        %v398 = vld [vmem:[%s315 + $0x50] sm:$0xff]
        %v399 = vld [vmem:[%s315 + $0x58] sm:$0xff]
        %v400 = vld [vmem:[%s315 + $0x60] sm:$0xff]
        %v401 = vld [vmem:[%s315 + $0x68] sm:$0xff]
        %v402 = vld [vmem:[%s315 + $0x70] sm:$0xff]
        %v403 = vld [vmem:[%s315 + $0x78] sm:$0xff]
        %v404 = vld [vmem:[%s315 + $0x80] sm:$0xff]
        %v405 = vld [vmem:[%s315 + $0x88] sm:$0xff]
        %v406 = vld [vmem:[%s315 + $0x90] sm:$0xff]
        %v407 = vld [vmem:[%s315 + $0x98] sm:$0xff]
        %v408 = vld [vmem:[%s315 + $0xa0] sm:$0xff]
        %v409 = vld [vmem:[%s315 + $0xa8] sm:$0xff]
        %v410 = vld [vmem:[%s315 + $0xb0] sm:$0xff]
        %v411 = vld [vmem:[%s315 + $0xb8] sm:$0xff]
        %v412 = vld [vmem:[%s315 + $0xc0] sm:$0xff]
        %v413 = vld [vmem:[%s315 + $0xc8] sm:$0xff]
        %v414 = vld [vmem:[%s315 + $0xd0] sm:$0xff]
        %v415 = vld [vmem:[%s315 + $0xd8] sm:$0xff]
        %v416 = vld [vmem:[%s315 + $0xe0] sm:$0xff]
        %v417 = vld [vmem:[%s315 + $0xe8] sm:$0xff]
        %v418 = vld [vmem:[%s315 + $0xf0] sm:$0xff]
        %v419 = vld [vmem:[%s315 + $0xf8] sm:$0xff]
        %v420 = vld [vmem:[%s321] sm:$0xff]
        %v421 = vld [vmem:[%s321 + $0x8] sm:$0xff]
        %v422 = vld [vmem:[%s321 + $0x10] sm:$0xff]
        %v423 = vld [vmem:[%s321 + $0x18] sm:$0xff]
        %v424 = vld [vmem:[%s321 + $0x20] sm:$0xff]
        %v425 = vld [vmem:[%s321 + $0x28] sm:$0xff]
        %v426 = vld [vmem:[%s321 + $0x30] sm:$0xff]
        %v427 = vld [vmem:[%s321 + $0x38] sm:$0xff]
        %v428 = vld [vmem:[%s321 + $0x40] sm:$0xff]
        %v429 = vld [vmem:[%s321 + $0x48] sm:$0xff]
        %v430 = vld [vmem:[%s321 + $0x50] sm:$0xff]
        %v431 = vld [vmem:[%s321 + $0x58] sm:$0xff]
        %v432 = vld [vmem:[%s321 + $0x60] sm:$0xff]
        %v433 = vld [vmem:[%s321 + $0x68] sm:$0xff]
        %v434 = vld [vmem:[%s321 + $0x70] sm:$0xff]
        %v435 = vld [vmem:[%s321 + $0x78] sm:$0xff]
        %v436 = vld [vmem:[%s321 + $0x80] sm:$0xff]
        %v437 = vld [vmem:[%s321 + $0x88] sm:$0xff]
        %v438 = vld [vmem:[%s321 + $0x90] sm:$0xff]
        %v439 = vld [vmem:[%s321 + $0x98] sm:$0xff]
        %v440 = vld [vmem:[%s321 + $0xa0] sm:$0xff]
        %v441 = vld [vmem:[%s321 + $0xa8] sm:$0xff]
        %v442 = vld [vmem:[%s321 + $0xb0] sm:$0xff]
        %v443 = vld [vmem:[%s321 + $0xb8] sm:$0xff]
        %v444 = vld [vmem:[%s321 + $0xc0] sm:$0xff]
        %v445 = vld [vmem:[%s321 + $0xc8] sm:$0xff]
        %v446 = vld [vmem:[%s321 + $0xd0] sm:$0xff]
        %v447 = vld [vmem:[%s321 + $0xd8] sm:$0xff]
        %v448 = vld [vmem:[%s321 + $0xe0] sm:$0xff]
        %v449 = vld [vmem:[%s321 + $0xe8] sm:$0xff]
        %v450 = vld [vmem:[%s321 + $0xf0] sm:$0xff]
        %v451 = vld [vmem:[%s321 + $0xf8] sm:$0xff]
        %v452 = vld [vmem:[%s4] sm:$0xff]
        %v453 = vld [vmem:[%s4 + $0x8] sm:$0xff]
        %v454 = vld [vmem:[%s4 + $0x10] sm:$0xff]
        %v455 = vld [vmem:[%s4 + $0x18] sm:$0xff]
        %v456 = vld [vmem:[%s3] sm:$0xff]
        %v457 = vld [vmem:[%s3 + $0x8] sm:$0xff]
        %v458 = vld [vmem:[%s3 + $0x10] sm:$0xff]
        %v459 = vld [vmem:[%s3 + $0x18] sm:$0xff]
        %vm460 = vcmask 261120
        %v462 = vsel %vm460, %v388, 0
        %v465 = vsel %vm460, %v389, 0
        %v468 = vsel %vm460, %v390, 0
        %v471 = vsel %vm460, %v391, 0
        %v474 = vsel %vm460, %v392, 0
        %v477 = vsel %vm460, %v393, 0
        %v480 = vsel %vm460, %v394, 0
        %v483 = vsel %vm460, %v395, 0
        %v486 = vsel %vm460, %v396, 0
        %v489 = vsel %vm460, %v397, 0
        %v492 = vsel %vm460, %v398, 0
        %v495 = vsel %vm460, %v399, 0
        %v498 = vsel %vm460, %v400, 0
        %v501 = vsel %vm460, %v401, 0
        %v504 = vsel %vm460, %v402, 0
        %v507 = vsel %vm460, %v403, 0
        %v510 = vsel %vm460, %v404, 0
        %v513 = vsel %vm460, %v405, 0
        %v516 = vsel %vm460, %v406, 0
        %v519 = vsel %vm460, %v407, 0
        %v522 = vsel %vm460, %v408, 0
        %v525 = vsel %vm460, %v409, 0
        %v528 = vsel %vm460, %v410, 0
        %v531 = vsel %vm460, %v411, 0
        %v534 = vsel %vm460, %v412, 0
        %v537 = vsel %vm460, %v413, 0
        %v540 = vsel %vm460, %v414, 0
        %v543 = vsel %vm460, %v415, 0
        %v546 = vsel %vm460, %v416, 0
        %v549 = vsel %vm460, %v417, 0
        %v552 = vsel %vm460, %v418, 0
        %v555 = vsel %vm460, %v419, 0
        %557 = vmatprep.subr.mxu0 0.0
        %558 = vmatpush1.msra.mxu0 0.0
        %559 = vmatprep.subr.mxu0 0.0
        %560 = vmatpush1.msra.mxu0 0.0
        %561 = vmatprep.subr.mxu0 0.0
        %562 = vmatpush1.msra.mxu0 0.0
        %563 = vmatprep.subr.mxu0 0.0
        %564 = vmatpush1.msra.mxu0 0.0
        %565 = vmatprep.subr.mxu0 0.0
        %566 = vmatpush1.msra.mxu0 0.0
        %567 = vmatprep.subr.mxu0 0.0
        %568 = vmatpush1.msra.mxu0 0.0
        %569 = vmatprep.subr.mxu0 0.0
        %570 = vmatpush1.msra.mxu0 0.0
        %571 = vmatprep.subr.mxu0 0.0
        %572 = vmatpush1.msra.mxu0 0.0
        %573 = vmatprep.subr.mxu0 0.0
        %574 = vmatpush1.msra.mxu0 0.0
        %575 = vmatprep.subr.mxu0 0.0
        %576 = vmatpush1.msra.mxu0 0.0
        %577 = vmatprep.subr.mxu0 0.0
        %578 = vmatpush1.msra.mxu0 0.0
        %579 = vmatprep.subr.mxu0 0.0
        %580 = vmatpush1.msra.mxu0 0.0
        %581 = vmatprep.subr.mxu0 0.0
        %582 = vmatpush1.msra.mxu0 %v459
        %583 = vmatprep.subr.mxu0 0.0
        %584 = vmatpush1.msra.mxu0 %v458
        %585 = vmatprep.subr.mxu0 0.0
        %586 = vmatpush1.msra.mxu0 %v457
        %587 = vmatprep.subr.mxu0 0.0
        %588 = vmatpush1.msra.mxu0 %v456
        %589 = vmatprep.subr.mxu0 0.0
        %590 = vmatpush2.msra.mxu0 0.0
        %591 = vmatprep.subr.mxu0 0.0
        %592 = vmatpush2.msra.mxu0 0.0
        %593 = vmatprep.subr.mxu0 0.0
        %594 = vmatpush2.msra.mxu0 0.0
        %595 = vmatprep.subr.mxu0 0.0
        %596 = vmatpush2.msra.mxu0 0.0
        %597 = vmatprep.subr.mxu0 0.0
        %598 = vmatpush2.msra.mxu0 0.0
        %599 = vmatprep.subr.mxu0 0.0
        %600 = vmatpush2.msra.mxu0 0.0
        %601 = vmatprep.subr.mxu0 0.0
        %602 = vmatpush2.msra.mxu0 0.0
        %603 = vmatprep.subr.mxu0 0.0
        %604 = vmatpush2.msra.mxu0 0.0
        %605 = vmatprep.subr.mxu0 0.0
        %606 = vmatpush2.msra.mxu0 0.0
        %607 = vmatprep.subr.mxu0 0.0
        %608 = vmatpush2.msra.mxu0 0.0
        %609 = vmatprep.subr.mxu0 0.0
        %610 = vmatpush2.msra.mxu0 0.0
        %611 = vmatprep.subr.mxu0 0.0
        %612 = vmatpush2.msra.mxu0 0.0
        %613 = vmatprep.subr.mxu0 0.0
        %614 = vmatpush2.msra.mxu0 0.0
        %615 = vmatprep.subr.mxu0 0.0
        %616 = vmatpush2.msra.mxu0 0.0
        %617 = vmatprep.subr.mxu0 0.0
        %618 = vmatpush2.msra.mxu0 0.0
        %619 = vmatprep.subr.mxu0 0.0
        %620 = vmatpush2.msra.mxu0 0.0
        %621 = vmatprep.mubr.f32.mxu0 0.0
        %622 = vmatmul.mubr.f32.gmra.mxu0 %v462
        %v623 = vpop.f32.mrf.mxu0
        %v624 = vadd.f32 0.0, %v623
        %v625 = vpop.f32.mrf.mxu0
        %626 = vmatprep.mubr.f32.mxu0 0.0
        %627 = vmatmul.mubr.f32.gmra.mxu0 %v465
        %v628 = vpop.f32.mrf.mxu0
        %v629 = vadd.f32 0.0, %v628
        %v630 = vpop.f32.mrf.mxu0
        %631 = vmatprep.mubr.f32.mxu0 0.0
        %632 = vmatmul.mubr.f32.gmra.mxu0 %v468
        %v633 = vpop.f32.mrf.mxu0
        %v634 = vadd.f32 0.0, %v633
        %v635 = vpop.f32.mrf.mxu0
        %636 = vmatprep.mubr.f32.mxu0 0.0
        %637 = vmatmul.mubr.f32.gmra.mxu0 %v471
        %v638 = vpop.f32.mrf.mxu0
        %v639 = vadd.f32 0.0, %v638
        %v640 = vpop.f32.mrf.mxu0
        %641 = vmatprep.mubr.f32.mxu0 0.0
        %642 = vmatmul.mubr.f32.gmra.mxu0 %v474
        %v643 = vpop.f32.mrf.mxu0
        %v644 = vadd.f32 0.0, %v643
        %v645 = vpop.f32.mrf.mxu0
        %646 = vmatprep.mubr.f32.mxu0 0.0
        %647 = vmatmul.mubr.f32.gmra.mxu0 %v477
        %v648 = vpop.f32.mrf.mxu0
        %v649 = vadd.f32 0.0, %v648
        %v650 = vpop.f32.mrf.mxu0
        %651 = vmatprep.mubr.f32.mxu0 0.0
        %652 = vmatmul.mubr.f32.gmra.mxu0 %v480
        %v653 = vpop.f32.mrf.mxu0
        %v654 = vadd.f32 0.0, %v653
        %v655 = vpop.f32.mrf.mxu0
        %656 = vmatprep.mubr.f32.mxu0 0.0
        %657 = vmatmul.mubr.f32.gmra.mxu0 %v483
        %v658 = vpop.f32.mrf.mxu0
        %v659 = vadd.f32 0.0, %v658
        %v660 = vpop.f32.mrf.mxu0
        %661 = vmatprep.mubr.f32.mxu0 0.0
        %662 = vmatmul.mubr.f32.gmra.mxu0 %v486
        %v663 = vpop.f32.mrf.mxu0
        %v664 = vadd.f32 0.0, %v663
        %v665 = vpop.f32.mrf.mxu0
        %666 = vmatprep.mubr.f32.mxu0 0.0
        %667 = vmatmul.mubr.f32.gmra.mxu0 %v489
        %v668 = vpop.f32.mrf.mxu0
        %v669 = vadd.f32 0.0, %v668
        %v670 = vpop.f32.mrf.mxu0
        %671 = vmatprep.mubr.f32.mxu0 0.0
        %672 = vmatmul.mubr.f32.gmra.mxu0 %v492
        %v673 = vpop.f32.mrf.mxu0
        %v674 = vadd.f32 0.0, %v673
        %v675 = vpop.f32.mrf.mxu0
        %676 = vmatprep.mubr.f32.mxu0 0.0
        %677 = vmatmul.mubr.f32.gmra.mxu0 %v495
        %v678 = vpop.f32.mrf.mxu0
        %v679 = vadd.f32 0.0, %v678
        %v680 = vpop.f32.mrf.mxu0
        %681 = vmatprep.mubr.f32.mxu0 0.0
        %682 = vmatmul.mubr.f32.gmra.mxu0 %v498
        %v683 = vpop.f32.mrf.mxu0
        %v684 = vadd.f32 0.0, %v683
        %v685 = vpop.f32.mrf.mxu0
        %686 = vmatprep.mubr.f32.mxu0 0.0
        %687 = vmatmul.mubr.f32.gmra.mxu0 %v501
        %v688 = vpop.f32.mrf.mxu0
        %v689 = vadd.f32 0.0, %v688
        %v690 = vpop.f32.mrf.mxu0
        %691 = vmatprep.mubr.f32.mxu0 0.0
        %692 = vmatmul.mubr.f32.gmra.mxu0 %v504
        %v693 = vpop.f32.mrf.mxu0
        %v694 = vadd.f32 0.0, %v693
        %v695 = vpop.f32.mrf.mxu0
        %696 = vmatprep.mubr.f32.mxu0 0.0
        %697 = vmatmul.mubr.f32.gmra.mxu0 %v507
        %v698 = vpop.f32.mrf.mxu0
        %v699 = vadd.f32 0.0, %v698
        %v700 = vpop.f32.mrf.mxu0
        %701 = vmatprep.mubr.f32.mxu0 0.0
        %702 = vmatmul.mubr.f32.gmra.mxu0 %v510
        %v703 = vpop.f32.mrf.mxu0
        %v704 = vadd.f32 0.0, %v703
        %v705 = vpop.f32.mrf.mxu0
        %706 = vmatprep.mubr.f32.mxu0 0.0
        %707 = vmatmul.mubr.f32.gmra.mxu0 %v513
        %v708 = vpop.f32.mrf.mxu0
        %v709 = vadd.f32 0.0, %v708
        %v710 = vpop.f32.mrf.mxu0
        %711 = vmatprep.mubr.f32.mxu0 0.0
        %712 = vmatmul.mubr.f32.gmra.mxu0 %v516
        %v713 = vpop.f32.mrf.mxu0
        %v714 = vadd.f32 0.0, %v713
        %v715 = vpop.f32.mrf.mxu0
        %716 = vmatprep.mubr.f32.mxu0 0.0
        %717 = vmatmul.mubr.f32.gmra.mxu0 %v519
        %v718 = vpop.f32.mrf.mxu0
        %v719 = vadd.f32 0.0, %v718
        %v720 = vpop.f32.mrf.mxu0
        %721 = vmatprep.mubr.f32.mxu0 0.0
        %722 = vmatmul.mubr.f32.gmra.mxu0 %v522
        %v723 = vpop.f32.mrf.mxu0
        %v724 = vadd.f32 0.0, %v723
        %v725 = vpop.f32.mrf.mxu0
        %726 = vmatprep.mubr.f32.mxu0 0.0
        %727 = vmatmul.mubr.f32.gmra.mxu0 %v525
        %v728 = vpop.f32.mrf.mxu0
        %v729 = vadd.f32 0.0, %v728
        %v730 = vpop.f32.mrf.mxu0
        %731 = vmatprep.mubr.f32.mxu0 0.0
        %732 = vmatmul.mubr.f32.gmra.mxu0 %v528
        %v733 = vpop.f32.mrf.mxu0
        %v734 = vadd.f32 0.0, %v733
        %v735 = vpop.f32.mrf.mxu0
        %736 = vmatprep.mubr.f32.mxu0 0.0
        %737 = vmatmul.mubr.f32.gmra.mxu0 %v531
        %v738 = vpop.f32.mrf.mxu0
        %v739 = vadd.f32 0.0, %v738
        %v740 = vpop.f32.mrf.mxu0
        %741 = vmatprep.mubr.f32.mxu0 0.0
        %742 = vmatmul.mubr.f32.gmra.mxu0 %v534
        %v743 = vpop.f32.mrf.mxu0
        %v744 = vadd.f32 0.0, %v743
        %v745 = vpop.f32.mrf.mxu0
        %746 = vmatprep.mubr.f32.mxu0 0.0
        %747 = vmatmul.mubr.f32.gmra.mxu0 %v537
        %v748 = vpop.f32.mrf.mxu0
        %v749 = vadd.f32 0.0, %v748
        %v750 = vpop.f32.mrf.mxu0
        %751 = vmatprep.mubr.f32.mxu0 0.0
        %752 = vmatmul.mubr.f32.gmra.mxu0 %v540
        %v753 = vpop.f32.mrf.mxu0
        %v754 = vadd.f32 0.0, %v753
        %v755 = vpop.f32.mrf.mxu0
        %756 = vmatprep.mubr.f32.mxu0 0.0
        %757 = vmatmul.mubr.f32.gmra.mxu0 %v543
        %v758 = vpop.f32.mrf.mxu0
        %v759 = vadd.f32 0.0, %v758
        %v760 = vpop.f32.mrf.mxu0
        %761 = vmatprep.mubr.f32.mxu0 0.0
        %762 = vmatmul.mubr.f32.gmra.mxu0 %v546
        %v763 = vpop.f32.mrf.mxu0
        %v764 = vadd.f32 0.0, %v763
        %v765 = vpop.f32.mrf.mxu0
        %766 = vmatprep.mubr.f32.mxu0 0.0
        %767 = vmatmul.mubr.f32.gmra.mxu0 %v549
        %v768 = vpop.f32.mrf.mxu0
        %v769 = vadd.f32 0.0, %v768
        %v770 = vpop.f32.mrf.mxu0
        %771 = vmatprep.mubr.f32.mxu0 0.0
        %772 = vmatmul.mubr.f32.gmra.mxu0 %v552
        %v773 = vpop.f32.mrf.mxu0
        %v774 = vadd.f32 0.0, %v773
        %v775 = vpop.f32.mrf.mxu0
        %776 = vmatprep.mubr.f32.mxu0 0.0
        %777 = vmatmul.mubr.f32.gmra.mxu0 %v555
        %v778 = vpop.f32.mrf.mxu0
        %v779 = vadd.f32 0.0, %v778
        %v780 = vpop.f32.mrf.mxu0
        %781 = vdwg.mxu0
        %v782 = vmul.f32 %v356, %v624
        %v783 = vmul.f32 %v357, %v629
        %v784 = vmul.f32 %v358, %v634
        %v785 = vmul.f32 %v359, %v639
        %v786 = vmul.f32 %v360, %v644
        %v787 = vmul.f32 %v361, %v649
        %v788 = vmul.f32 %v362, %v654
        %v789 = vmul.f32 %v363, %v659
        %v790 = vmul.f32 %v364, %v664
        %v791 = vmul.f32 %v365, %v669
        %v792 = vmul.f32 %v366, %v674
        %v793 = vmul.f32 %v367, %v679
        %v794 = vmul.f32 %v368, %v684
        %v795 = vmul.f32 %v369, %v689
        %v796 = vmul.f32 %v370, %v694
        %v797 = vmul.f32 %v371, %v699
        %v798 = vmul.f32 %v372, %v704
        %v799 = vmul.f32 %v373, %v709
        %v800 = vmul.f32 %v374, %v714
        %v801 = vmul.f32 %v375, %v719
        %v802 = vmul.f32 %v376, %v724
        %v803 = vmul.f32 %v377, %v729
        %v804 = vmul.f32 %v378, %v734
        %v805 = vmul.f32 %v379, %v739
        %v806 = vmul.f32 %v380, %v744
        %v807 = vmul.f32 %v381, %v749
        %v808 = vmul.f32 %v382, %v754
        %v809 = vmul.f32 %v383, %v759
        %v810 = vmul.f32 %v384, %v764
        %v811 = vmul.f32 %v385, %v769
        %v812 = vmul.f32 %v386, %v774
        %v813 = vmul.f32 %v387, %v779
        %v815 = vsel %vm460, %v782, 0
        %v818 = vsel %vm460, %v783, 0
        %v821 = vsel %vm460, %v784, 0
        %v824 = vsel %vm460, %v785, 0
        %v827 = vsel %vm460, %v786, 0
        %v830 = vsel %vm460, %v787, 0
        %v833 = vsel %vm460, %v788, 0
        %v836 = vsel %vm460, %v789, 0
        %v839 = vsel %vm460, %v790, 0
        %v842 = vsel %vm460, %v791, 0
        %v845 = vsel %vm460, %v792, 0
        %v848 = vsel %vm460, %v793, 0
        %v851 = vsel %vm460, %v794, 0
        %v854 = vsel %vm460, %v795, 0
        %v857 = vsel %vm460, %v796, 0
        %v860 = vsel %vm460, %v797, 0
        %v863 = vsel %vm460, %v798, 0
        %v866 = vsel %vm460, %v799, 0
        %v869 = vsel %vm460, %v800, 0
        %v872 = vsel %vm460, %v801, 0
        %v875 = vsel %vm460, %v802, 0
        %v878 = vsel %vm460, %v803, 0
        %v881 = vsel %vm460, %v804, 0
        %v884 = vsel %vm460, %v805, 0
        %v887 = vsel %vm460, %v806, 0
        %v890 = vsel %vm460, %v807, 0
        %v893 = vsel %vm460, %v808, 0
        %v896 = vsel %vm460, %v809, 0
        %v899 = vsel %vm460, %v810, 0
        %v902 = vsel %vm460, %v811, 0
        %v905 = vsel %vm460, %v812, 0
        %v908 = vsel %vm460, %v813, 0
        %910 = vmatprep.subr.mxu0 0.0
        %911 = vmatpush1.msra.mxu0 0.0
        %912 = vmatprep.subr.mxu0 0.0
        %913 = vmatpush1.msra.mxu0 0.0
        %914 = vmatprep.subr.mxu0 0.0
        %915 = vmatpush1.msra.mxu0 0.0
        %916 = vmatprep.subr.mxu0 0.0
        %917 = vmatpush1.msra.mxu0 0.0
        %918 = vmatprep.subr.mxu0 0.0
        %919 = vmatpush1.msra.mxu0 0.0
        %920 = vmatprep.subr.mxu0 0.0
        %921 = vmatpush1.msra.mxu0 0.0
        %922 = vmatprep.subr.mxu0 0.0
        %923 = vmatpush1.msra.mxu0 0.0
        %924 = vmatprep.subr.mxu0 0.0
        %925 = vmatpush1.msra.mxu0 0.0
        %926 = vmatprep.subr.mxu0 0.0
        %927 = vmatpush1.msra.mxu0 0.0
        %928 = vmatprep.subr.mxu0 0.0
        %929 = vmatpush1.msra.mxu0 0.0
        %930 = vmatprep.subr.mxu0 0.0
        %931 = vmatpush1.msra.mxu0 0.0
        %932 = vmatprep.subr.mxu0 0.0
        %933 = vmatpush1.msra.mxu0 0.0
        %934 = vmatprep.subr.mxu0 0.0
        %935 = vmatpush1.msra.mxu0 %v455
        %936 = vmatprep.subr.mxu0 0.0
        %937 = vmatpush1.msra.mxu0 %v454
        %938 = vmatprep.subr.mxu0 0.0
        %939 = vmatpush1.msra.mxu0 %v453
        %940 = vmatprep.subr.mxu0 0.0
        %941 = vmatpush1.msra.mxu0 %v452
        %942 = vmatprep.subr.mxu0 0.0
        %943 = vmatpush2.msra.mxu0 0.0
        %944 = vmatprep.subr.mxu0 0.0
        %945 = vmatpush2.msra.mxu0 0.0
        %946 = vmatprep.subr.mxu0 0.0
        %947 = vmatpush2.msra.mxu0 0.0
        %948 = vmatprep.subr.mxu0 0.0
        %949 = vmatpush2.msra.mxu0 0.0
        %950 = vmatprep.subr.mxu0 0.0
        %951 = vmatpush2.msra.mxu0 0.0
        %952 = vmatprep.subr.mxu0 0.0
        %953 = vmatpush2.msra.mxu0 0.0
        %954 = vmatprep.subr.mxu0 0.0
        %955 = vmatpush2.msra.mxu0 0.0
        %956 = vmatprep.subr.mxu0 0.0
        %957 = vmatpush2.msra.mxu0 0.0
        %958 = vmatprep.subr.mxu0 0.0
        %959 = vmatpush2.msra.mxu0 0.0
        %960 = vmatprep.subr.mxu0 0.0
        %961 = vmatpush2.msra.mxu0 0.0
        %962 = vmatprep.subr.mxu0 0.0
        %963 = vmatpush2.msra.mxu0 0.0
        %964 = vmatprep.subr.mxu0 0.0
        %965 = vmatpush2.msra.mxu0 0.0
        %966 = vmatprep.subr.mxu0 0.0
        %967 = vmatpush2.msra.mxu0 0.0
        %968 = vmatprep.subr.mxu0 0.0
        %969 = vmatpush2.msra.mxu0 0.0
        %970 = vmatprep.subr.mxu0 0.0
        %971 = vmatpush2.msra.mxu0 0.0
        %972 = vmatprep.subr.mxu0 0.0
        %973 = vmatpush2.msra.mxu0 0.0
        %974 = vmatprep.mubr.f32.mxu0 0.0
        %975 = vmatmul.mubr.f32.gmra.mxu0 %v815
        %v976 = vpop.f32.mrf.mxu0
        %v977 = vadd.f32 0.0, %v976
        %v978 = vpop.f32.mrf.mxu0
        %979 = vmatprep.mubr.f32.mxu0 0.0
        %980 = vmatmul.mubr.f32.gmra.mxu0 %v818
        %v981 = vpop.f32.mrf.mxu0
        %v982 = vadd.f32 0.0, %v981
        %v983 = vpop.f32.mrf.mxu0
        %984 = vmatprep.mubr.f32.mxu0 0.0
        %985 = vmatmul.mubr.f32.gmra.mxu0 %v821
        %v986 = vpop.f32.mrf.mxu0
        %v987 = vadd.f32 0.0, %v986
        %v988 = vpop.f32.mrf.mxu0
        %989 = vmatprep.mubr.f32.mxu0 0.0
        %990 = vmatmul.mubr.f32.gmra.mxu0 %v824
        %v991 = vpop.f32.mrf.mxu0
        %v992 = vadd.f32 0.0, %v991
        %v993 = vpop.f32.mrf.mxu0
        %994 = vmatprep.mubr.f32.mxu0 0.0
        %995 = vmatmul.mubr.f32.gmra.mxu0 %v827
        %v996 = vpop.f32.mrf.mxu0
        %v997 = vadd.f32 0.0, %v996
        %v998 = vpop.f32.mrf.mxu0
        %999 = vmatprep.mubr.f32.mxu0 0.0
        %1000 = vmatmul.mubr.f32.gmra.mxu0 %v830
        %v1001 = vpop.f32.mrf.mxu0
        %v1002 = vadd.f32 0.0, %v1001
        %v1003 = vpop.f32.mrf.mxu0
        %1004 = vmatprep.mubr.f32.mxu0 0.0
        %1005 = vmatmul.mubr.f32.gmra.mxu0 %v833
        %v1006 = vpop.f32.mrf.mxu0
        %v1007 = vadd.f32 0.0, %v1006
        %v1008 = vpop.f32.mrf.mxu0
        %1009 = vmatprep.mubr.f32.mxu0 0.0
        %1010 = vmatmul.mubr.f32.gmra.mxu0 %v836
        %v1011 = vpop.f32.mrf.mxu0
        %v1012 = vadd.f32 0.0, %v1011
        %v1013 = vpop.f32.mrf.mxu0
        %1014 = vmatprep.mubr.f32.mxu0 0.0
        %1015 = vmatmul.mubr.f32.gmra.mxu0 %v839
        %v1016 = vpop.f32.mrf.mxu0
        %v1017 = vadd.f32 0.0, %v1016
        %v1018 = vpop.f32.mrf.mxu0
        %1019 = vmatprep.mubr.f32.mxu0 0.0
        %1020 = vmatmul.mubr.f32.gmra.mxu0 %v842
        %v1021 = vpop.f32.mrf.mxu0
        %v1022 = vadd.f32 0.0, %v1021
        %v1023 = vpop.f32.mrf.mxu0
        %1024 = vmatprep.mubr.f32.mxu0 0.0
        %1025 = vmatmul.mubr.f32.gmra.mxu0 %v845
        %v1026 = vpop.f32.mrf.mxu0
        %v1027 = vadd.f32 0.0, %v1026
        %v1028 = vpop.f32.mrf.mxu0
        %1029 = vmatprep.mubr.f32.mxu0 0.0
        %1030 = vmatmul.mubr.f32.gmra.mxu0 %v848
        %v1031 = vpop.f32.mrf.mxu0
        %v1032 = vadd.f32 0.0, %v1031
        %v1033 = vpop.f32.mrf.mxu0
        %1034 = vmatprep.mubr.f32.mxu0 0.0
        %1035 = vmatmul.mubr.f32.gmra.mxu0 %v851
        %v1036 = vpop.f32.mrf.mxu0
        %v1037 = vadd.f32 0.0, %v1036
        %v1038 = vpop.f32.mrf.mxu0
        %1039 = vmatprep.mubr.f32.mxu0 0.0
        %1040 = vmatmul.mubr.f32.gmra.mxu0 %v854
        %v1041 = vpop.f32.mrf.mxu0
        %v1042 = vadd.f32 0.0, %v1041
        %v1043 = vpop.f32.mrf.mxu0
        %1044 = vmatprep.mubr.f32.mxu0 0.0
        %1045 = vmatmul.mubr.f32.gmra.mxu0 %v857
        %v1046 = vpop.f32.mrf.mxu0
        %v1047 = vadd.f32 0.0, %v1046
        %v1048 = vpop.f32.mrf.mxu0
        %1049 = vmatprep.mubr.f32.mxu0 0.0
        %1050 = vmatmul.mubr.f32.gmra.mxu0 %v860
        %v1051 = vpop.f32.mrf.mxu0
        %v1052 = vadd.f32 0.0, %v1051
        %v1053 = vpop.f32.mrf.mxu0
        %1054 = vmatprep.mubr.f32.mxu0 0.0
        %1055 = vmatmul.mubr.f32.gmra.mxu0 %v863
        %v1056 = vpop.f32.mrf.mxu0
        %v1057 = vadd.f32 0.0, %v1056
        %v1058 = vpop.f32.mrf.mxu0
        %1059 = vmatprep.mubr.f32.mxu0 0.0
        %1060 = vmatmul.mubr.f32.gmra.mxu0 %v866
        %v1061 = vpop.f32.mrf.mxu0
        %v1062 = vadd.f32 0.0, %v1061
        %v1063 = vpop.f32.mrf.mxu0
        %1064 = vmatprep.mubr.f32.mxu0 0.0
        %1065 = vmatmul.mubr.f32.gmra.mxu0 %v869
        %v1066 = vpop.f32.mrf.mxu0
        %v1067 = vadd.f32 0.0, %v1066
        %v1068 = vpop.f32.mrf.mxu0
        %1069 = vmatprep.mubr.f32.mxu0 0.0
        %1070 = vmatmul.mubr.f32.gmra.mxu0 %v872
        %v1071 = vpop.f32.mrf.mxu0
        %v1072 = vadd.f32 0.0, %v1071
        %v1073 = vpop.f32.mrf.mxu0
        %1074 = vmatprep.mubr.f32.mxu0 0.0
        %1075 = vmatmul.mubr.f32.gmra.mxu0 %v875
        %v1076 = vpop.f32.mrf.mxu0
        %v1077 = vadd.f32 0.0, %v1076
        %v1078 = vpop.f32.mrf.mxu0
        %1079 = vmatprep.mubr.f32.mxu0 0.0
        %1080 = vmatmul.mubr.f32.gmra.mxu0 %v878
        %v1081 = vpop.f32.mrf.mxu0
        %v1082 = vadd.f32 0.0, %v1081
        %v1083 = vpop.f32.mrf.mxu0
        %1084 = vmatprep.mubr.f32.mxu0 0.0
        %1085 = vmatmul.mubr.f32.gmra.mxu0 %v881
        %v1086 = vpop.f32.mrf.mxu0
        %v1087 = vadd.f32 0.0, %v1086
        %v1088 = vpop.f32.mrf.mxu0
        %1089 = vmatprep.mubr.f32.mxu0 0.0
        %1090 = vmatmul.mubr.f32.gmra.mxu0 %v884
        %v1091 = vpop.f32.mrf.mxu0
        %v1092 = vadd.f32 0.0, %v1091
        %v1093 = vpop.f32.mrf.mxu0
        %1094 = vmatprep.mubr.f32.mxu0 0.0
        %1095 = vmatmul.mubr.f32.gmra.mxu0 %v887
        %v1096 = vpop.f32.mrf.mxu0
        %v1097 = vadd.f32 0.0, %v1096
        %v1098 = vpop.f32.mrf.mxu0
        %1099 = vmatprep.mubr.f32.mxu0 0.0
        %1100 = vmatmul.mubr.f32.gmra.mxu0 %v890
        %v1101 = vpop.f32.mrf.mxu0
        %v1102 = vadd.f32 0.0, %v1101
        %v1103 = vpop.f32.mrf.mxu0
        %1104 = vmatprep.mubr.f32.mxu0 0.0
        %1105 = vmatmul.mubr.f32.gmra.mxu0 %v893
        %v1106 = vpop.f32.mrf.mxu0
        %v1107 = vadd.f32 0.0, %v1106
        %v1108 = vpop.f32.mrf.mxu0
        %1109 = vmatprep.mubr.f32.mxu0 0.0
        %1110 = vmatmul.mubr.f32.gmra.mxu0 %v896
        %v1111 = vpop.f32.mrf.mxu0
        %v1112 = vadd.f32 0.0, %v1111
        %v1113 = vpop.f32.mrf.mxu0
        %1114 = vmatprep.mubr.f32.mxu0 0.0
        %1115 = vmatmul.mubr.f32.gmra.mxu0 %v899
        %v1116 = vpop.f32.mrf.mxu0
        %v1117 = vadd.f32 0.0, %v1116
        %v1118 = vpop.f32.mrf.mxu0
        %1119 = vmatprep.mubr.f32.mxu0 0.0
        %1120 = vmatmul.mubr.f32.gmra.mxu0 %v902
        %v1121 = vpop.f32.mrf.mxu0
        %v1122 = vadd.f32 0.0, %v1121
        %v1123 = vpop.f32.mrf.mxu0
        %1124 = vmatprep.mubr.f32.mxu0 0.0
        %1125 = vmatmul.mubr.f32.gmra.mxu0 %v905
        %v1126 = vpop.f32.mrf.mxu0
        %v1127 = vadd.f32 0.0, %v1126
        %v1128 = vpop.f32.mrf.mxu0
        %1129 = vmatprep.mubr.f32.mxu0 0.0
        %1130 = vmatmul.mubr.f32.gmra.mxu0 %v908
        %v1131 = vpop.f32.mrf.mxu0
        %v1132 = vadd.f32 0.0, %v1131
        %v1133 = vpop.f32.mrf.mxu0
        %1134 = vdwg.mxu0
        %s1135 = scalar_lea.vmem %s3, 32
        %v1136 = vld [vmem:[%s1135] sm:$0xff]
        %v1137 = vld [vmem:[%s1135 + $0x8] sm:$0xff]
        %v1138 = vld [vmem:[%s1135 + $0x10] sm:$0xff]
        %v1139 = vld [vmem:[%s1135 + $0x18] sm:$0xff]
        %1140 = vmatprep.subr.mxu0 0.0
        %1141 = vmatpush1.msra.mxu0 0.0
        %1142 = vmatprep.subr.mxu0 0.0
        %1143 = vmatpush1.msra.mxu0 0.0
        %1144 = vmatprep.subr.mxu0 0.0
        %1145 = vmatpush1.msra.mxu0 0.0
        %1146 = vmatprep.subr.mxu0 0.0
        %1147 = vmatpush1.msra.mxu0 0.0
        %1148 = vmatprep.subr.mxu0 0.0
        %1149 = vmatpush1.msra.mxu0 0.0
        %1150 = vmatprep.subr.mxu0 0.0
        %1151 = vmatpush1.msra.mxu0 0.0
        %1152 = vmatprep.subr.mxu0 0.0
        %1153 = vmatpush1.msra.mxu0 0.0
        %1154 = vmatprep.subr.mxu0 0.0
        %1155 = vmatpush1.msra.mxu0 0.0
        %1156 = vmatprep.subr.mxu0 0.0
        %1157 = vmatpush1.msra.mxu0 0.0
        %1158 = vmatprep.subr.mxu0 0.0
        %1159 = vmatpush1.msra.mxu0 0.0
        %1160 = vmatprep.subr.mxu0 0.0
        %1161 = vmatpush1.msra.mxu0 0.0
        %1162 = vmatprep.subr.mxu0 0.0
        %1163 = vmatpush1.msra.mxu0 0.0
        %1164 = vmatprep.subr.mxu0 0.0
        %1165 = vmatpush1.msra.mxu0 %v1139
        %1166 = vmatprep.subr.mxu0 0.0
        %1167 = vmatpush1.msra.mxu0 %v1138
        %1168 = vmatprep.subr.mxu0 0.0
        %1169 = vmatpush1.msra.mxu0 %v1137
        %1170 = vmatprep.subr.mxu0 0.0
        %1171 = vmatpush1.msra.mxu0 %v1136
        %1172 = vmatprep.subr.mxu0 0.0
        %1173 = vmatpush2.msra.mxu0 0.0
        %1174 = vmatprep.subr.mxu0 0.0
        %1175 = vmatpush2.msra.mxu0 0.0
        %1176 = vmatprep.subr.mxu0 0.0
        %1177 = vmatpush2.msra.mxu0 0.0
        %1178 = vmatprep.subr.mxu0 0.0
        %1179 = vmatpush2.msra.mxu0 0.0
        %1180 = vmatprep.subr.mxu0 0.0
        %1181 = vmatpush2.msra.mxu0 0.0
        %1182 = vmatprep.subr.mxu0 0.0
        %1183 = vmatpush2.msra.mxu0 0.0
        %1184 = vmatprep.subr.mxu0 0.0
        %1185 = vmatpush2.msra.mxu0 0.0
        %1186 = vmatprep.subr.mxu0 0.0
        %1187 = vmatpush2.msra.mxu0 0.0
        %1188 = vmatprep.subr.mxu0 0.0
        %1189 = vmatpush2.msra.mxu0 0.0
        %1190 = vmatprep.subr.mxu0 0.0
        %1191 = vmatpush2.msra.mxu0 0.0
        %1192 = vmatprep.subr.mxu0 0.0
        %1193 = vmatpush2.msra.mxu0 0.0
        %1194 = vmatprep.subr.mxu0 0.0
        %1195 = vmatpush2.msra.mxu0 0.0
        %1196 = vmatprep.subr.mxu0 0.0
        %1197 = vmatpush2.msra.mxu0 0.0
        %1198 = vmatprep.subr.mxu0 0.0
        %1199 = vmatpush2.msra.mxu0 0.0
        %1200 = vmatprep.subr.mxu0 0.0
        %1201 = vmatpush2.msra.mxu0 0.0
        %1202 = vmatprep.subr.mxu0 0.0
        %1203 = vmatpush2.msra.mxu0 0.0
        %1204 = vmatprep.mubr.f32.mxu0 0.0
        %1205 = vmatmul.mubr.f32.gmra.mxu0 %v462
        %v1206 = vpop.f32.mrf.mxu0
        %v1207 = vadd.f32 0.0, %v1206
        %v1208 = vpop.f32.mrf.mxu0
        %1209 = vmatprep.mubr.f32.mxu0 0.0
        %1210 = vmatmul.mubr.f32.gmra.mxu0 %v465
        %v1211 = vpop.f32.mrf.mxu0
        %v1212 = vadd.f32 0.0, %v1211
        %v1213 = vpop.f32.mrf.mxu0
        %1214 = vmatprep.mubr.f32.mxu0 0.0
        %1215 = vmatmul.mubr.f32.gmra.mxu0 %v468
        %v1216 = vpop.f32.mrf.mxu0
        %v1217 = vadd.f32 0.0, %v1216
        %v1218 = vpop.f32.mrf.mxu0
        %1219 = vmatprep.mubr.f32.mxu0 0.0
        %1220 = vmatmul.mubr.f32.gmra.mxu0 %v471
        %v1221 = vpop.f32.mrf.mxu0
        %v1222 = vadd.f32 0.0, %v1221
        %v1223 = vpop.f32.mrf.mxu0
        %1224 = vmatprep.mubr.f32.mxu0 0.0
        %1225 = vmatmul.mubr.f32.gmra.mxu0 %v474
        %v1226 = vpop.f32.mrf.mxu0
        %v1227 = vadd.f32 0.0, %v1226
        %v1228 = vpop.f32.mrf.mxu0
        %1229 = vmatprep.mubr.f32.mxu0 0.0
        %1230 = vmatmul.mubr.f32.gmra.mxu0 %v477
        %v1231 = vpop.f32.mrf.mxu0
        %v1232 = vadd.f32 0.0, %v1231
        %v1233 = vpop.f32.mrf.mxu0
        %1234 = vmatprep.mubr.f32.mxu0 0.0
        %1235 = vmatmul.mubr.f32.gmra.mxu0 %v480
        %v1236 = vpop.f32.mrf.mxu0
        %v1237 = vadd.f32 0.0, %v1236
        %v1238 = vpop.f32.mrf.mxu0
        %1239 = vmatprep.mubr.f32.mxu0 0.0
        %1240 = vmatmul.mubr.f32.gmra.mxu0 %v483
        %v1241 = vpop.f32.mrf.mxu0
        %v1242 = vadd.f32 0.0, %v1241
        %v1243 = vpop.f32.mrf.mxu0
        %1244 = vmatprep.mubr.f32.mxu0 0.0
        %1245 = vmatmul.mubr.f32.gmra.mxu0 %v486
        %v1246 = vpop.f32.mrf.mxu0
        %v1247 = vadd.f32 0.0, %v1246
        %v1248 = vpop.f32.mrf.mxu0
        %1249 = vmatprep.mubr.f32.mxu0 0.0
        %1250 = vmatmul.mubr.f32.gmra.mxu0 %v489
        %v1251 = vpop.f32.mrf.mxu0
        %v1252 = vadd.f32 0.0, %v1251
        %v1253 = vpop.f32.mrf.mxu0
        %1254 = vmatprep.mubr.f32.mxu0 0.0
        %1255 = vmatmul.mubr.f32.gmra.mxu0 %v492
        %v1256 = vpop.f32.mrf.mxu0
        %v1257 = vadd.f32 0.0, %v1256
        %v1258 = vpop.f32.mrf.mxu0
        %1259 = vmatprep.mubr.f32.mxu0 0.0
        %1260 = vmatmul.mubr.f32.gmra.mxu0 %v495
        %v1261 = vpop.f32.mrf.mxu0
        %v1262 = vadd.f32 0.0, %v1261
        %v1263 = vpop.f32.mrf.mxu0
        %1264 = vmatprep.mubr.f32.mxu0 0.0
        %1265 = vmatmul.mubr.f32.gmra.mxu0 %v498
        %v1266 = vpop.f32.mrf.mxu0
        %v1267 = vadd.f32 0.0, %v1266
        %v1268 = vpop.f32.mrf.mxu0
        %1269 = vmatprep.mubr.f32.mxu0 0.0
        %1270 = vmatmul.mubr.f32.gmra.mxu0 %v501
        %v1271 = vpop.f32.mrf.mxu0
        %v1272 = vadd.f32 0.0, %v1271
        %v1273 = vpop.f32.mrf.mxu0
        %1274 = vmatprep.mubr.f32.mxu0 0.0
        %1275 = vmatmul.mubr.f32.gmra.mxu0 %v504
        %v1276 = vpop.f32.mrf.mxu0
        %v1277 = vadd.f32 0.0, %v1276
        %v1278 = vpop.f32.mrf.mxu0
        %1279 = vmatprep.mubr.f32.mxu0 0.0
        %1280 = vmatmul.mubr.f32.gmra.mxu0 %v507
        %v1281 = vpop.f32.mrf.mxu0
        %v1282 = vadd.f32 0.0, %v1281
        %v1283 = vpop.f32.mrf.mxu0
        %1284 = vmatprep.mubr.f32.mxu0 0.0
        %1285 = vmatmul.mubr.f32.gmra.mxu0 %v510
        %v1286 = vpop.f32.mrf.mxu0
        %v1287 = vadd.f32 0.0, %v1286
        %v1288 = vpop.f32.mrf.mxu0
        %1289 = vmatprep.mubr.f32.mxu0 0.0
        %1290 = vmatmul.mubr.f32.gmra.mxu0 %v513
        %v1291 = vpop.f32.mrf.mxu0
        %v1292 = vadd.f32 0.0, %v1291
        %v1293 = vpop.f32.mrf.mxu0
        %1294 = vmatprep.mubr.f32.mxu0 0.0
        %1295 = vmatmul.mubr.f32.gmra.mxu0 %v516
        %v1296 = vpop.f32.mrf.mxu0
        %v1297 = vadd.f32 0.0, %v1296
        %v1298 = vpop.f32.mrf.mxu0
        %1299 = vmatprep.mubr.f32.mxu0 0.0
        %1300 = vmatmul.mubr.f32.gmra.mxu0 %v519
        %v1301 = vpop.f32.mrf.mxu0
        %v1302 = vadd.f32 0.0, %v1301
        %v1303 = vpop.f32.mrf.mxu0
        %1304 = vmatprep.mubr.f32.mxu0 0.0
        %1305 = vmatmul.mubr.f32.gmra.mxu0 %v522
        %v1306 = vpop.f32.mrf.mxu0
        %v1307 = vadd.f32 0.0, %v1306
        %v1308 = vpop.f32.mrf.mxu0
        %1309 = vmatprep.mubr.f32.mxu0 0.0
        %1310 = vmatmul.mubr.f32.gmra.mxu0 %v525
        %v1311 = vpop.f32.mrf.mxu0
        %v1312 = vadd.f32 0.0, %v1311
        %v1313 = vpop.f32.mrf.mxu0
        %1314 = vmatprep.mubr.f32.mxu0 0.0
        %1315 = vmatmul.mubr.f32.gmra.mxu0 %v528
        %v1316 = vpop.f32.mrf.mxu0
        %v1317 = vadd.f32 0.0, %v1316
        %v1318 = vpop.f32.mrf.mxu0
        %1319 = vmatprep.mubr.f32.mxu0 0.0
        %1320 = vmatmul.mubr.f32.gmra.mxu0 %v531
        %v1321 = vpop.f32.mrf.mxu0
        %v1322 = vadd.f32 0.0, %v1321
        %v1323 = vpop.f32.mrf.mxu0
        %1324 = vmatprep.mubr.f32.mxu0 0.0
        %1325 = vmatmul.mubr.f32.gmra.mxu0 %v534
        %v1326 = vpop.f32.mrf.mxu0
        %v1327 = vadd.f32 0.0, %v1326
        %v1328 = vpop.f32.mrf.mxu0
        %1329 = vmatprep.mubr.f32.mxu0 0.0
        %1330 = vmatmul.mubr.f32.gmra.mxu0 %v537
        %v1331 = vpop.f32.mrf.mxu0
        %v1332 = vadd.f32 0.0, %v1331
        %v1333 = vpop.f32.mrf.mxu0
        %1334 = vmatprep.mubr.f32.mxu0 0.0
        %1335 = vmatmul.mubr.f32.gmra.mxu0 %v540
        %v1336 = vpop.f32.mrf.mxu0
        %v1337 = vadd.f32 0.0, %v1336
        %v1338 = vpop.f32.mrf.mxu0
        %1339 = vmatprep.mubr.f32.mxu0 0.0
        %1340 = vmatmul.mubr.f32.gmra.mxu0 %v543
        %v1341 = vpop.f32.mrf.mxu0
        %v1342 = vadd.f32 0.0, %v1341
        %v1343 = vpop.f32.mrf.mxu0
        %1344 = vmatprep.mubr.f32.mxu0 0.0
        %1345 = vmatmul.mubr.f32.gmra.mxu0 %v546
        %v1346 = vpop.f32.mrf.mxu0
        %v1347 = vadd.f32 0.0, %v1346
        %v1348 = vpop.f32.mrf.mxu0
        %1349 = vmatprep.mubr.f32.mxu0 0.0
        %1350 = vmatmul.mubr.f32.gmra.mxu0 %v549
        %v1351 = vpop.f32.mrf.mxu0
        %v1352 = vadd.f32 0.0, %v1351
        %v1353 = vpop.f32.mrf.mxu0
        %1354 = vmatprep.mubr.f32.mxu0 0.0
        %1355 = vmatmul.mubr.f32.gmra.mxu0 %v552
        %v1356 = vpop.f32.mrf.mxu0
        %v1357 = vadd.f32 0.0, %v1356
        %v1358 = vpop.f32.mrf.mxu0
        %1359 = vmatprep.mubr.f32.mxu0 0.0
        %1360 = vmatmul.mubr.f32.gmra.mxu0 %v555
        %v1361 = vpop.f32.mrf.mxu0
        %v1362 = vadd.f32 0.0, %v1361
        %v1363 = vpop.f32.mrf.mxu0
        %1364 = vdwg.mxu0
        %v1365 = vmul.f32 %v356, %v1207
        %v1366 = vmul.f32 %v357, %v1212
        %v1367 = vmul.f32 %v358, %v1217
        %v1368 = vmul.f32 %v359, %v1222
        %v1369 = vmul.f32 %v360, %v1227
        %v1370 = vmul.f32 %v361, %v1232
        %v1371 = vmul.f32 %v362, %v1237
        %v1372 = vmul.f32 %v363, %v1242
        %v1373 = vmul.f32 %v364, %v1247
        %v1374 = vmul.f32 %v365, %v1252
        %v1375 = vmul.f32 %v366, %v1257
        %v1376 = vmul.f32 %v367, %v1262
        %v1377 = vmul.f32 %v368, %v1267
        %v1378 = vmul.f32 %v369, %v1272
        %v1379 = vmul.f32 %v370, %v1277
        %v1380 = vmul.f32 %v371, %v1282
        %v1381 = vmul.f32 %v372, %v1287
        %v1382 = vmul.f32 %v373, %v1292
        %v1383 = vmul.f32 %v374, %v1297
        %v1384 = vmul.f32 %v375, %v1302
        %v1385 = vmul.f32 %v376, %v1307
        %v1386 = vmul.f32 %v377, %v1312
        %v1387 = vmul.f32 %v378, %v1317
        %v1388 = vmul.f32 %v379, %v1322
        %v1389 = vmul.f32 %v380, %v1327
        %v1390 = vmul.f32 %v381, %v1332
        %v1391 = vmul.f32 %v382, %v1337
        %v1392 = vmul.f32 %v383, %v1342
        %v1393 = vmul.f32 %v384, %v1347
        %v1394 = vmul.f32 %v385, %v1352
        %v1395 = vmul.f32 %v386, %v1357
        %v1396 = vmul.f32 %v387, %v1362
        %v1398 = vsel %vm460, %v1365, 0
        %v1401 = vsel %vm460, %v1366, 0
        %v1404 = vsel %vm460, %v1367, 0
        %v1407 = vsel %vm460, %v1368, 0
        %v1410 = vsel %vm460, %v1369, 0
        %v1413 = vsel %vm460, %v1370, 0
        %v1416 = vsel %vm460, %v1371, 0
        %v1419 = vsel %vm460, %v1372, 0
        %v1422 = vsel %vm460, %v1373, 0
        %v1425 = vsel %vm460, %v1374, 0
        %v1428 = vsel %vm460, %v1375, 0
        %v1431 = vsel %vm460, %v1376, 0
        %v1434 = vsel %vm460, %v1377, 0
        %v1437 = vsel %vm460, %v1378, 0
        %v1440 = vsel %vm460, %v1379, 0
        %v1443 = vsel %vm460, %v1380, 0
        %v1446 = vsel %vm460, %v1381, 0
        %v1449 = vsel %vm460, %v1382, 0
        %v1452 = vsel %vm460, %v1383, 0
        %v1455 = vsel %vm460, %v1384, 0
        %v1458 = vsel %vm460, %v1385, 0
        %v1461 = vsel %vm460, %v1386, 0
        %v1464 = vsel %vm460, %v1387, 0
        %v1467 = vsel %vm460, %v1388, 0
        %v1470 = vsel %vm460, %v1389, 0
        %v1473 = vsel %vm460, %v1390, 0
        %v1476 = vsel %vm460, %v1391, 0
        %v1479 = vsel %vm460, %v1392, 0
        %v1482 = vsel %vm460, %v1393, 0
        %v1485 = vsel %vm460, %v1394, 0
        %v1488 = vsel %vm460, %v1395, 0
        %v1491 = vsel %vm460, %v1396, 0
        %1493 = vmatprep.subr.mxu0 0.0
        %1494 = vmatpush1.msra.mxu0 0.0
        %1495 = vmatprep.subr.mxu0 0.0
        %1496 = vmatpush1.msra.mxu0 0.0
        %1497 = vmatprep.subr.mxu0 0.0
        %1498 = vmatpush1.msra.mxu0 0.0
        %1499 = vmatprep.subr.mxu0 0.0
        %1500 = vmatpush1.msra.mxu0 0.0
        %1501 = vmatprep.subr.mxu0 0.0
        %1502 = vmatpush1.msra.mxu0 0.0
        %1503 = vmatprep.subr.mxu0 0.0
        %1504 = vmatpush1.msra.mxu0 0.0
        %1505 = vmatprep.subr.mxu0 0.0
        %1506 = vmatpush1.msra.mxu0 0.0
        %1507 = vmatprep.subr.mxu0 0.0
        %1508 = vmatpush1.msra.mxu0 0.0
        %1509 = vmatprep.subr.mxu0 0.0
        %1510 = vmatpush1.msra.mxu0 0.0
        %1511 = vmatprep.subr.mxu0 0.0
        %1512 = vmatpush1.msra.mxu0 0.0
        %1513 = vmatprep.subr.mxu0 0.0
        %1514 = vmatpush1.msra.mxu0 0.0
        %1515 = vmatprep.subr.mxu0 0.0
        %1516 = vmatpush1.msra.mxu0 0.0
        %1517 = vmatprep.subr.mxu0 0.0
        %1518 = vmatpush1.msra.mxu0 %v455
        %1519 = vmatprep.subr.mxu0 0.0
        %1520 = vmatpush1.msra.mxu0 %v454
        %1521 = vmatprep.subr.mxu0 0.0
        %1522 = vmatpush1.msra.mxu0 %v453
        %1523 = vmatprep.subr.mxu0 0.0
        %1524 = vmatpush1.msra.mxu0 %v452
        %1525 = vmatprep.subr.mxu0 0.0
        %1526 = vmatpush2.msra.mxu0 0.0
        %1527 = vmatprep.subr.mxu0 0.0
        %1528 = vmatpush2.msra.mxu0 0.0
        %1529 = vmatprep.subr.mxu0 0.0
        %1530 = vmatpush2.msra.mxu0 0.0
        %1531 = vmatprep.subr.mxu0 0.0
        %1532 = vmatpush2.msra.mxu0 0.0
        %1533 = vmatprep.subr.mxu0 0.0
        %1534 = vmatpush2.msra.mxu0 0.0
        %1535 = vmatprep.subr.mxu0 0.0
        %1536 = vmatpush2.msra.mxu0 0.0
        %1537 = vmatprep.subr.mxu0 0.0
        %1538 = vmatpush2.msra.mxu0 0.0
        %1539 = vmatprep.subr.mxu0 0.0
        %1540 = vmatpush2.msra.mxu0 0.0
        %1541 = vmatprep.subr.mxu0 0.0
        %1542 = vmatpush2.msra.mxu0 0.0
        %1543 = vmatprep.subr.mxu0 0.0
        %1544 = vmatpush2.msra.mxu0 0.0
        %1545 = vmatprep.subr.mxu0 0.0
        %1546 = vmatpush2.msra.mxu0 0.0
        %1547 = vmatprep.subr.mxu0 0.0
        %1548 = vmatpush2.msra.mxu0 0.0
        %1549 = vmatprep.subr.mxu0 0.0
        %1550 = vmatpush2.msra.mxu0 0.0
        %1551 = vmatprep.subr.mxu0 0.0
        %1552 = vmatpush2.msra.mxu0 0.0
        %1553 = vmatprep.subr.mxu0 0.0
        %1554 = vmatpush2.msra.mxu0 0.0
        %1555 = vmatprep.subr.mxu0 0.0
        %1556 = vmatpush2.msra.mxu0 0.0
        %1557 = vmatprep.mubr.f32.mxu0 0.0
        %1558 = vmatmul.mubr.f32.gmra.mxu0 %v1398
        %v1559 = vpop.f32.mrf.mxu0
        %v1560 = vadd.f32 0.0, %v1559
        %v1561 = vpop.f32.mrf.mxu0
        %1562 = vmatprep.mubr.f32.mxu0 0.0
        %1563 = vmatmul.mubr.f32.gmra.mxu0 %v1401
        %v1564 = vpop.f32.mrf.mxu0
        %v1565 = vadd.f32 0.0, %v1564
        %v1566 = vpop.f32.mrf.mxu0
        %1567 = vmatprep.mubr.f32.mxu0 0.0
        %1568 = vmatmul.mubr.f32.gmra.mxu0 %v1404
        %v1569 = vpop.f32.mrf.mxu0
        %v1570 = vadd.f32 0.0, %v1569
        %v1571 = vpop.f32.mrf.mxu0
        %1572 = vmatprep.mubr.f32.mxu0 0.0
        %1573 = vmatmul.mubr.f32.gmra.mxu0 %v1407
        %v1574 = vpop.f32.mrf.mxu0
        %v1575 = vadd.f32 0.0, %v1574
        %v1576 = vpop.f32.mrf.mxu0
        %1577 = vmatprep.mubr.f32.mxu0 0.0
        %1578 = vmatmul.mubr.f32.gmra.mxu0 %v1410
        %v1579 = vpop.f32.mrf.mxu0
        %v1580 = vadd.f32 0.0, %v1579
        %v1581 = vpop.f32.mrf.mxu0
        %1582 = vmatprep.mubr.f32.mxu0 0.0
        %1583 = vmatmul.mubr.f32.gmra.mxu0 %v1413
        %v1584 = vpop.f32.mrf.mxu0
        %v1585 = vadd.f32 0.0, %v1584
        %v1586 = vpop.f32.mrf.mxu0
        %1587 = vmatprep.mubr.f32.mxu0 0.0
        %1588 = vmatmul.mubr.f32.gmra.mxu0 %v1416
        %v1589 = vpop.f32.mrf.mxu0
        %v1590 = vadd.f32 0.0, %v1589
        %v1591 = vpop.f32.mrf.mxu0
        %1592 = vmatprep.mubr.f32.mxu0 0.0
        %1593 = vmatmul.mubr.f32.gmra.mxu0 %v1419
        %v1594 = vpop.f32.mrf.mxu0
        %v1595 = vadd.f32 0.0, %v1594
        %v1596 = vpop.f32.mrf.mxu0
        %1597 = vmatprep.mubr.f32.mxu0 0.0
        %1598 = vmatmul.mubr.f32.gmra.mxu0 %v1422
        %v1599 = vpop.f32.mrf.mxu0
        %v1600 = vadd.f32 0.0, %v1599
        %v1601 = vpop.f32.mrf.mxu0
        %1602 = vmatprep.mubr.f32.mxu0 0.0
        %1603 = vmatmul.mubr.f32.gmra.mxu0 %v1425
        %v1604 = vpop.f32.mrf.mxu0
        %v1605 = vadd.f32 0.0, %v1604
        %v1606 = vpop.f32.mrf.mxu0
        %1607 = vmatprep.mubr.f32.mxu0 0.0
        %1608 = vmatmul.mubr.f32.gmra.mxu0 %v1428
        %v1609 = vpop.f32.mrf.mxu0
        %v1610 = vadd.f32 0.0, %v1609
        %v1611 = vpop.f32.mrf.mxu0
        %1612 = vmatprep.mubr.f32.mxu0 0.0
        %1613 = vmatmul.mubr.f32.gmra.mxu0 %v1431
        %v1614 = vpop.f32.mrf.mxu0
        %v1615 = vadd.f32 0.0, %v1614
        %v1616 = vpop.f32.mrf.mxu0
        %1617 = vmatprep.mubr.f32.mxu0 0.0
        %1618 = vmatmul.mubr.f32.gmra.mxu0 %v1434
        %v1619 = vpop.f32.mrf.mxu0
        %v1620 = vadd.f32 0.0, %v1619
        %v1621 = vpop.f32.mrf.mxu0
        %1622 = vmatprep.mubr.f32.mxu0 0.0
        %1623 = vmatmul.mubr.f32.gmra.mxu0 %v1437
        %v1624 = vpop.f32.mrf.mxu0
        %v1625 = vadd.f32 0.0, %v1624
        %v1626 = vpop.f32.mrf.mxu0
        %1627 = vmatprep.mubr.f32.mxu0 0.0
        %1628 = vmatmul.mubr.f32.gmra.mxu0 %v1440
        %v1629 = vpop.f32.mrf.mxu0
        %v1630 = vadd.f32 0.0, %v1629
        %v1631 = vpop.f32.mrf.mxu0
        %1632 = vmatprep.mubr.f32.mxu0 0.0
        %1633 = vmatmul.mubr.f32.gmra.mxu0 %v1443
        %v1634 = vpop.f32.mrf.mxu0
        %v1635 = vadd.f32 0.0, %v1634
        %v1636 = vpop.f32.mrf.mxu0
        %1637 = vmatprep.mubr.f32.mxu0 0.0
        %1638 = vmatmul.mubr.f32.gmra.mxu0 %v1446
        %v1639 = vpop.f32.mrf.mxu0
        %v1640 = vadd.f32 0.0, %v1639
        %v1641 = vpop.f32.mrf.mxu0
        %1642 = vmatprep.mubr.f32.mxu0 0.0
        %1643 = vmatmul.mubr.f32.gmra.mxu0 %v1449
        %v1644 = vpop.f32.mrf.mxu0
        %v1645 = vadd.f32 0.0, %v1644
        %v1646 = vpop.f32.mrf.mxu0
        %1647 = vmatprep.mubr.f32.mxu0 0.0
        %1648 = vmatmul.mubr.f32.gmra.mxu0 %v1452
        %v1649 = vpop.f32.mrf.mxu0
        %v1650 = vadd.f32 0.0, %v1649
        %v1651 = vpop.f32.mrf.mxu0
        %1652 = vmatprep.mubr.f32.mxu0 0.0
        %1653 = vmatmul.mubr.f32.gmra.mxu0 %v1455
        %v1654 = vpop.f32.mrf.mxu0
        %v1655 = vadd.f32 0.0, %v1654
        %v1656 = vpop.f32.mrf.mxu0
        %1657 = vmatprep.mubr.f32.mxu0 0.0
        %1658 = vmatmul.mubr.f32.gmra.mxu0 %v1458
        %v1659 = vpop.f32.mrf.mxu0
        %v1660 = vadd.f32 0.0, %v1659
        %v1661 = vpop.f32.mrf.mxu0
        %1662 = vmatprep.mubr.f32.mxu0 0.0
        %1663 = vmatmul.mubr.f32.gmra.mxu0 %v1461
        %v1664 = vpop.f32.mrf.mxu0
        %v1665 = vadd.f32 0.0, %v1664
        %v1666 = vpop.f32.mrf.mxu0
        %1667 = vmatprep.mubr.f32.mxu0 0.0
        %1668 = vmatmul.mubr.f32.gmra.mxu0 %v1464
        %v1669 = vpop.f32.mrf.mxu0
        %v1670 = vadd.f32 0.0, %v1669
        %v1671 = vpop.f32.mrf.mxu0
        %1672 = vmatprep.mubr.f32.mxu0 0.0
        %1673 = vmatmul.mubr.f32.gmra.mxu0 %v1467
        %v1674 = vpop.f32.mrf.mxu0
        %v1675 = vadd.f32 0.0, %v1674
        %v1676 = vpop.f32.mrf.mxu0
        %1677 = vmatprep.mubr.f32.mxu0 0.0
        %1678 = vmatmul.mubr.f32.gmra.mxu0 %v1470
        %v1679 = vpop.f32.mrf.mxu0
        %v1680 = vadd.f32 0.0, %v1679
        %v1681 = vpop.f32.mrf.mxu0
        %1682 = vmatprep.mubr.f32.mxu0 0.0
        %1683 = vmatmul.mubr.f32.gmra.mxu0 %v1473
        %v1684 = vpop.f32.mrf.mxu0
        %v1685 = vadd.f32 0.0, %v1684
        %v1686 = vpop.f32.mrf.mxu0
        %1687 = vmatprep.mubr.f32.mxu0 0.0
        %1688 = vmatmul.mubr.f32.gmra.mxu0 %v1476
        %v1689 = vpop.f32.mrf.mxu0
        %v1690 = vadd.f32 0.0, %v1689
        %v1691 = vpop.f32.mrf.mxu0
        %1692 = vmatprep.mubr.f32.mxu0 0.0
        %1693 = vmatmul.mubr.f32.gmra.mxu0 %v1479
        %v1694 = vpop.f32.mrf.mxu0
        %v1695 = vadd.f32 0.0, %v1694
        %v1696 = vpop.f32.mrf.mxu0
        %1697 = vmatprep.mubr.f32.mxu0 0.0
        %1698 = vmatmul.mubr.f32.gmra.mxu0 %v1482
        %v1699 = vpop.f32.mrf.mxu0
        %v1700 = vadd.f32 0.0, %v1699
        %v1701 = vpop.f32.mrf.mxu0
        %1702 = vmatprep.mubr.f32.mxu0 0.0
        %1703 = vmatmul.mubr.f32.gmra.mxu0 %v1485
        %v1704 = vpop.f32.mrf.mxu0
        %v1705 = vadd.f32 0.0, %v1704
        %v1706 = vpop.f32.mrf.mxu0
        %1707 = vmatprep.mubr.f32.mxu0 0.0
        %1708 = vmatmul.mubr.f32.gmra.mxu0 %v1488
        %v1709 = vpop.f32.mrf.mxu0
        %v1710 = vadd.f32 0.0, %v1709
        %v1711 = vpop.f32.mrf.mxu0
        %1712 = vmatprep.mubr.f32.mxu0 0.0
        %1713 = vmatmul.mubr.f32.gmra.mxu0 %v1491
        %v1714 = vpop.f32.mrf.mxu0
        %v1715 = vadd.f32 0.0, %v1714
        %v1716 = vpop.f32.mrf.mxu0
        %1717 = vdwg.mxu0
        %s1718 = scalar_lea.vmem %s3, 64
        %v1719 = vld [vmem:[%s1718] sm:$0xff]
        %v1720 = vld [vmem:[%s1718 + $0x8] sm:$0xff]
        %v1721 = vld [vmem:[%s1718 + $0x10] sm:$0xff]
        %v1722 = vld [vmem:[%s1718 + $0x18] sm:$0xff]
        %1723 = vmatprep.subr.mxu0 0.0
        %1724 = vmatpush1.msra.mxu0 0.0
        %1725 = vmatprep.subr.mxu0 0.0
        %1726 = vmatpush1.msra.mxu0 0.0
        %1727 = vmatprep.subr.mxu0 0.0
        %1728 = vmatpush1.msra.mxu0 0.0
        %1729 = vmatprep.subr.mxu0 0.0
        %1730 = vmatpush1.msra.mxu0 0.0
        %1731 = vmatprep.subr.mxu0 0.0
        %1732 = vmatpush1.msra.mxu0 0.0
        %1733 = vmatprep.subr.mxu0 0.0
        %1734 = vmatpush1.msra.mxu0 0.0
        %1735 = vmatprep.subr.mxu0 0.0
        %1736 = vmatpush1.msra.mxu0 0.0
        %1737 = vmatprep.subr.mxu0 0.0
        %1738 = vmatpush1.msra.mxu0 0.0
        %1739 = vmatprep.subr.mxu0 0.0
        %1740 = vmatpush1.msra.mxu0 0.0
        %1741 = vmatprep.subr.mxu0 0.0
        %1742 = vmatpush1.msra.mxu0 0.0
        %1743 = vmatprep.subr.mxu0 0.0
        %1744 = vmatpush1.msra.mxu0 0.0
        %1745 = vmatprep.subr.mxu0 0.0
        %1746 = vmatpush1.msra.mxu0 0.0
        %1747 = vmatprep.subr.mxu0 0.0
        %1748 = vmatpush1.msra.mxu0 %v1722
        %1749 = vmatprep.subr.mxu0 0.0
        %1750 = vmatpush1.msra.mxu0 %v1721
        %1751 = vmatprep.subr.mxu0 0.0
        %1752 = vmatpush1.msra.mxu0 %v1720
        %1753 = vmatprep.subr.mxu0 0.0
        %1754 = vmatpush1.msra.mxu0 %v1719
        %1755 = vmatprep.subr.mxu0 0.0
        %1756 = vmatpush2.msra.mxu0 0.0
        %1757 = vmatprep.subr.mxu0 0.0
        %1758 = vmatpush2.msra.mxu0 0.0
        %1759 = vmatprep.subr.mxu0 0.0
        %1760 = vmatpush2.msra.mxu0 0.0
        %1761 = vmatprep.subr.mxu0 0.0
        %1762 = vmatpush2.msra.mxu0 0.0
        %1763 = vmatprep.subr.mxu0 0.0
        %1764 = vmatpush2.msra.mxu0 0.0
        %1765 = vmatprep.subr.mxu0 0.0
        %1766 = vmatpush2.msra.mxu0 0.0
        %1767 = vmatprep.subr.mxu0 0.0
        %1768 = vmatpush2.msra.mxu0 0.0
        %1769 = vmatprep.subr.mxu0 0.0
        %1770 = vmatpush2.msra.mxu0 0.0
        %1771 = vmatprep.subr.mxu0 0.0
        %1772 = vmatpush2.msra.mxu0 0.0
        %1773 = vmatprep.subr.mxu0 0.0
        %1774 = vmatpush2.msra.mxu0 0.0
        %1775 = vmatprep.subr.mxu0 0.0
        %1776 = vmatpush2.msra.mxu0 0.0
        %1777 = vmatprep.subr.mxu0 0.0
        %1778 = vmatpush2.msra.mxu0 0.0
        %1779 = vmatprep.subr.mxu0 0.0
        %1780 = vmatpush2.msra.mxu0 0.0
        %1781 = vmatprep.subr.mxu0 0.0
        %1782 = vmatpush2.msra.mxu0 0.0
        %1783 = vmatprep.subr.mxu0 0.0
        %1784 = vmatpush2.msra.mxu0 0.0
        %1785 = vmatprep.subr.mxu0 0.0
        %1786 = vmatpush2.msra.mxu0 0.0
        %1787 = vmatprep.mubr.f32.mxu0 0.0
        %1788 = vmatmul.mubr.f32.gmra.mxu0 %v462
        %v1789 = vpop.f32.mrf.mxu0
        %v1790 = vadd.f32 0.0, %v1789
        %v1791 = vpop.f32.mrf.mxu0
        %1792 = vmatprep.mubr.f32.mxu0 0.0
        %1793 = vmatmul.mubr.f32.gmra.mxu0 %v465
        %v1794 = vpop.f32.mrf.mxu0
        %v1795 = vadd.f32 0.0, %v1794
        %v1796 = vpop.f32.mrf.mxu0
        %1797 = vmatprep.mubr.f32.mxu0 0.0
        %1798 = vmatmul.mubr.f32.gmra.mxu0 %v468
        %v1799 = vpop.f32.mrf.mxu0
        %v1800 = vadd.f32 0.0, %v1799
        %v1801 = vpop.f32.mrf.mxu0
        %1802 = vmatprep.mubr.f32.mxu0 0.0
        %1803 = vmatmul.mubr.f32.gmra.mxu0 %v471
        %v1804 = vpop.f32.mrf.mxu0
        %v1805 = vadd.f32 0.0, %v1804
        %v1806 = vpop.f32.mrf.mxu0
        %1807 = vmatprep.mubr.f32.mxu0 0.0
        %1808 = vmatmul.mubr.f32.gmra.mxu0 %v474
        %v1809 = vpop.f32.mrf.mxu0
        %v1810 = vadd.f32 0.0, %v1809
        %v1811 = vpop.f32.mrf.mxu0
        %1812 = vmatprep.mubr.f32.mxu0 0.0
        %1813 = vmatmul.mubr.f32.gmra.mxu0 %v477
        %v1814 = vpop.f32.mrf.mxu0
        %v1815 = vadd.f32 0.0, %v1814
        %v1816 = vpop.f32.mrf.mxu0
        %1817 = vmatprep.mubr.f32.mxu0 0.0
        %1818 = vmatmul.mubr.f32.gmra.mxu0 %v480
        %v1819 = vpop.f32.mrf.mxu0
        %v1820 = vadd.f32 0.0, %v1819
        %v1821 = vpop.f32.mrf.mxu0
        %1822 = vmatprep.mubr.f32.mxu0 0.0
        %1823 = vmatmul.mubr.f32.gmra.mxu0 %v483
        %v1824 = vpop.f32.mrf.mxu0
        %v1825 = vadd.f32 0.0, %v1824
        %v1826 = vpop.f32.mrf.mxu0
        %1827 = vmatprep.mubr.f32.mxu0 0.0
        %1828 = vmatmul.mubr.f32.gmra.mxu0 %v486
        %v1829 = vpop.f32.mrf.mxu0
        %v1830 = vadd.f32 0.0, %v1829
        %v1831 = vpop.f32.mrf.mxu0
        %1832 = vmatprep.mubr.f32.mxu0 0.0
        %1833 = vmatmul.mubr.f32.gmra.mxu0 %v489
        %v1834 = vpop.f32.mrf.mxu0
        %v1835 = vadd.f32 0.0, %v1834
        %v1836 = vpop.f32.mrf.mxu0
        %1837 = vmatprep.mubr.f32.mxu0 0.0
        %1838 = vmatmul.mubr.f32.gmra.mxu0 %v492
        %v1839 = vpop.f32.mrf.mxu0
        %v1840 = vadd.f32 0.0, %v1839
        %v1841 = vpop.f32.mrf.mxu0
        %1842 = vmatprep.mubr.f32.mxu0 0.0
        %1843 = vmatmul.mubr.f32.gmra.mxu0 %v495
        %v1844 = vpop.f32.mrf.mxu0
        %v1845 = vadd.f32 0.0, %v1844
        %v1846 = vpop.f32.mrf.mxu0
        %1847 = vmatprep.mubr.f32.mxu0 0.0
        %1848 = vmatmul.mubr.f32.gmra.mxu0 %v498
        %v1849 = vpop.f32.mrf.mxu0
        %v1850 = vadd.f32 0.0, %v1849
        %v1851 = vpop.f32.mrf.mxu0
        %1852 = vmatprep.mubr.f32.mxu0 0.0
        %1853 = vmatmul.mubr.f32.gmra.mxu0 %v501
        %v1854 = vpop.f32.mrf.mxu0
        %v1855 = vadd.f32 0.0, %v1854
        %v1856 = vpop.f32.mrf.mxu0
        %1857 = vmatprep.mubr.f32.mxu0 0.0
        %1858 = vmatmul.mubr.f32.gmra.mxu0 %v504
        %v1859 = vpop.f32.mrf.mxu0
        %v1860 = vadd.f32 0.0, %v1859
        %v1861 = vpop.f32.mrf.mxu0
        %1862 = vmatprep.mubr.f32.mxu0 0.0
        %1863 = vmatmul.mubr.f32.gmra.mxu0 %v507
        %v1864 = vpop.f32.mrf.mxu0
        %v1865 = vadd.f32 0.0, %v1864
        %v1866 = vpop.f32.mrf.mxu0
        %1867 = vmatprep.mubr.f32.mxu0 0.0
        %1868 = vmatmul.mubr.f32.gmra.mxu0 %v510
        %v1869 = vpop.f32.mrf.mxu0
        %v1870 = vadd.f32 0.0, %v1869
        %v1871 = vpop.f32.mrf.mxu0
        %1872 = vmatprep.mubr.f32.mxu0 0.0
        %1873 = vmatmul.mubr.f32.gmra.mxu0 %v513
        %v1874 = vpop.f32.mrf.mxu0
        %v1875 = vadd.f32 0.0, %v1874
        %v1876 = vpop.f32.mrf.mxu0
        %1877 = vmatprep.mubr.f32.mxu0 0.0
        %1878 = vmatmul.mubr.f32.gmra.mxu0 %v516
        %v1879 = vpop.f32.mrf.mxu0
        %v1880 = vadd.f32 0.0, %v1879
        %v1881 = vpop.f32.mrf.mxu0
        %1882 = vmatprep.mubr.f32.mxu0 0.0
        %1883 = vmatmul.mubr.f32.gmra.mxu0 %v519
        %v1884 = vpop.f32.mrf.mxu0
        %v1885 = vadd.f32 0.0, %v1884
        %v1886 = vpop.f32.mrf.mxu0
        %1887 = vmatprep.mubr.f32.mxu0 0.0
        %1888 = vmatmul.mubr.f32.gmra.mxu0 %v522
        %v1889 = vpop.f32.mrf.mxu0
        %v1890 = vadd.f32 0.0, %v1889
        %v1891 = vpop.f32.mrf.mxu0
        %1892 = vmatprep.mubr.f32.mxu0 0.0
        %1893 = vmatmul.mubr.f32.gmra.mxu0 %v525
        %v1894 = vpop.f32.mrf.mxu0
        %v1895 = vadd.f32 0.0, %v1894
        %v1896 = vpop.f32.mrf.mxu0
        %1897 = vmatprep.mubr.f32.mxu0 0.0
        %1898 = vmatmul.mubr.f32.gmra.mxu0 %v528
        %v1899 = vpop.f32.mrf.mxu0
        %v1900 = vadd.f32 0.0, %v1899
        %v1901 = vpop.f32.mrf.mxu0
        %1902 = vmatprep.mubr.f32.mxu0 0.0
        %1903 = vmatmul.mubr.f32.gmra.mxu0 %v531
        %v1904 = vpop.f32.mrf.mxu0
        %v1905 = vadd.f32 0.0, %v1904
        %v1906 = vpop.f32.mrf.mxu0
        %1907 = vmatprep.mubr.f32.mxu0 0.0
        %1908 = vmatmul.mubr.f32.gmra.mxu0 %v534
        %v1909 = vpop.f32.mrf.mxu0
        %v1910 = vadd.f32 0.0, %v1909
        %v1911 = vpop.f32.mrf.mxu0
        %1912 = vmatprep.mubr.f32.mxu0 0.0
        %1913 = vmatmul.mubr.f32.gmra.mxu0 %v537
        %v1914 = vpop.f32.mrf.mxu0
        %v1915 = vadd.f32 0.0, %v1914
        %v1916 = vpop.f32.mrf.mxu0
        %1917 = vmatprep.mubr.f32.mxu0 0.0
        %1918 = vmatmul.mubr.f32.gmra.mxu0 %v540
        %v1919 = vpop.f32.mrf.mxu0
        %v1920 = vadd.f32 0.0, %v1919
        %v1921 = vpop.f32.mrf.mxu0
        %1922 = vmatprep.mubr.f32.mxu0 0.0
        %1923 = vmatmul.mubr.f32.gmra.mxu0 %v543
        %v1924 = vpop.f32.mrf.mxu0
        %v1925 = vadd.f32 0.0, %v1924
        %v1926 = vpop.f32.mrf.mxu0
        %1927 = vmatprep.mubr.f32.mxu0 0.0
        %1928 = vmatmul.mubr.f32.gmra.mxu0 %v546
        %v1929 = vpop.f32.mrf.mxu0
        %v1930 = vadd.f32 0.0, %v1929
        %v1931 = vpop.f32.mrf.mxu0
        %1932 = vmatprep.mubr.f32.mxu0 0.0
        %1933 = vmatmul.mubr.f32.gmra.mxu0 %v549
        %v1934 = vpop.f32.mrf.mxu0
        %v1935 = vadd.f32 0.0, %v1934
        %v1936 = vpop.f32.mrf.mxu0
        %1937 = vmatprep.mubr.f32.mxu0 0.0
        %1938 = vmatmul.mubr.f32.gmra.mxu0 %v552
        %v1939 = vpop.f32.mrf.mxu0
        %v1940 = vadd.f32 0.0, %v1939
        %v1941 = vpop.f32.mrf.mxu0
        %1942 = vmatprep.mubr.f32.mxu0 0.0
        %1943 = vmatmul.mubr.f32.gmra.mxu0 %v555
        %v1944 = vpop.f32.mrf.mxu0
        %v1945 = vadd.f32 0.0, %v1944
        %v1946 = vpop.f32.mrf.mxu0
        %1947 = vdwg.mxu0
        %v1948 = vmul.f32 %v356, %v1790
        %v1949 = vmul.f32 %v357, %v1795
        %v1950 = vmul.f32 %v358, %v1800
        %v1951 = vmul.f32 %v359, %v1805
        %v1952 = vmul.f32 %v360, %v1810
        %v1953 = vmul.f32 %v361, %v1815
        %v1954 = vmul.f32 %v362, %v1820
        %v1955 = vmul.f32 %v363, %v1825
        %v1956 = vmul.f32 %v364, %v1830
        %v1957 = vmul.f32 %v365, %v1835
        %v1958 = vmul.f32 %v366, %v1840
        %v1959 = vmul.f32 %v367, %v1845
        %v1960 = vmul.f32 %v368, %v1850
        %v1961 = vmul.f32 %v369, %v1855
        %v1962 = vmul.f32 %v370, %v1860
        %v1963 = vmul.f32 %v371, %v1865
        %v1964 = vmul.f32 %v372, %v1870
        %v1965 = vmul.f32 %v373, %v1875
        %v1966 = vmul.f32 %v374, %v1880
        %v1967 = vmul.f32 %v375, %v1885
        %v1968 = vmul.f32 %v376, %v1890
        %v1969 = vmul.f32 %v377, %v1895
        %v1970 = vmul.f32 %v378, %v1900
        %v1971 = vmul.f32 %v379, %v1905
        %v1972 = vmul.f32 %v380, %v1910
        %v1973 = vmul.f32 %v381, %v1915
        %v1974 = vmul.f32 %v382, %v1920
        %v1975 = vmul.f32 %v383, %v1925
        %v1976 = vmul.f32 %v384, %v1930
        %v1977 = vmul.f32 %v385, %v1935
        %v1978 = vmul.f32 %v386, %v1940
        %v1979 = vmul.f32 %v387, %v1945
        %v1981 = vsel %vm460, %v1948, 0
        %v1984 = vsel %vm460, %v1949, 0
        %v1987 = vsel %vm460, %v1950, 0
        %v1990 = vsel %vm460, %v1951, 0
        %v1993 = vsel %vm460, %v1952, 0
        %v1996 = vsel %vm460, %v1953, 0
        %v1999 = vsel %vm460, %v1954, 0
        %v2002 = vsel %vm460, %v1955, 0
        %v2005 = vsel %vm460, %v1956, 0
        %v2008 = vsel %vm460, %v1957, 0
        %v2011 = vsel %vm460, %v1958, 0
        %v2014 = vsel %vm460, %v1959, 0
        %v2017 = vsel %vm460, %v1960, 0
        %v2020 = vsel %vm460, %v1961, 0
        %v2023 = vsel %vm460, %v1962, 0
        %v2026 = vsel %vm460, %v1963, 0
        %v2029 = vsel %vm460, %v1964, 0
        %v2032 = vsel %vm460, %v1965, 0
        %v2035 = vsel %vm460, %v1966, 0
        %v2038 = vsel %vm460, %v1967, 0
        %v2041 = vsel %vm460, %v1968, 0
        %v2044 = vsel %vm460, %v1969, 0
        %v2047 = vsel %vm460, %v1970, 0
        %v2050 = vsel %vm460, %v1971, 0
        %v2053 = vsel %vm460, %v1972, 0
        %v2056 = vsel %vm460, %v1973, 0
        %v2059 = vsel %vm460, %v1974, 0
        %v2062 = vsel %vm460, %v1975, 0
        %v2065 = vsel %vm460, %v1976, 0
        %v2068 = vsel %vm460, %v1977, 0
        %v2071 = vsel %vm460, %v1978, 0
        %v2074 = vsel %vm460, %v1979, 0
        %2076 = vmatprep.subr.mxu0 0.0
        %2077 = vmatpush1.msra.mxu0 0.0
        %2078 = vmatprep.subr.mxu0 0.0
        %2079 = vmatpush1.msra.mxu0 0.0
        %2080 = vmatprep.subr.mxu0 0.0
        %2081 = vmatpush1.msra.mxu0 0.0
        %2082 = vmatprep.subr.mxu0 0.0
        %2083 = vmatpush1.msra.mxu0 0.0
        %2084 = vmatprep.subr.mxu0 0.0
        %2085 = vmatpush1.msra.mxu0 0.0
        %2086 = vmatprep.subr.mxu0 0.0
        %2087 = vmatpush1.msra.mxu0 0.0
        %2088 = vmatprep.subr.mxu0 0.0
        %2089 = vmatpush1.msra.mxu0 0.0
        %2090 = vmatprep.subr.mxu0 0.0
        %2091 = vmatpush1.msra.mxu0 0.0
        %2092 = vmatprep.subr.mxu0 0.0
        %2093 = vmatpush1.msra.mxu0 0.0
        %2094 = vmatprep.subr.mxu0 0.0
        %2095 = vmatpush1.msra.mxu0 0.0
        %2096 = vmatprep.subr.mxu0 0.0
        %2097 = vmatpush1.msra.mxu0 0.0
        %2098 = vmatprep.subr.mxu0 0.0
        %2099 = vmatpush1.msra.mxu0 0.0
        %2100 = vmatprep.subr.mxu0 0.0
        %2101 = vmatpush1.msra.mxu0 %v455
        %2102 = vmatprep.subr.mxu0 0.0
        %2103 = vmatpush1.msra.mxu0 %v454
        %2104 = vmatprep.subr.mxu0 0.0
        %2105 = vmatpush1.msra.mxu0 %v453
        %2106 = vmatprep.subr.mxu0 0.0
        %2107 = vmatpush1.msra.mxu0 %v452
        %2108 = vmatprep.subr.mxu0 0.0
        %2109 = vmatpush2.msra.mxu0 0.0
        %2110 = vmatprep.subr.mxu0 0.0
        %2111 = vmatpush2.msra.mxu0 0.0
        %2112 = vmatprep.subr.mxu0 0.0
        %2113 = vmatpush2.msra.mxu0 0.0
        %2114 = vmatprep.subr.mxu0 0.0
        %2115 = vmatpush2.msra.mxu0 0.0
        %2116 = vmatprep.subr.mxu0 0.0
        %2117 = vmatpush2.msra.mxu0 0.0
        %2118 = vmatprep.subr.mxu0 0.0
        %2119 = vmatpush2.msra.mxu0 0.0
        %2120 = vmatprep.subr.mxu0 0.0
        %2121 = vmatpush2.msra.mxu0 0.0
        %2122 = vmatprep.subr.mxu0 0.0
        %2123 = vmatpush2.msra.mxu0 0.0
        %2124 = vmatprep.subr.mxu0 0.0
        %2125 = vmatpush2.msra.mxu0 0.0
        %2126 = vmatprep.subr.mxu0 0.0
        %2127 = vmatpush2.msra.mxu0 0.0
        %2128 = vmatprep.subr.mxu0 0.0
        %2129 = vmatpush2.msra.mxu0 0.0
        %2130 = vmatprep.subr.mxu0 0.0
        %2131 = vmatpush2.msra.mxu0 0.0
        %2132 = vmatprep.subr.mxu0 0.0
        %2133 = vmatpush2.msra.mxu0 0.0
        %2134 = vmatprep.subr.mxu0 0.0
        %2135 = vmatpush2.msra.mxu0 0.0
        %2136 = vmatprep.subr.mxu0 0.0
        %2137 = vmatpush2.msra.mxu0 0.0
        %2138 = vmatprep.subr.mxu0 0.0
        %2139 = vmatpush2.msra.mxu0 0.0
        %2140 = vmatprep.mubr.f32.mxu0 0.0
        %2141 = vmatmul.mubr.f32.gmra.mxu0 %v1981
        %v2142 = vpop.f32.mrf.mxu0
        %v2143 = vadd.f32 0.0, %v2142
        %v2144 = vpop.f32.mrf.mxu0
        %2145 = vmatprep.mubr.f32.mxu0 0.0
        %2146 = vmatmul.mubr.f32.gmra.mxu0 %v1984
        %v2147 = vpop.f32.mrf.mxu0
        %v2148 = vadd.f32 0.0, %v2147
        %v2149 = vpop.f32.mrf.mxu0
        %2150 = vmatprep.mubr.f32.mxu0 0.0
        %2151 = vmatmul.mubr.f32.gmra.mxu0 %v1987
        %v2152 = vpop.f32.mrf.mxu0
        %v2153 = vadd.f32 0.0, %v2152
        %v2154 = vpop.f32.mrf.mxu0
        %2155 = vmatprep.mubr.f32.mxu0 0.0
        %2156 = vmatmul.mubr.f32.gmra.mxu0 %v1990
        %v2157 = vpop.f32.mrf.mxu0
        %v2158 = vadd.f32 0.0, %v2157
        %v2159 = vpop.f32.mrf.mxu0
        %2160 = vmatprep.mubr.f32.mxu0 0.0
        %2161 = vmatmul.mubr.f32.gmra.mxu0 %v1993
        %v2162 = vpop.f32.mrf.mxu0
        %v2163 = vadd.f32 0.0, %v2162
        %v2164 = vpop.f32.mrf.mxu0
        %2165 = vmatprep.mubr.f32.mxu0 0.0
        %2166 = vmatmul.mubr.f32.gmra.mxu0 %v1996
        %v2167 = vpop.f32.mrf.mxu0
        %v2168 = vadd.f32 0.0, %v2167
        %v2169 = vpop.f32.mrf.mxu0
        %2170 = vmatprep.mubr.f32.mxu0 0.0
        %2171 = vmatmul.mubr.f32.gmra.mxu0 %v1999
        %v2172 = vpop.f32.mrf.mxu0
        %v2173 = vadd.f32 0.0, %v2172
        %v2174 = vpop.f32.mrf.mxu0
        %2175 = vmatprep.mubr.f32.mxu0 0.0
        %2176 = vmatmul.mubr.f32.gmra.mxu0 %v2002
        %v2177 = vpop.f32.mrf.mxu0
        %v2178 = vadd.f32 0.0, %v2177
        %v2179 = vpop.f32.mrf.mxu0
        %2180 = vmatprep.mubr.f32.mxu0 0.0
        %2181 = vmatmul.mubr.f32.gmra.mxu0 %v2005
        %v2182 = vpop.f32.mrf.mxu0
        %v2183 = vadd.f32 0.0, %v2182
        %v2184 = vpop.f32.mrf.mxu0
        %2185 = vmatprep.mubr.f32.mxu0 0.0
        %2186 = vmatmul.mubr.f32.gmra.mxu0 %v2008
        %v2187 = vpop.f32.mrf.mxu0
        %v2188 = vadd.f32 0.0, %v2187
        %v2189 = vpop.f32.mrf.mxu0
        %2190 = vmatprep.mubr.f32.mxu0 0.0
        %2191 = vmatmul.mubr.f32.gmra.mxu0 %v2011
        %v2192 = vpop.f32.mrf.mxu0
        %v2193 = vadd.f32 0.0, %v2192
        %v2194 = vpop.f32.mrf.mxu0
        %2195 = vmatprep.mubr.f32.mxu0 0.0
        %2196 = vmatmul.mubr.f32.gmra.mxu0 %v2014
        %v2197 = vpop.f32.mrf.mxu0
        %v2198 = vadd.f32 0.0, %v2197
        %v2199 = vpop.f32.mrf.mxu0
        %2200 = vmatprep.mubr.f32.mxu0 0.0
        %2201 = vmatmul.mubr.f32.gmra.mxu0 %v2017
        %v2202 = vpop.f32.mrf.mxu0
        %v2203 = vadd.f32 0.0, %v2202
        %v2204 = vpop.f32.mrf.mxu0
        %2205 = vmatprep.mubr.f32.mxu0 0.0
        %2206 = vmatmul.mubr.f32.gmra.mxu0 %v2020
        %v2207 = vpop.f32.mrf.mxu0
        %v2208 = vadd.f32 0.0, %v2207
        %v2209 = vpop.f32.mrf.mxu0
        %2210 = vmatprep.mubr.f32.mxu0 0.0
        %2211 = vmatmul.mubr.f32.gmra.mxu0 %v2023
        %v2212 = vpop.f32.mrf.mxu0
        %v2213 = vadd.f32 0.0, %v2212
        %v2214 = vpop.f32.mrf.mxu0
        %2215 = vmatprep.mubr.f32.mxu0 0.0
        %2216 = vmatmul.mubr.f32.gmra.mxu0 %v2026
        %v2217 = vpop.f32.mrf.mxu0
        %v2218 = vadd.f32 0.0, %v2217
        %v2219 = vpop.f32.mrf.mxu0
        %2220 = vmatprep.mubr.f32.mxu0 0.0
        %2221 = vmatmul.mubr.f32.gmra.mxu0 %v2029
        %v2222 = vpop.f32.mrf.mxu0
        %v2223 = vadd.f32 0.0, %v2222
        %v2224 = vpop.f32.mrf.mxu0
        %2225 = vmatprep.mubr.f32.mxu0 0.0
        %2226 = vmatmul.mubr.f32.gmra.mxu0 %v2032
        %v2227 = vpop.f32.mrf.mxu0
        %v2228 = vadd.f32 0.0, %v2227
        %v2229 = vpop.f32.mrf.mxu0
        %2230 = vmatprep.mubr.f32.mxu0 0.0
        %2231 = vmatmul.mubr.f32.gmra.mxu0 %v2035
        %v2232 = vpop.f32.mrf.mxu0
        %v2233 = vadd.f32 0.0, %v2232
        %v2234 = vpop.f32.mrf.mxu0
        %2235 = vmatprep.mubr.f32.mxu0 0.0
        %2236 = vmatmul.mubr.f32.gmra.mxu0 %v2038
        %v2237 = vpop.f32.mrf.mxu0
        %v2238 = vadd.f32 0.0, %v2237
        %v2239 = vpop.f32.mrf.mxu0
        %2240 = vmatprep.mubr.f32.mxu0 0.0
        %2241 = vmatmul.mubr.f32.gmra.mxu0 %v2041
        %v2242 = vpop.f32.mrf.mxu0
        %v2243 = vadd.f32 0.0, %v2242
        %v2244 = vpop.f32.mrf.mxu0
        %2245 = vmatprep.mubr.f32.mxu0 0.0
        %2246 = vmatmul.mubr.f32.gmra.mxu0 %v2044
        %v2247 = vpop.f32.mrf.mxu0
        %v2248 = vadd.f32 0.0, %v2247
        %v2249 = vpop.f32.mrf.mxu0
        %2250 = vmatprep.mubr.f32.mxu0 0.0
        %2251 = vmatmul.mubr.f32.gmra.mxu0 %v2047
        %v2252 = vpop.f32.mrf.mxu0
        %v2253 = vadd.f32 0.0, %v2252
        %v2254 = vpop.f32.mrf.mxu0
        %2255 = vmatprep.mubr.f32.mxu0 0.0
        %2256 = vmatmul.mubr.f32.gmra.mxu0 %v2050
        %v2257 = vpop.f32.mrf.mxu0
        %v2258 = vadd.f32 0.0, %v2257
        %v2259 = vpop.f32.mrf.mxu0
        %2260 = vmatprep.mubr.f32.mxu0 0.0
        %2261 = vmatmul.mubr.f32.gmra.mxu0 %v2053
        %v2262 = vpop.f32.mrf.mxu0
        %v2263 = vadd.f32 0.0, %v2262
        %v2264 = vpop.f32.mrf.mxu0
        %2265 = vmatprep.mubr.f32.mxu0 0.0
        %2266 = vmatmul.mubr.f32.gmra.mxu0 %v2056
        %v2267 = vpop.f32.mrf.mxu0
        %v2268 = vadd.f32 0.0, %v2267
        %v2269 = vpop.f32.mrf.mxu0
        %2270 = vmatprep.mubr.f32.mxu0 0.0
        %2271 = vmatmul.mubr.f32.gmra.mxu0 %v2059
        %v2272 = vpop.f32.mrf.mxu0
        %v2273 = vadd.f32 0.0, %v2272
        %v2274 = vpop.f32.mrf.mxu0
        %2275 = vmatprep.mubr.f32.mxu0 0.0
        %2276 = vmatmul.mubr.f32.gmra.mxu0 %v2062
        %v2277 = vpop.f32.mrf.mxu0
        %v2278 = vadd.f32 0.0, %v2277
        %v2279 = vpop.f32.mrf.mxu0
        %2280 = vmatprep.mubr.f32.mxu0 0.0
        %2281 = vmatmul.mubr.f32.gmra.mxu0 %v2065
        %v2282 = vpop.f32.mrf.mxu0
        %v2283 = vadd.f32 0.0, %v2282
        %v2284 = vpop.f32.mrf.mxu0
        %2285 = vmatprep.mubr.f32.mxu0 0.0
        %2286 = vmatmul.mubr.f32.gmra.mxu0 %v2068
        %v2287 = vpop.f32.mrf.mxu0
        %v2288 = vadd.f32 0.0, %v2287
        %v2289 = vpop.f32.mrf.mxu0
        %2290 = vmatprep.mubr.f32.mxu0 0.0
        %2291 = vmatmul.mubr.f32.gmra.mxu0 %v2071
        %v2292 = vpop.f32.mrf.mxu0
        %v2293 = vadd.f32 0.0, %v2292
        %v2294 = vpop.f32.mrf.mxu0
        %2295 = vmatprep.mubr.f32.mxu0 0.0
        %2296 = vmatmul.mubr.f32.gmra.mxu0 %v2074
        %v2297 = vpop.f32.mrf.mxu0
        %v2298 = vadd.f32 0.0, %v2297
        %v2299 = vpop.f32.mrf.mxu0
        %2300 = vdwg.mxu0
        %s2301 = scalar_lea.vmem %s3, 96
        %v2302 = vld [vmem:[%s2301] sm:$0xff]
        %v2303 = vld [vmem:[%s2301 + $0x8] sm:$0xff]
        %v2304 = vld [vmem:[%s2301 + $0x10] sm:$0xff]
        %v2305 = vld [vmem:[%s2301 + $0x18] sm:$0xff]
        %2306 = vmatprep.subr.mxu0 0.0
        %2307 = vmatpush1.msra.mxu0 0.0
        %2308 = vmatprep.subr.mxu0 0.0
        %2309 = vmatpush1.msra.mxu0 0.0
        %2310 = vmatprep.subr.mxu0 0.0
        %2311 = vmatpush1.msra.mxu0 0.0
        %2312 = vmatprep.subr.mxu0 0.0
        %2313 = vmatpush1.msra.mxu0 0.0
        %2314 = vmatprep.subr.mxu0 0.0
        %2315 = vmatpush1.msra.mxu0 0.0
        %2316 = vmatprep.subr.mxu0 0.0
        %2317 = vmatpush1.msra.mxu0 0.0
        %2318 = vmatprep.subr.mxu0 0.0
        %2319 = vmatpush1.msra.mxu0 0.0
        %2320 = vmatprep.subr.mxu0 0.0
        %2321 = vmatpush1.msra.mxu0 0.0
        %2322 = vmatprep.subr.mxu0 0.0
        %2323 = vmatpush1.msra.mxu0 0.0
        %2324 = vmatprep.subr.mxu0 0.0
        %2325 = vmatpush1.msra.mxu0 0.0
        %2326 = vmatprep.subr.mxu0 0.0
        %2327 = vmatpush1.msra.mxu0 0.0
        %2328 = vmatprep.subr.mxu0 0.0
        %2329 = vmatpush1.msra.mxu0 0.0
        %2330 = vmatprep.subr.mxu0 0.0
        %2331 = vmatpush1.msra.mxu0 %v2305
        %2332 = vmatprep.subr.mxu0 0.0
        %2333 = vmatpush1.msra.mxu0 %v2304
        %2334 = vmatprep.subr.mxu0 0.0
        %2335 = vmatpush1.msra.mxu0 %v2303
        %2336 = vmatprep.subr.mxu0 0.0
        %2337 = vmatpush1.msra.mxu0 %v2302
        %2338 = vmatprep.subr.mxu0 0.0
        %2339 = vmatpush2.msra.mxu0 0.0
        %2340 = vmatprep.subr.mxu0 0.0
        %2341 = vmatpush2.msra.mxu0 0.0
        %2342 = vmatprep.subr.mxu0 0.0
        %2343 = vmatpush2.msra.mxu0 0.0
        %2344 = vmatprep.subr.mxu0 0.0
        %2345 = vmatpush2.msra.mxu0 0.0
        %2346 = vmatprep.subr.mxu0 0.0
        %2347 = vmatpush2.msra.mxu0 0.0
        %2348 = vmatprep.subr.mxu0 0.0
        %2349 = vmatpush2.msra.mxu0 0.0
        %2350 = vmatprep.subr.mxu0 0.0
        %2351 = vmatpush2.msra.mxu0 0.0
        %2352 = vmatprep.subr.mxu0 0.0
        %2353 = vmatpush2.msra.mxu0 0.0
        %2354 = vmatprep.subr.mxu0 0.0
        %2355 = vmatpush2.msra.mxu0 0.0
        %2356 = vmatprep.subr.mxu0 0.0
        %2357 = vmatpush2.msra.mxu0 0.0
        %2358 = vmatprep.subr.mxu0 0.0
        %2359 = vmatpush2.msra.mxu0 0.0
        %2360 = vmatprep.subr.mxu0 0.0
        %2361 = vmatpush2.msra.mxu0 0.0
        %2362 = vmatprep.subr.mxu0 0.0
        %2363 = vmatpush2.msra.mxu0 0.0
        %2364 = vmatprep.subr.mxu0 0.0
        %2365 = vmatpush2.msra.mxu0 0.0
        %2366 = vmatprep.subr.mxu0 0.0
        %2367 = vmatpush2.msra.mxu0 0.0
        %2368 = vmatprep.subr.mxu0 0.0
        %2369 = vmatpush2.msra.mxu0 0.0
        %2370 = vmatprep.mubr.f32.mxu0 0.0
        %2371 = vmatmul.mubr.f32.gmra.mxu0 %v462
        %v2372 = vpop.f32.mrf.mxu0
        %v2373 = vadd.f32 0.0, %v2372
        %v2374 = vpop.f32.mrf.mxu0
        %2375 = vmatprep.mubr.f32.mxu0 0.0
        %2376 = vmatmul.mubr.f32.gmra.mxu0 %v465
        %v2377 = vpop.f32.mrf.mxu0
        %v2378 = vadd.f32 0.0, %v2377
        %v2379 = vpop.f32.mrf.mxu0
        %2380 = vmatprep.mubr.f32.mxu0 0.0
        %2381 = vmatmul.mubr.f32.gmra.mxu0 %v468
        %v2382 = vpop.f32.mrf.mxu0
        %v2383 = vadd.f32 0.0, %v2382
        %v2384 = vpop.f32.mrf.mxu0
        %2385 = vmatprep.mubr.f32.mxu0 0.0
        %2386 = vmatmul.mubr.f32.gmra.mxu0 %v471
        %v2387 = vpop.f32.mrf.mxu0
        %v2388 = vadd.f32 0.0, %v2387
        %v2389 = vpop.f32.mrf.mxu0
        %2390 = vmatprep.mubr.f32.mxu0 0.0
        %2391 = vmatmul.mubr.f32.gmra.mxu0 %v474
        %v2392 = vpop.f32.mrf.mxu0
        %v2393 = vadd.f32 0.0, %v2392
        %v2394 = vpop.f32.mrf.mxu0
        %2395 = vmatprep.mubr.f32.mxu0 0.0
        %2396 = vmatmul.mubr.f32.gmra.mxu0 %v477
        %v2397 = vpop.f32.mrf.mxu0
        %v2398 = vadd.f32 0.0, %v2397
        %v2399 = vpop.f32.mrf.mxu0
        %2400 = vmatprep.mubr.f32.mxu0 0.0
        %2401 = vmatmul.mubr.f32.gmra.mxu0 %v480
        %v2402 = vpop.f32.mrf.mxu0
        %v2403 = vadd.f32 0.0, %v2402
        %v2404 = vpop.f32.mrf.mxu0
        %2405 = vmatprep.mubr.f32.mxu0 0.0
        %2406 = vmatmul.mubr.f32.gmra.mxu0 %v483
        %v2407 = vpop.f32.mrf.mxu0
        %v2408 = vadd.f32 0.0, %v2407
        %v2409 = vpop.f32.mrf.mxu0
        %2410 = vmatprep.mubr.f32.mxu0 0.0
        %2411 = vmatmul.mubr.f32.gmra.mxu0 %v486
        %v2412 = vpop.f32.mrf.mxu0
        %v2413 = vadd.f32 0.0, %v2412
        %v2414 = vpop.f32.mrf.mxu0
        %2415 = vmatprep.mubr.f32.mxu0 0.0
        %2416 = vmatmul.mubr.f32.gmra.mxu0 %v489
        %v2417 = vpop.f32.mrf.mxu0
        %v2418 = vadd.f32 0.0, %v2417
        %v2419 = vpop.f32.mrf.mxu0
        %2420 = vmatprep.mubr.f32.mxu0 0.0
        %2421 = vmatmul.mubr.f32.gmra.mxu0 %v492
        %v2422 = vpop.f32.mrf.mxu0
        %v2423 = vadd.f32 0.0, %v2422
        %v2424 = vpop.f32.mrf.mxu0
        %2425 = vmatprep.mubr.f32.mxu0 0.0
        %2426 = vmatmul.mubr.f32.gmra.mxu0 %v495
        %v2427 = vpop.f32.mrf.mxu0
        %v2428 = vadd.f32 0.0, %v2427
        %v2429 = vpop.f32.mrf.mxu0
        %2430 = vmatprep.mubr.f32.mxu0 0.0
        %2431 = vmatmul.mubr.f32.gmra.mxu0 %v498
        %v2432 = vpop.f32.mrf.mxu0
        %v2433 = vadd.f32 0.0, %v2432
        %v2434 = vpop.f32.mrf.mxu0
        %2435 = vmatprep.mubr.f32.mxu0 0.0
        %2436 = vmatmul.mubr.f32.gmra.mxu0 %v501
        %v2437 = vpop.f32.mrf.mxu0
        %v2438 = vadd.f32 0.0, %v2437
        %v2439 = vpop.f32.mrf.mxu0
        %2440 = vmatprep.mubr.f32.mxu0 0.0
        %2441 = vmatmul.mubr.f32.gmra.mxu0 %v504
        %v2442 = vpop.f32.mrf.mxu0
        %v2443 = vadd.f32 0.0, %v2442
        %v2444 = vpop.f32.mrf.mxu0
        %2445 = vmatprep.mubr.f32.mxu0 0.0
        %2446 = vmatmul.mubr.f32.gmra.mxu0 %v507
        %v2447 = vpop.f32.mrf.mxu0
        %v2448 = vadd.f32 0.0, %v2447
        %v2449 = vpop.f32.mrf.mxu0
        %2450 = vmatprep.mubr.f32.mxu0 0.0
        %2451 = vmatmul.mubr.f32.gmra.mxu0 %v510
        %v2452 = vpop.f32.mrf.mxu0
        %v2453 = vadd.f32 0.0, %v2452
        %v2454 = vpop.f32.mrf.mxu0
        %2455 = vmatprep.mubr.f32.mxu0 0.0
        %2456 = vmatmul.mubr.f32.gmra.mxu0 %v513
        %v2457 = vpop.f32.mrf.mxu0
        %v2458 = vadd.f32 0.0, %v2457
        %v2459 = vpop.f32.mrf.mxu0
        %2460 = vmatprep.mubr.f32.mxu0 0.0
        %2461 = vmatmul.mubr.f32.gmra.mxu0 %v516
        %v2462 = vpop.f32.mrf.mxu0
        %v2463 = vadd.f32 0.0, %v2462
        %v2464 = vpop.f32.mrf.mxu0
        %2465 = vmatprep.mubr.f32.mxu0 0.0
        %2466 = vmatmul.mubr.f32.gmra.mxu0 %v519
        %v2467 = vpop.f32.mrf.mxu0
        %v2468 = vadd.f32 0.0, %v2467
        %v2469 = vpop.f32.mrf.mxu0
        %2470 = vmatprep.mubr.f32.mxu0 0.0
        %2471 = vmatmul.mubr.f32.gmra.mxu0 %v522
        %v2472 = vpop.f32.mrf.mxu0
        %v2473 = vadd.f32 0.0, %v2472
        %v2474 = vpop.f32.mrf.mxu0
        %2475 = vmatprep.mubr.f32.mxu0 0.0
        %2476 = vmatmul.mubr.f32.gmra.mxu0 %v525
        %v2477 = vpop.f32.mrf.mxu0
        %v2478 = vadd.f32 0.0, %v2477
        %v2479 = vpop.f32.mrf.mxu0
        %2480 = vmatprep.mubr.f32.mxu0 0.0
        %2481 = vmatmul.mubr.f32.gmra.mxu0 %v528
        %v2482 = vpop.f32.mrf.mxu0
        %v2483 = vadd.f32 0.0, %v2482
        %v2484 = vpop.f32.mrf.mxu0
        %2485 = vmatprep.mubr.f32.mxu0 0.0
        %2486 = vmatmul.mubr.f32.gmra.mxu0 %v531
        %v2487 = vpop.f32.mrf.mxu0
        %v2488 = vadd.f32 0.0, %v2487
        %v2489 = vpop.f32.mrf.mxu0
        %2490 = vmatprep.mubr.f32.mxu0 0.0
        %2491 = vmatmul.mubr.f32.gmra.mxu0 %v534
        %v2492 = vpop.f32.mrf.mxu0
        %v2493 = vadd.f32 0.0, %v2492
        %v2494 = vpop.f32.mrf.mxu0
        %2495 = vmatprep.mubr.f32.mxu0 0.0
        %2496 = vmatmul.mubr.f32.gmra.mxu0 %v537
        %v2497 = vpop.f32.mrf.mxu0
        %v2498 = vadd.f32 0.0, %v2497
        %v2499 = vpop.f32.mrf.mxu0
        %2500 = vmatprep.mubr.f32.mxu0 0.0
        %2501 = vmatmul.mubr.f32.gmra.mxu0 %v540
        %v2502 = vpop.f32.mrf.mxu0
        %v2503 = vadd.f32 0.0, %v2502
        %v2504 = vpop.f32.mrf.mxu0
        %2505 = vmatprep.mubr.f32.mxu0 0.0
        %2506 = vmatmul.mubr.f32.gmra.mxu0 %v543
        %v2507 = vpop.f32.mrf.mxu0
        %v2508 = vadd.f32 0.0, %v2507
        %v2509 = vpop.f32.mrf.mxu0
        %2510 = vmatprep.mubr.f32.mxu0 0.0
        %2511 = vmatmul.mubr.f32.gmra.mxu0 %v546
        %v2512 = vpop.f32.mrf.mxu0
        %v2513 = vadd.f32 0.0, %v2512
        %v2514 = vpop.f32.mrf.mxu0
        %2515 = vmatprep.mubr.f32.mxu0 0.0
        %2516 = vmatmul.mubr.f32.gmra.mxu0 %v549
        %v2517 = vpop.f32.mrf.mxu0
        %v2518 = vadd.f32 0.0, %v2517
        %v2519 = vpop.f32.mrf.mxu0
        %2520 = vmatprep.mubr.f32.mxu0 0.0
        %2521 = vmatmul.mubr.f32.gmra.mxu0 %v552
        %v2522 = vpop.f32.mrf.mxu0
        %v2523 = vadd.f32 0.0, %v2522
        %v2524 = vpop.f32.mrf.mxu0
        %2525 = vmatprep.mubr.f32.mxu0 0.0
        %2526 = vmatmul.mubr.f32.gmra.mxu0 %v555
        %v2527 = vpop.f32.mrf.mxu0
        %v2528 = vadd.f32 0.0, %v2527
        %v2529 = vpop.f32.mrf.mxu0
        %2530 = vdwg.mxu0
        %v2531 = vmul.f32 %v356, %v2373
        %v2532 = vmul.f32 %v357, %v2378
        %v2533 = vmul.f32 %v358, %v2383
        %v2534 = vmul.f32 %v359, %v2388
        %v2535 = vmul.f32 %v360, %v2393
        %v2536 = vmul.f32 %v361, %v2398
        %v2537 = vmul.f32 %v362, %v2403
        %v2538 = vmul.f32 %v363, %v2408
        %v2539 = vmul.f32 %v364, %v2413
        %v2540 = vmul.f32 %v365, %v2418
        %v2541 = vmul.f32 %v366, %v2423
        %v2542 = vmul.f32 %v367, %v2428
        %v2543 = vmul.f32 %v368, %v2433
        %v2544 = vmul.f32 %v369, %v2438
        %v2545 = vmul.f32 %v370, %v2443
        %v2546 = vmul.f32 %v371, %v2448
        %v2547 = vmul.f32 %v372, %v2453
        %v2548 = vmul.f32 %v373, %v2458
        %v2549 = vmul.f32 %v374, %v2463
        %v2550 = vmul.f32 %v375, %v2468
        %v2551 = vmul.f32 %v376, %v2473
        %v2552 = vmul.f32 %v377, %v2478
        %v2553 = vmul.f32 %v378, %v2483
        %v2554 = vmul.f32 %v379, %v2488
        %v2555 = vmul.f32 %v380, %v2493
        %v2556 = vmul.f32 %v381, %v2498
        %v2557 = vmul.f32 %v382, %v2503
        %v2558 = vmul.f32 %v383, %v2508
        %v2559 = vmul.f32 %v384, %v2513
        %v2560 = vmul.f32 %v385, %v2518
        %v2561 = vmul.f32 %v386, %v2523
        %v2562 = vmul.f32 %v387, %v2528
        %v2564 = vsel %vm460, %v2531, 0
        %v2567 = vsel %vm460, %v2532, 0
        %v2570 = vsel %vm460, %v2533, 0
        %v2573 = vsel %vm460, %v2534, 0
        %v2576 = vsel %vm460, %v2535, 0
        %v2579 = vsel %vm460, %v2536, 0
        %v2582 = vsel %vm460, %v2537, 0
        %v2585 = vsel %vm460, %v2538, 0
        %v2588 = vsel %vm460, %v2539, 0
        %v2591 = vsel %vm460, %v2540, 0
        %v2594 = vsel %vm460, %v2541, 0
        %v2597 = vsel %vm460, %v2542, 0
        %v2600 = vsel %vm460, %v2543, 0
        %v2603 = vsel %vm460, %v2544, 0
        %v2606 = vsel %vm460, %v2545, 0
        %v2609 = vsel %vm460, %v2546, 0
        %v2612 = vsel %vm460, %v2547, 0
        %v2615 = vsel %vm460, %v2548, 0
        %v2618 = vsel %vm460, %v2549, 0
        %v2621 = vsel %vm460, %v2550, 0
        %v2624 = vsel %vm460, %v2551, 0
        %v2627 = vsel %vm460, %v2552, 0
        %v2630 = vsel %vm460, %v2553, 0
        %v2633 = vsel %vm460, %v2554, 0
        %v2636 = vsel %vm460, %v2555, 0
        %v2639 = vsel %vm460, %v2556, 0
        %v2642 = vsel %vm460, %v2557, 0
        %v2645 = vsel %vm460, %v2558, 0
        %v2648 = vsel %vm460, %v2559, 0
        %v2651 = vsel %vm460, %v2560, 0
        %v2654 = vsel %vm460, %v2561, 0
        %v2657 = vsel %vm460, %v2562, 0
        %2659 = vmatprep.subr.mxu0 0.0
        %2660 = vmatpush1.msra.mxu0 0.0
        %2661 = vmatprep.subr.mxu0 0.0
        %2662 = vmatpush1.msra.mxu0 0.0
        %2663 = vmatprep.subr.mxu0 0.0
        %2664 = vmatpush1.msra.mxu0 0.0
        %2665 = vmatprep.subr.mxu0 0.0
        %2666 = vmatpush1.msra.mxu0 0.0
        %2667 = vmatprep.subr.mxu0 0.0
        %2668 = vmatpush1.msra.mxu0 0.0
        %2669 = vmatprep.subr.mxu0 0.0
        %2670 = vmatpush1.msra.mxu0 0.0
        %2671 = vmatprep.subr.mxu0 0.0
        %2672 = vmatpush1.msra.mxu0 0.0
        %2673 = vmatprep.subr.mxu0 0.0
        %2674 = vmatpush1.msra.mxu0 0.0
        %2675 = vmatprep.subr.mxu0 0.0
        %2676 = vmatpush1.msra.mxu0 0.0
        %2677 = vmatprep.subr.mxu0 0.0
        %2678 = vmatpush1.msra.mxu0 0.0
        %2679 = vmatprep.subr.mxu0 0.0
        %2680 = vmatpush1.msra.mxu0 0.0
        %2681 = vmatprep.subr.mxu0 0.0
        %2682 = vmatpush1.msra.mxu0 0.0
        %2683 = vmatprep.subr.mxu0 0.0
        %2684 = vmatpush1.msra.mxu0 %v455
        %2685 = vmatprep.subr.mxu0 0.0
        %2686 = vmatpush1.msra.mxu0 %v454
        %2687 = vmatprep.subr.mxu0 0.0
        %2688 = vmatpush1.msra.mxu0 %v453
        %2689 = vmatprep.subr.mxu0 0.0
        %2690 = vmatpush1.msra.mxu0 %v452
        %2691 = vmatprep.subr.mxu0 0.0
        %2692 = vmatpush2.msra.mxu0 0.0
        %2693 = vmatprep.subr.mxu0 0.0
        %2694 = vmatpush2.msra.mxu0 0.0
        %2695 = vmatprep.subr.mxu0 0.0
        %2696 = vmatpush2.msra.mxu0 0.0
        %2697 = vmatprep.subr.mxu0 0.0
        %2698 = vmatpush2.msra.mxu0 0.0
        %2699 = vmatprep.subr.mxu0 0.0
        %2700 = vmatpush2.msra.mxu0 0.0
        %2701 = vmatprep.subr.mxu0 0.0
        %2702 = vmatpush2.msra.mxu0 0.0
        %2703 = vmatprep.subr.mxu0 0.0
        %2704 = vmatpush2.msra.mxu0 0.0
        %2705 = vmatprep.subr.mxu0 0.0
        %2706 = vmatpush2.msra.mxu0 0.0
        %2707 = vmatprep.subr.mxu0 0.0
        %2708 = vmatpush2.msra.mxu0 0.0
        %2709 = vmatprep.subr.mxu0 0.0
        %2710 = vmatpush2.msra.mxu0 0.0
        %2711 = vmatprep.subr.mxu0 0.0
        %2712 = vmatpush2.msra.mxu0 0.0
        %2713 = vmatprep.subr.mxu0 0.0
        %2714 = vmatpush2.msra.mxu0 0.0
        %2715 = vmatprep.subr.mxu0 0.0
        %2716 = vmatpush2.msra.mxu0 0.0
        %2717 = vmatprep.subr.mxu0 0.0
        %2718 = vmatpush2.msra.mxu0 0.0
        %2719 = vmatprep.subr.mxu0 0.0
        %2720 = vmatpush2.msra.mxu0 0.0
        %2721 = vmatprep.subr.mxu0 0.0
        %2722 = vmatpush2.msra.mxu0 0.0
        %2723 = vmatprep.mubr.f32.mxu0 0.0
        %2724 = vmatmul.mubr.f32.gmra.mxu0 %v2564
        %v2725 = vpop.f32.mrf.mxu0
        %v2726 = vadd.f32 0.0, %v2725
        %v2727 = vpop.f32.mrf.mxu0
        %2728 = vmatprep.mubr.f32.mxu0 0.0
        %2729 = vmatmul.mubr.f32.gmra.mxu0 %v2567
        %v2730 = vpop.f32.mrf.mxu0
        %v2731 = vadd.f32 0.0, %v2730
        %v2732 = vpop.f32.mrf.mxu0
        %2733 = vmatprep.mubr.f32.mxu0 0.0
        %2734 = vmatmul.mubr.f32.gmra.mxu0 %v2570
        %v2735 = vpop.f32.mrf.mxu0
        %v2736 = vadd.f32 0.0, %v2735
        %v2737 = vpop.f32.mrf.mxu0
        %2738 = vmatprep.mubr.f32.mxu0 0.0
        %2739 = vmatmul.mubr.f32.gmra.mxu0 %v2573
        %v2740 = vpop.f32.mrf.mxu0
        %v2741 = vadd.f32 0.0, %v2740
        %v2742 = vpop.f32.mrf.mxu0
        %2743 = vmatprep.mubr.f32.mxu0 0.0
        %2744 = vmatmul.mubr.f32.gmra.mxu0 %v2576
        %v2745 = vpop.f32.mrf.mxu0
        %v2746 = vadd.f32 0.0, %v2745
        %v2747 = vpop.f32.mrf.mxu0
        %2748 = vmatprep.mubr.f32.mxu0 0.0
        %2749 = vmatmul.mubr.f32.gmra.mxu0 %v2579
        %v2750 = vpop.f32.mrf.mxu0
        %v2751 = vadd.f32 0.0, %v2750
        %v2752 = vpop.f32.mrf.mxu0
        %2753 = vmatprep.mubr.f32.mxu0 0.0
        %2754 = vmatmul.mubr.f32.gmra.mxu0 %v2582
        %v2755 = vpop.f32.mrf.mxu0
        %v2756 = vadd.f32 0.0, %v2755
        %v2757 = vpop.f32.mrf.mxu0
        %2758 = vmatprep.mubr.f32.mxu0 0.0
        %2759 = vmatmul.mubr.f32.gmra.mxu0 %v2585
        %v2760 = vpop.f32.mrf.mxu0
        %v2761 = vadd.f32 0.0, %v2760
        %v2762 = vpop.f32.mrf.mxu0
        %2763 = vmatprep.mubr.f32.mxu0 0.0
        %2764 = vmatmul.mubr.f32.gmra.mxu0 %v2588
        %v2765 = vpop.f32.mrf.mxu0
        %v2766 = vadd.f32 0.0, %v2765
        %v2767 = vpop.f32.mrf.mxu0
        %2768 = vmatprep.mubr.f32.mxu0 0.0
        %2769 = vmatmul.mubr.f32.gmra.mxu0 %v2591
        %v2770 = vpop.f32.mrf.mxu0
        %v2771 = vadd.f32 0.0, %v2770
        %v2772 = vpop.f32.mrf.mxu0
        %2773 = vmatprep.mubr.f32.mxu0 0.0
        %2774 = vmatmul.mubr.f32.gmra.mxu0 %v2594
        %v2775 = vpop.f32.mrf.mxu0
        %v2776 = vadd.f32 0.0, %v2775
        %v2777 = vpop.f32.mrf.mxu0
        %2778 = vmatprep.mubr.f32.mxu0 0.0
        %2779 = vmatmul.mubr.f32.gmra.mxu0 %v2597
        %v2780 = vpop.f32.mrf.mxu0
        %v2781 = vadd.f32 0.0, %v2780
        %v2782 = vpop.f32.mrf.mxu0
        %2783 = vmatprep.mubr.f32.mxu0 0.0
        %2784 = vmatmul.mubr.f32.gmra.mxu0 %v2600
        %v2785 = vpop.f32.mrf.mxu0
        %v2786 = vadd.f32 0.0, %v2785
        %v2787 = vpop.f32.mrf.mxu0
        %2788 = vmatprep.mubr.f32.mxu0 0.0
        %2789 = vmatmul.mubr.f32.gmra.mxu0 %v2603
        %v2790 = vpop.f32.mrf.mxu0
        %v2791 = vadd.f32 0.0, %v2790
        %v2792 = vpop.f32.mrf.mxu0
        %2793 = vmatprep.mubr.f32.mxu0 0.0
        %2794 = vmatmul.mubr.f32.gmra.mxu0 %v2606
        %v2795 = vpop.f32.mrf.mxu0
        %v2796 = vadd.f32 0.0, %v2795
        %v2797 = vpop.f32.mrf.mxu0
        %2798 = vmatprep.mubr.f32.mxu0 0.0
        %2799 = vmatmul.mubr.f32.gmra.mxu0 %v2609
        %v2800 = vpop.f32.mrf.mxu0
        %v2801 = vadd.f32 0.0, %v2800
        %v2802 = vpop.f32.mrf.mxu0
        %2803 = vmatprep.mubr.f32.mxu0 0.0
        %2804 = vmatmul.mubr.f32.gmra.mxu0 %v2612
        %v2805 = vpop.f32.mrf.mxu0
        %v2806 = vadd.f32 0.0, %v2805
        %v2807 = vpop.f32.mrf.mxu0
        %2808 = vmatprep.mubr.f32.mxu0 0.0
        %2809 = vmatmul.mubr.f32.gmra.mxu0 %v2615
        %v2810 = vpop.f32.mrf.mxu0
        %v2811 = vadd.f32 0.0, %v2810
        %v2812 = vpop.f32.mrf.mxu0
        %2813 = vmatprep.mubr.f32.mxu0 0.0
        %2814 = vmatmul.mubr.f32.gmra.mxu0 %v2618
        %v2815 = vpop.f32.mrf.mxu0
        %v2816 = vadd.f32 0.0, %v2815
        %v2817 = vpop.f32.mrf.mxu0
        %2818 = vmatprep.mubr.f32.mxu0 0.0
        %2819 = vmatmul.mubr.f32.gmra.mxu0 %v2621
        %v2820 = vpop.f32.mrf.mxu0
        %v2821 = vadd.f32 0.0, %v2820
        %v2822 = vpop.f32.mrf.mxu0
        %2823 = vmatprep.mubr.f32.mxu0 0.0
        %2824 = vmatmul.mubr.f32.gmra.mxu0 %v2624
        %v2825 = vpop.f32.mrf.mxu0
        %v2826 = vadd.f32 0.0, %v2825
        %v2827 = vpop.f32.mrf.mxu0
        %2828 = vmatprep.mubr.f32.mxu0 0.0
        %2829 = vmatmul.mubr.f32.gmra.mxu0 %v2627
        %v2830 = vpop.f32.mrf.mxu0
        %v2831 = vadd.f32 0.0, %v2830
        %v2832 = vpop.f32.mrf.mxu0
        %2833 = vmatprep.mubr.f32.mxu0 0.0
        %2834 = vmatmul.mubr.f32.gmra.mxu0 %v2630
        %v2835 = vpop.f32.mrf.mxu0
        %v2836 = vadd.f32 0.0, %v2835
        %v2837 = vpop.f32.mrf.mxu0
        %2838 = vmatprep.mubr.f32.mxu0 0.0
        %2839 = vmatmul.mubr.f32.gmra.mxu0 %v2633
        %v2840 = vpop.f32.mrf.mxu0
        %v2841 = vadd.f32 0.0, %v2840
        %v2842 = vpop.f32.mrf.mxu0
        %2843 = vmatprep.mubr.f32.mxu0 0.0
        %2844 = vmatmul.mubr.f32.gmra.mxu0 %v2636
        %v2845 = vpop.f32.mrf.mxu0
        %v2846 = vadd.f32 0.0, %v2845
        %v2847 = vpop.f32.mrf.mxu0
        %2848 = vmatprep.mubr.f32.mxu0 0.0
        %2849 = vmatmul.mubr.f32.gmra.mxu0 %v2639
        %v2850 = vpop.f32.mrf.mxu0
        %v2851 = vadd.f32 0.0, %v2850
        %v2852 = vpop.f32.mrf.mxu0
        %2853 = vmatprep.mubr.f32.mxu0 0.0
        %2854 = vmatmul.mubr.f32.gmra.mxu0 %v2642
        %v2855 = vpop.f32.mrf.mxu0
        %v2856 = vadd.f32 0.0, %v2855
        %v2857 = vpop.f32.mrf.mxu0
        %2858 = vmatprep.mubr.f32.mxu0 0.0
        %2859 = vmatmul.mubr.f32.gmra.mxu0 %v2645
        %v2860 = vpop.f32.mrf.mxu0
        %v2861 = vadd.f32 0.0, %v2860
        %v2862 = vpop.f32.mrf.mxu0
        %2863 = vmatprep.mubr.f32.mxu0 0.0
        %2864 = vmatmul.mubr.f32.gmra.mxu0 %v2648
        %v2865 = vpop.f32.mrf.mxu0
        %v2866 = vadd.f32 0.0, %v2865
        %v2867 = vpop.f32.mrf.mxu0
        %2868 = vmatprep.mubr.f32.mxu0 0.0
        %2869 = vmatmul.mubr.f32.gmra.mxu0 %v2651
        %v2870 = vpop.f32.mrf.mxu0
        %v2871 = vadd.f32 0.0, %v2870
        %v2872 = vpop.f32.mrf.mxu0
        %2873 = vmatprep.mubr.f32.mxu0 0.0
        %2874 = vmatmul.mubr.f32.gmra.mxu0 %v2654
        %v2875 = vpop.f32.mrf.mxu0
        %v2876 = vadd.f32 0.0, %v2875
        %v2877 = vpop.f32.mrf.mxu0
        %2878 = vmatprep.mubr.f32.mxu0 0.0
        %2879 = vmatmul.mubr.f32.gmra.mxu0 %v2657
        %v2880 = vpop.f32.mrf.mxu0
        %v2881 = vadd.f32 0.0, %v2880
        %v2882 = vpop.f32.mrf.mxu0
        %2883 = vdwg.mxu0
        %v2884 = vmax.f32 %v977, %v1560
        %v2885 = vmax.f32 %v982, %v1565
        %v2886 = vmax.f32 %v987, %v1570
        %v2887 = vmax.f32 %v992, %v1575
        %v2888 = vmax.f32 %v997, %v1580
        %v2889 = vmax.f32 %v1002, %v1585
        %v2890 = vmax.f32 %v1007, %v1590
        %v2891 = vmax.f32 %v1012, %v1595
        %v2892 = vmax.f32 %v1017, %v1600
        %v2893 = vmax.f32 %v1022, %v1605
        %v2894 = vmax.f32 %v1027, %v1610
        %v2895 = vmax.f32 %v1032, %v1615
        %v2896 = vmax.f32 %v1037, %v1620
        %v2897 = vmax.f32 %v1042, %v1625
        %v2898 = vmax.f32 %v1047, %v1630
        %v2899 = vmax.f32 %v1052, %v1635
        %v2900 = vmax.f32 %v1057, %v1640
        %v2901 = vmax.f32 %v1062, %v1645
        %v2902 = vmax.f32 %v1067, %v1650
        %v2903 = vmax.f32 %v1072, %v1655
        %v2904 = vmax.f32 %v1077, %v1660
        %v2905 = vmax.f32 %v1082, %v1665
        %v2906 = vmax.f32 %v1087, %v1670
        %v2907 = vmax.f32 %v1092, %v1675
        %v2908 = vmax.f32 %v1097, %v1680
        %v2909 = vmax.f32 %v1102, %v1685
        %v2910 = vmax.f32 %v1107, %v1690
        %v2911 = vmax.f32 %v1112, %v1695
        %v2912 = vmax.f32 %v1117, %v1700
        %v2913 = vmax.f32 %v1122, %v1705
        %v2914 = vmax.f32 %v1127, %v1710
        %v2915 = vmax.f32 %v1132, %v1715
        %v2916 = vmax.f32 %v2884, %v2143
        %v2917 = vmax.f32 %v2885, %v2148
        %v2918 = vmax.f32 %v2886, %v2153
        %v2919 = vmax.f32 %v2887, %v2158
        %v2920 = vmax.f32 %v2888, %v2163
        %v2921 = vmax.f32 %v2889, %v2168
        %v2922 = vmax.f32 %v2890, %v2173
        %v2923 = vmax.f32 %v2891, %v2178
        %v2924 = vmax.f32 %v2892, %v2183
        %v2925 = vmax.f32 %v2893, %v2188
        %v2926 = vmax.f32 %v2894, %v2193
        %v2927 = vmax.f32 %v2895, %v2198
        %v2928 = vmax.f32 %v2896, %v2203
        %v2929 = vmax.f32 %v2897, %v2208
        %v2930 = vmax.f32 %v2898, %v2213
        %v2931 = vmax.f32 %v2899, %v2218
        %v2932 = vmax.f32 %v2900, %v2223
        %v2933 = vmax.f32 %v2901, %v2228
        %v2934 = vmax.f32 %v2902, %v2233
        %v2935 = vmax.f32 %v2903, %v2238
        %v2936 = vmax.f32 %v2904, %v2243
        %v2937 = vmax.f32 %v2905, %v2248
        %v2938 = vmax.f32 %v2906, %v2253
        %v2939 = vmax.f32 %v2907, %v2258
        %v2940 = vmax.f32 %v2908, %v2263
        %v2941 = vmax.f32 %v2909, %v2268
        %v2942 = vmax.f32 %v2910, %v2273
        %v2943 = vmax.f32 %v2911, %v2278
        %v2944 = vmax.f32 %v2912, %v2283
        %v2945 = vmax.f32 %v2913, %v2288
        %v2946 = vmax.f32 %v2914, %v2293
        %v2947 = vmax.f32 %v2915, %v2298
        %v2948 = vmax.f32 %v2916, %v2726
        %v2949 = vmax.f32 %v2917, %v2731
        %v2950 = vmax.f32 %v2918, %v2736
        %v2951 = vmax.f32 %v2919, %v2741
        %v2952 = vmax.f32 %v2920, %v2746
        %v2953 = vmax.f32 %v2921, %v2751
        %v2954 = vmax.f32 %v2922, %v2756
        %v2955 = vmax.f32 %v2923, %v2761
        %v2956 = vmax.f32 %v2924, %v2766
        %v2957 = vmax.f32 %v2925, %v2771
        %v2958 = vmax.f32 %v2926, %v2776
        %v2959 = vmax.f32 %v2927, %v2781
        %v2960 = vmax.f32 %v2928, %v2786
        %v2961 = vmax.f32 %v2929, %v2791
        %v2962 = vmax.f32 %v2930, %v2796
        %v2963 = vmax.f32 %v2931, %v2801
        %v2964 = vmax.f32 %v2932, %v2806
        %v2965 = vmax.f32 %v2933, %v2811
        %v2966 = vmax.f32 %v2934, %v2816
        %v2967 = vmax.f32 %v2935, %v2821
        %v2968 = vmax.f32 %v2936, %v2826
        %v2969 = vmax.f32 %v2937, %v2831
        %v2970 = vmax.f32 %v2938, %v2836
        %v2971 = vmax.f32 %v2939, %v2841
        %v2972 = vmax.f32 %v2940, %v2846
        %v2973 = vmax.f32 %v2941, %v2851
        %v2974 = vmax.f32 %v2942, %v2856
        %v2975 = vmax.f32 %v2943, %v2861
        %v2976 = vmax.f32 %v2944, %v2866
        %v2977 = vmax.f32 %v2945, %v2871
        %v2978 = vmax.f32 %v2946, %v2876
        %v2979 = vmax.f32 %v2947, %v2881
        %v2980 = vsub.f32 %v977, %v2948
        %v2981 = vsub.f32 %v982, %v2949
        %v2982 = vsub.f32 %v987, %v2950
        %v2983 = vsub.f32 %v992, %v2951
        %v2984 = vsub.f32 %v997, %v2952
        %v2985 = vsub.f32 %v1002, %v2953
        %v2986 = vsub.f32 %v1007, %v2954
        %v2987 = vsub.f32 %v1012, %v2955
        %v2988 = vsub.f32 %v1017, %v2956
        %v2989 = vsub.f32 %v1022, %v2957
        %v2990 = vsub.f32 %v1027, %v2958
        %v2991 = vsub.f32 %v1032, %v2959
        %v2992 = vsub.f32 %v1037, %v2960
        %v2993 = vsub.f32 %v1042, %v2961
        %v2994 = vsub.f32 %v1047, %v2962
        %v2995 = vsub.f32 %v1052, %v2963
        %v2996 = vsub.f32 %v1057, %v2964
        %v2997 = vsub.f32 %v1062, %v2965
        %v2998 = vsub.f32 %v1067, %v2966
        %v2999 = vsub.f32 %v1072, %v2967
        %v3000 = vsub.f32 %v1077, %v2968
        %v3001 = vsub.f32 %v1082, %v2969
        %v3002 = vsub.f32 %v1087, %v2970
        %v3003 = vsub.f32 %v1092, %v2971
        %v3004 = vsub.f32 %v1097, %v2972
        %v3005 = vsub.f32 %v1102, %v2973
        %v3006 = vsub.f32 %v1107, %v2974
        %v3007 = vsub.f32 %v1112, %v2975
        %v3008 = vsub.f32 %v1117, %v2976
        %v3009 = vsub.f32 %v1122, %v2977
        %v3010 = vsub.f32 %v1127, %v2978
        %v3011 = vsub.f32 %v1132, %v2979
        %v3012 = vmul.f32 %v2980, 1.442695
        %v3013 = vpow.pop %v3012
        %v3014 = vmul.f32 %v2981, 1.442695
        %v3015 = vpow.pop %v3014
        %v3016 = vmul.f32 %v2982, 1.442695
        %v3017 = vpow.pop %v3016
        %v3018 = vmul.f32 %v2983, 1.442695
        %v3019 = vpow.pop %v3018
        %v3020 = vmul.f32 %v2984, 1.442695
        %v3021 = vpow.pop %v3020
        %v3022 = vmul.f32 %v2985, 1.442695
        %v3023 = vpow.pop %v3022
        %v3024 = vmul.f32 %v2986, 1.442695
        %v3025 = vpow.pop %v3024
        %v3026 = vmul.f32 %v2987, 1.442695
        %v3027 = vpow.pop %v3026
        %v3028 = vmul.f32 %v2988, 1.442695
        %v3029 = vpow.pop %v3028
        %v3030 = vmul.f32 %v2989, 1.442695
        %v3031 = vpow.pop %v3030
        %v3032 = vmul.f32 %v2990, 1.442695
        %v3033 = vpow.pop %v3032
        %v3034 = vmul.f32 %v2991, 1.442695
        %v3035 = vpow.pop %v3034
        %v3036 = vmul.f32 %v2992, 1.442695
        %v3037 = vpow.pop %v3036
        %v3038 = vmul.f32 %v2993, 1.442695
        %v3039 = vpow.pop %v3038
        %v3040 = vmul.f32 %v2994, 1.442695
        %v3041 = vpow.pop %v3040
        %v3042 = vmul.f32 %v2995, 1.442695
        %v3043 = vpow.pop %v3042
        %v3044 = vmul.f32 %v2996, 1.442695
        %v3045 = vpow.pop %v3044
        %v3046 = vmul.f32 %v2997, 1.442695
        %v3047 = vpow.pop %v3046
        %v3048 = vmul.f32 %v2998, 1.442695
        %v3049 = vpow.pop %v3048
        %v3050 = vmul.f32 %v2999, 1.442695
        %v3051 = vpow.pop %v3050
        %v3052 = vmul.f32 %v3000, 1.442695
        %v3053 = vpow.pop %v3052
        %v3054 = vmul.f32 %v3001, 1.442695
        %v3055 = vpow.pop %v3054
        %v3056 = vmul.f32 %v3002, 1.442695
        %v3057 = vpow.pop %v3056
        %v3058 = vmul.f32 %v3003, 1.442695
        %v3059 = vpow.pop %v3058
        %v3060 = vmul.f32 %v3004, 1.442695
        %v3061 = vpow.pop %v3060
        %v3062 = vmul.f32 %v3005, 1.442695
        %v3063 = vpow.pop %v3062
        %v3064 = vmul.f32 %v3006, 1.442695
        %v3065 = vpow.pop %v3064
        %v3066 = vmul.f32 %v3007, 1.442695
        %v3067 = vpow.pop %v3066
        %v3068 = vmul.f32 %v3008, 1.442695
        %v3069 = vpow.pop %v3068
        %v3070 = vmul.f32 %v3009, 1.442695
        %v3071 = vpow.pop %v3070
        %v3072 = vmul.f32 %v3010, 1.442695
        %v3073 = vpow.pop %v3072
        %v3074 = vmul.f32 %v3011, 1.442695
        %v3075 = vpow.pop %v3074
        %v3076 = vadd.f32 %v3013, 0.0
        %v3077 = vadd.f32 %v3015, 0.0
        %v3078 = vadd.f32 %v3017, 0.0
        %v3079 = vadd.f32 %v3019, 0.0
        %v3080 = vadd.f32 %v3021, 0.0
        %v3081 = vadd.f32 %v3023, 0.0
        %v3082 = vadd.f32 %v3025, 0.0
        %v3083 = vadd.f32 %v3027, 0.0
        %v3084 = vadd.f32 %v3029, 0.0
        %v3085 = vadd.f32 %v3031, 0.0
        %v3086 = vadd.f32 %v3033, 0.0
        %v3087 = vadd.f32 %v3035, 0.0
        %v3088 = vadd.f32 %v3037, 0.0
        %v3089 = vadd.f32 %v3039, 0.0
        %v3090 = vadd.f32 %v3041, 0.0
        %v3091 = vadd.f32 %v3043, 0.0
        %v3092 = vadd.f32 %v3045, 0.0
        %v3093 = vadd.f32 %v3047, 0.0
        %v3094 = vadd.f32 %v3049, 0.0
        %v3095 = vadd.f32 %v3051, 0.0
        %v3096 = vadd.f32 %v3053, 0.0
        %v3097 = vadd.f32 %v3055, 0.0
        %v3098 = vadd.f32 %v3057, 0.0
        %v3099 = vadd.f32 %v3059, 0.0
        %v3100 = vadd.f32 %v3061, 0.0
        %v3101 = vadd.f32 %v3063, 0.0
        %v3102 = vadd.f32 %v3065, 0.0
        %v3103 = vadd.f32 %v3067, 0.0
        %v3104 = vadd.f32 %v3069, 0.0
        %v3105 = vadd.f32 %v3071, 0.0
        %v3106 = vadd.f32 %v3073, 0.0
        %v3107 = vadd.f32 %v3075, 0.0
        %v3109 = vsel %vm460, %v420, 0
        %v3112 = vsel %vm460, %v421, 0
        %v3115 = vsel %vm460, %v422, 0
        %v3118 = vsel %vm460, %v423, 0
        %v3121 = vsel %vm460, %v424, 0
        %v3124 = vsel %vm460, %v425, 0
        %v3127 = vsel %vm460, %v426, 0
        %v3130 = vsel %vm460, %v427, 0
        %v3133 = vsel %vm460, %v428, 0
        %v3136 = vsel %vm460, %v429, 0
        %v3139 = vsel %vm460, %v430, 0
        %v3142 = vsel %vm460, %v431, 0
        %v3145 = vsel %vm460, %v432, 0
        %v3148 = vsel %vm460, %v433, 0
        %v3151 = vsel %vm460, %v434, 0
        %v3154 = vsel %vm460, %v435, 0
        %v3157 = vsel %vm460, %v436, 0
        %v3160 = vsel %vm460, %v437, 0
        %v3163 = vsel %vm460, %v438, 0
        %v3166 = vsel %vm460, %v439, 0
        %v3169 = vsel %vm460, %v440, 0
        %v3172 = vsel %vm460, %v441, 0
        %v3175 = vsel %vm460, %v442, 0
        %v3178 = vsel %vm460, %v443, 0
        %v3181 = vsel %vm460, %v444, 0
        %v3184 = vsel %vm460, %v445, 0
        %v3187 = vsel %vm460, %v446, 0
        %v3190 = vsel %vm460, %v447, 0
        %v3193 = vsel %vm460, %v448, 0
        %v3196 = vsel %vm460, %v449, 0
        %v3199 = vsel %vm460, %v450, 0
        %v3202 = vsel %vm460, %v451, 0
        %3204 = vmatprep.subr.mxu0 0.0
        %3205 = vmatpush1.msra.mxu0 0.0
        %3206 = vmatprep.subr.mxu0 0.0
        %3207 = vmatpush1.msra.mxu0 0.0
        %3208 = vmatprep.subr.mxu0 0.0
        %3209 = vmatpush1.msra.mxu0 0.0
        %3210 = vmatprep.subr.mxu0 0.0
        %3211 = vmatpush1.msra.mxu0 0.0
        %3212 = vmatprep.subr.mxu0 0.0
        %3213 = vmatpush1.msra.mxu0 0.0
        %3214 = vmatprep.subr.mxu0 0.0
        %3215 = vmatpush1.msra.mxu0 0.0
        %3216 = vmatprep.subr.mxu0 0.0
        %3217 = vmatpush1.msra.mxu0 0.0
        %3218 = vmatprep.subr.mxu0 0.0
        %3219 = vmatpush1.msra.mxu0 0.0
        %3220 = vmatprep.subr.mxu0 0.0
        %3221 = vmatpush1.msra.mxu0 0.0
        %3222 = vmatprep.subr.mxu0 0.0
        %3223 = vmatpush1.msra.mxu0 0.0
        %3224 = vmatprep.subr.mxu0 0.0
        %3225 = vmatpush1.msra.mxu0 0.0
        %3226 = vmatprep.subr.mxu0 0.0
        %3227 = vmatpush1.msra.mxu0 0.0
        %3228 = vmatprep.subr.mxu0 0.0
        %3229 = vmatpush1.msra.mxu0 %v459
        %3230 = vmatprep.subr.mxu0 0.0
        %3231 = vmatpush1.msra.mxu0 %v458
        %3232 = vmatprep.subr.mxu0 0.0
        %3233 = vmatpush1.msra.mxu0 %v457
        %3234 = vmatprep.subr.mxu0 0.0
        %3235 = vmatpush1.msra.mxu0 %v456
        %3236 = vmatprep.subr.mxu0 0.0
        %3237 = vmatpush2.msra.mxu0 0.0
        %3238 = vmatprep.subr.mxu0 0.0
        %3239 = vmatpush2.msra.mxu0 0.0
        %3240 = vmatprep.subr.mxu0 0.0
        %3241 = vmatpush2.msra.mxu0 0.0
        %3242 = vmatprep.subr.mxu0 0.0
        %3243 = vmatpush2.msra.mxu0 0.0
        %3244 = vmatprep.subr.mxu0 0.0
        %3245 = vmatpush2.msra.mxu0 0.0
        %3246 = vmatprep.subr.mxu0 0.0
        %3247 = vmatpush2.msra.mxu0 0.0
        %3248 = vmatprep.subr.mxu0 0.0
        %3249 = vmatpush2.msra.mxu0 0.0
        %3250 = vmatprep.subr.mxu0 0.0
        %3251 = vmatpush2.msra.mxu0 0.0
        %3252 = vmatprep.subr.mxu0 0.0
        %3253 = vmatpush2.msra.mxu0 0.0
        %3254 = vmatprep.subr.mxu0 0.0
        %3255 = vmatpush2.msra.mxu0 0.0
        %3256 = vmatprep.subr.mxu0 0.0
        %3257 = vmatpush2.msra.mxu0 0.0
        %3258 = vmatprep.subr.mxu0 0.0
        %3259 = vmatpush2.msra.mxu0 0.0
        %3260 = vmatprep.subr.mxu0 0.0
        %3261 = vmatpush2.msra.mxu0 0.0
        %3262 = vmatprep.subr.mxu0 0.0
        %3263 = vmatpush2.msra.mxu0 0.0
        %3264 = vmatprep.subr.mxu0 0.0
        %3265 = vmatpush2.msra.mxu0 0.0
        %3266 = vmatprep.subr.mxu0 0.0
        %3267 = vmatpush2.msra.mxu0 0.0
        %3268 = vmatprep.mubr.f32.mxu0 0.0
        %3269 = vmatmul.mubr.f32.gmra.mxu0 %v3109
        %v3270 = vpop.f32.mrf.mxu0
        %v3271 = vadd.f32 0.0, %v3270
        %v3272 = vpop.f32.mrf.mxu0
        %3273 = vmatprep.mubr.f32.mxu0 0.0
        %3274 = vmatmul.mubr.f32.gmra.mxu0 %v3112
        %v3275 = vpop.f32.mrf.mxu0
        %v3276 = vadd.f32 0.0, %v3275
        %v3277 = vpop.f32.mrf.mxu0
        %3278 = vmatprep.mubr.f32.mxu0 0.0
        %3279 = vmatmul.mubr.f32.gmra.mxu0 %v3115
        %v3280 = vpop.f32.mrf.mxu0
        %v3281 = vadd.f32 0.0, %v3280
        %v3282 = vpop.f32.mrf.mxu0
        %3283 = vmatprep.mubr.f32.mxu0 0.0
        %3284 = vmatmul.mubr.f32.gmra.mxu0 %v3118
        %v3285 = vpop.f32.mrf.mxu0
        %v3286 = vadd.f32 0.0, %v3285
        %v3287 = vpop.f32.mrf.mxu0
        %3288 = vmatprep.mubr.f32.mxu0 0.0
        %3289 = vmatmul.mubr.f32.gmra.mxu0 %v3121
        %v3290 = vpop.f32.mrf.mxu0
        %v3291 = vadd.f32 0.0, %v3290
        %v3292 = vpop.f32.mrf.mxu0
        %3293 = vmatprep.mubr.f32.mxu0 0.0
        %3294 = vmatmul.mubr.f32.gmra.mxu0 %v3124
        %v3295 = vpop.f32.mrf.mxu0
        %v3296 = vadd.f32 0.0, %v3295
        %v3297 = vpop.f32.mrf.mxu0
        %3298 = vmatprep.mubr.f32.mxu0 0.0
        %3299 = vmatmul.mubr.f32.gmra.mxu0 %v3127
        %v3300 = vpop.f32.mrf.mxu0
        %v3301 = vadd.f32 0.0, %v3300
        %v3302 = vpop.f32.mrf.mxu0
        %3303 = vmatprep.mubr.f32.mxu0 0.0
        %3304 = vmatmul.mubr.f32.gmra.mxu0 %v3130
        %v3305 = vpop.f32.mrf.mxu0
        %v3306 = vadd.f32 0.0, %v3305
        %v3307 = vpop.f32.mrf.mxu0
        %3308 = vmatprep.mubr.f32.mxu0 0.0
        %3309 = vmatmul.mubr.f32.gmra.mxu0 %v3133
        %v3310 = vpop.f32.mrf.mxu0
        %v3311 = vadd.f32 0.0, %v3310
        %v3312 = vpop.f32.mrf.mxu0
        %3313 = vmatprep.mubr.f32.mxu0 0.0
        %3314 = vmatmul.mubr.f32.gmra.mxu0 %v3136
        %v3315 = vpop.f32.mrf.mxu0
        %v3316 = vadd.f32 0.0, %v3315
        %v3317 = vpop.f32.mrf.mxu0
        %3318 = vmatprep.mubr.f32.mxu0 0.0
        %3319 = vmatmul.mubr.f32.gmra.mxu0 %v3139
        %v3320 = vpop.f32.mrf.mxu0
        %v3321 = vadd.f32 0.0, %v3320
        %v3322 = vpop.f32.mrf.mxu0
        %3323 = vmatprep.mubr.f32.mxu0 0.0
        %3324 = vmatmul.mubr.f32.gmra.mxu0 %v3142
        %v3325 = vpop.f32.mrf.mxu0
        %v3326 = vadd.f32 0.0, %v3325
        %v3327 = vpop.f32.mrf.mxu0
        %3328 = vmatprep.mubr.f32.mxu0 0.0
        %3329 = vmatmul.mubr.f32.gmra.mxu0 %v3145
        %v3330 = vpop.f32.mrf.mxu0
        %v3331 = vadd.f32 0.0, %v3330
        %v3332 = vpop.f32.mrf.mxu0
        %3333 = vmatprep.mubr.f32.mxu0 0.0
        %3334 = vmatmul.mubr.f32.gmra.mxu0 %v3148
        %v3335 = vpop.f32.mrf.mxu0
        %v3336 = vadd.f32 0.0, %v3335
        %v3337 = vpop.f32.mrf.mxu0
        %3338 = vmatprep.mubr.f32.mxu0 0.0
        %3339 = vmatmul.mubr.f32.gmra.mxu0 %v3151
        %v3340 = vpop.f32.mrf.mxu0
        %v3341 = vadd.f32 0.0, %v3340
        %v3342 = vpop.f32.mrf.mxu0
        %3343 = vmatprep.mubr.f32.mxu0 0.0
        %3344 = vmatmul.mubr.f32.gmra.mxu0 %v3154
        %v3345 = vpop.f32.mrf.mxu0
        %v3346 = vadd.f32 0.0, %v3345
        %v3347 = vpop.f32.mrf.mxu0
        %3348 = vmatprep.mubr.f32.mxu0 0.0
        %3349 = vmatmul.mubr.f32.gmra.mxu0 %v3157
        %v3350 = vpop.f32.mrf.mxu0
        %v3351 = vadd.f32 0.0, %v3350
        %v3352 = vpop.f32.mrf.mxu0
        %3353 = vmatprep.mubr.f32.mxu0 0.0
        %3354 = vmatmul.mubr.f32.gmra.mxu0 %v3160
        %v3355 = vpop.f32.mrf.mxu0
        %v3356 = vadd.f32 0.0, %v3355
        %v3357 = vpop.f32.mrf.mxu0
        %3358 = vmatprep.mubr.f32.mxu0 0.0
        %3359 = vmatmul.mubr.f32.gmra.mxu0 %v3163
        %v3360 = vpop.f32.mrf.mxu0
        %v3361 = vadd.f32 0.0, %v3360
        %v3362 = vpop.f32.mrf.mxu0
        %3363 = vmatprep.mubr.f32.mxu0 0.0
        %3364 = vmatmul.mubr.f32.gmra.mxu0 %v3166
        %v3365 = vpop.f32.mrf.mxu0
        %v3366 = vadd.f32 0.0, %v3365
        %v3367 = vpop.f32.mrf.mxu0
        %3368 = vmatprep.mubr.f32.mxu0 0.0
        %3369 = vmatmul.mubr.f32.gmra.mxu0 %v3169
        %v3370 = vpop.f32.mrf.mxu0
        %v3371 = vadd.f32 0.0, %v3370
        %v3372 = vpop.f32.mrf.mxu0
        %3373 = vmatprep.mubr.f32.mxu0 0.0
        %3374 = vmatmul.mubr.f32.gmra.mxu0 %v3172
        %v3375 = vpop.f32.mrf.mxu0
        %v3376 = vadd.f32 0.0, %v3375
        %v3377 = vpop.f32.mrf.mxu0
        %3378 = vmatprep.mubr.f32.mxu0 0.0
        %3379 = vmatmul.mubr.f32.gmra.mxu0 %v3175
        %v3380 = vpop.f32.mrf.mxu0
        %v3381 = vadd.f32 0.0, %v3380
        %v3382 = vpop.f32.mrf.mxu0
        %3383 = vmatprep.mubr.f32.mxu0 0.0
        %3384 = vmatmul.mubr.f32.gmra.mxu0 %v3178
        %v3385 = vpop.f32.mrf.mxu0
        %v3386 = vadd.f32 0.0, %v3385
        %v3387 = vpop.f32.mrf.mxu0
        %3388 = vmatprep.mubr.f32.mxu0 0.0
        %3389 = vmatmul.mubr.f32.gmra.mxu0 %v3181
        %v3390 = vpop.f32.mrf.mxu0
        %v3391 = vadd.f32 0.0, %v3390
        %v3392 = vpop.f32.mrf.mxu0
        %3393 = vmatprep.mubr.f32.mxu0 0.0
        %3394 = vmatmul.mubr.f32.gmra.mxu0 %v3184
        %v3395 = vpop.f32.mrf.mxu0
        %v3396 = vadd.f32 0.0, %v3395
        %v3397 = vpop.f32.mrf.mxu0
        %3398 = vmatprep.mubr.f32.mxu0 0.0
        %3399 = vmatmul.mubr.f32.gmra.mxu0 %v3187
        %v3400 = vpop.f32.mrf.mxu0
        %v3401 = vadd.f32 0.0, %v3400
        %v3402 = vpop.f32.mrf.mxu0
        %3403 = vmatprep.mubr.f32.mxu0 0.0
        %3404 = vmatmul.mubr.f32.gmra.mxu0 %v3190
        %v3405 = vpop.f32.mrf.mxu0
        %v3406 = vadd.f32 0.0, %v3405
        %v3407 = vpop.f32.mrf.mxu0
        %3408 = vmatprep.mubr.f32.mxu0 0.0
        %3409 = vmatmul.mubr.f32.gmra.mxu0 %v3193
        %v3410 = vpop.f32.mrf.mxu0
        %v3411 = vadd.f32 0.0, %v3410
        %v3412 = vpop.f32.mrf.mxu0
        %3413 = vmatprep.mubr.f32.mxu0 0.0
        %3414 = vmatmul.mubr.f32.gmra.mxu0 %v3196
        %v3415 = vpop.f32.mrf.mxu0
        %v3416 = vadd.f32 0.0, %v3415
        %v3417 = vpop.f32.mrf.mxu0
        %3418 = vmatprep.mubr.f32.mxu0 0.0
        %3419 = vmatmul.mubr.f32.gmra.mxu0 %v3199
        %v3420 = vpop.f32.mrf.mxu0
        %v3421 = vadd.f32 0.0, %v3420
        %v3422 = vpop.f32.mrf.mxu0
        %3423 = vmatprep.mubr.f32.mxu0 0.0
        %3424 = vmatmul.mubr.f32.gmra.mxu0 %v3202
        %v3425 = vpop.f32.mrf.mxu0
        %v3426 = vadd.f32 0.0, %v3425
        %v3427 = vpop.f32.mrf.mxu0
        %3428 = vdwg.mxu0
        %v3429 = vmul.f32 %v3013, %v3271
        %v3430 = vmul.f32 %v3015, %v3276
        %v3431 = vmul.f32 %v3017, %v3281
        %v3432 = vmul.f32 %v3019, %v3286
        %v3433 = vmul.f32 %v3021, %v3291
        %v3434 = vmul.f32 %v3023, %v3296
        %v3435 = vmul.f32 %v3025, %v3301
        %v3436 = vmul.f32 %v3027, %v3306
        %v3437 = vmul.f32 %v3029, %v3311
        %v3438 = vmul.f32 %v3031, %v3316
        %v3439 = vmul.f32 %v3033, %v3321
        %v3440 = vmul.f32 %v3035, %v3326
        %v3441 = vmul.f32 %v3037, %v3331
        %v3442 = vmul.f32 %v3039, %v3336
        %v3443 = vmul.f32 %v3041, %v3341
        %v3444 = vmul.f32 %v3043, %v3346
        %v3445 = vmul.f32 %v3045, %v3351
        %v3446 = vmul.f32 %v3047, %v3356
        %v3447 = vmul.f32 %v3049, %v3361
        %v3448 = vmul.f32 %v3051, %v3366
        %v3449 = vmul.f32 %v3053, %v3371
        %v3450 = vmul.f32 %v3055, %v3376
        %v3451 = vmul.f32 %v3057, %v3381
        %v3452 = vmul.f32 %v3059, %v3386
        %v3453 = vmul.f32 %v3061, %v3391
        %v3454 = vmul.f32 %v3063, %v3396
        %v3455 = vmul.f32 %v3065, %v3401
        %v3456 = vmul.f32 %v3067, %v3406
        %v3457 = vmul.f32 %v3069, %v3411
        %v3458 = vmul.f32 %v3071, %v3416
        %v3459 = vmul.f32 %v3073, %v3421
        %v3460 = vmul.f32 %v3075, %v3426
        %v3461 = vadd.f32 %v3429, 0.0
        %v3462 = vadd.f32 %v3430, 0.0
        %v3463 = vadd.f32 %v3431, 0.0
        %v3464 = vadd.f32 %v3432, 0.0
        %v3465 = vadd.f32 %v3433, 0.0
        %v3466 = vadd.f32 %v3434, 0.0
        %v3467 = vadd.f32 %v3435, 0.0
        %v3468 = vadd.f32 %v3436, 0.0
        %v3469 = vadd.f32 %v3437, 0.0
        %v3470 = vadd.f32 %v3438, 0.0
        %v3471 = vadd.f32 %v3439, 0.0
        %v3472 = vadd.f32 %v3440, 0.0
        %v3473 = vadd.f32 %v3441, 0.0
        %v3474 = vadd.f32 %v3442, 0.0
        %v3475 = vadd.f32 %v3443, 0.0
        %v3476 = vadd.f32 %v3444, 0.0
        %v3477 = vadd.f32 %v3445, 0.0
        %v3478 = vadd.f32 %v3446, 0.0
        %v3479 = vadd.f32 %v3447, 0.0
        %v3480 = vadd.f32 %v3448, 0.0
        %v3481 = vadd.f32 %v3449, 0.0
        %v3482 = vadd.f32 %v3450, 0.0
        %v3483 = vadd.f32 %v3451, 0.0
        %v3484 = vadd.f32 %v3452, 0.0
        %v3485 = vadd.f32 %v3453, 0.0
        %v3486 = vadd.f32 %v3454, 0.0
        %v3487 = vadd.f32 %v3455, 0.0
        %v3488 = vadd.f32 %v3456, 0.0
        %v3489 = vadd.f32 %v3457, 0.0
        %v3490 = vadd.f32 %v3458, 0.0
        %v3491 = vadd.f32 %v3459, 0.0
        %v3492 = vadd.f32 %v3460, 0.0
        %v3493 = vsub.f32 %v1560, %v2948
        %v3494 = vsub.f32 %v1565, %v2949
        %v3495 = vsub.f32 %v1570, %v2950
        %v3496 = vsub.f32 %v1575, %v2951
        %v3497 = vsub.f32 %v1580, %v2952
        %v3498 = vsub.f32 %v1585, %v2953
        %v3499 = vsub.f32 %v1590, %v2954
        %v3500 = vsub.f32 %v1595, %v2955
        %v3501 = vsub.f32 %v1600, %v2956
        %v3502 = vsub.f32 %v1605, %v2957
        %v3503 = vsub.f32 %v1610, %v2958
        %v3504 = vsub.f32 %v1615, %v2959
        %v3505 = vsub.f32 %v1620, %v2960
        %v3506 = vsub.f32 %v1625, %v2961
        %v3507 = vsub.f32 %v1630, %v2962
        %v3508 = vsub.f32 %v1635, %v2963
        %v3509 = vsub.f32 %v1640, %v2964
        %v3510 = vsub.f32 %v1645, %v2965
        %v3511 = vsub.f32 %v1650, %v2966
        %v3512 = vsub.f32 %v1655, %v2967
        %v3513 = vsub.f32 %v1660, %v2968
        %v3514 = vsub.f32 %v1665, %v2969
        %v3515 = vsub.f32 %v1670, %v2970
        %v3516 = vsub.f32 %v1675, %v2971
        %v3517 = vsub.f32 %v1680, %v2972
        %v3518 = vsub.f32 %v1685, %v2973
        %v3519 = vsub.f32 %v1690, %v2974
        %v3520 = vsub.f32 %v1695, %v2975
        %v3521 = vsub.f32 %v1700, %v2976
        %v3522 = vsub.f32 %v1705, %v2977
        %v3523 = vsub.f32 %v1710, %v2978
        %v3524 = vsub.f32 %v1715, %v2979
        %v3525 = vmul.f32 %v3493, 1.442695
        %v3526 = vpow.pop %v3525
        %v3527 = vmul.f32 %v3494, 1.442695
        %v3528 = vpow.pop %v3527
        %v3529 = vmul.f32 %v3495, 1.442695
        %v3530 = vpow.pop %v3529
        %v3531 = vmul.f32 %v3496, 1.442695
        %v3532 = vpow.pop %v3531
        %v3533 = vmul.f32 %v3497, 1.442695
        %v3534 = vpow.pop %v3533
        %v3535 = vmul.f32 %v3498, 1.442695
        %v3536 = vpow.pop %v3535
        %v3537 = vmul.f32 %v3499, 1.442695
        %v3538 = vpow.pop %v3537
        %v3539 = vmul.f32 %v3500, 1.442695
        %v3540 = vpow.pop %v3539
        %v3541 = vmul.f32 %v3501, 1.442695
        %v3542 = vpow.pop %v3541
        %v3543 = vmul.f32 %v3502, 1.442695
        %v3544 = vpow.pop %v3543
        %v3545 = vmul.f32 %v3503, 1.442695
        %v3546 = vpow.pop %v3545
        %v3547 = vmul.f32 %v3504, 1.442695
        %v3548 = vpow.pop %v3547
        %v3549 = vmul.f32 %v3505, 1.442695
        %v3550 = vpow.pop %v3549
        %v3551 = vmul.f32 %v3506, 1.442695
        %v3552 = vpow.pop %v3551
        %v3553 = vmul.f32 %v3507, 1.442695
        %v3554 = vpow.pop %v3553
        %v3555 = vmul.f32 %v3508, 1.442695
        %v3556 = vpow.pop %v3555
        %v3557 = vmul.f32 %v3509, 1.442695
        %v3558 = vpow.pop %v3557
        %v3559 = vmul.f32 %v3510, 1.442695
        %v3560 = vpow.pop %v3559
        %v3561 = vmul.f32 %v3511, 1.442695
        %v3562 = vpow.pop %v3561
        %v3563 = vmul.f32 %v3512, 1.442695
        %v3564 = vpow.pop %v3563
        %v3565 = vmul.f32 %v3513, 1.442695
        %v3566 = vpow.pop %v3565
        %v3567 = vmul.f32 %v3514, 1.442695
        %v3568 = vpow.pop %v3567
        %v3569 = vmul.f32 %v3515, 1.442695
        %v3570 = vpow.pop %v3569
        %v3571 = vmul.f32 %v3516, 1.442695
        %v3572 = vpow.pop %v3571
        %v3573 = vmul.f32 %v3517, 1.442695
        %v3574 = vpow.pop %v3573
        %v3575 = vmul.f32 %v3518, 1.442695
        %v3576 = vpow.pop %v3575
        %v3577 = vmul.f32 %v3519, 1.442695
        %v3578 = vpow.pop %v3577
        %v3579 = vmul.f32 %v3520, 1.442695
        %v3580 = vpow.pop %v3579
        %v3581 = vmul.f32 %v3521, 1.442695
        %v3582 = vpow.pop %v3581
        %v3583 = vmul.f32 %v3522, 1.442695
        %v3584 = vpow.pop %v3583
        %v3585 = vmul.f32 %v3523, 1.442695
        %v3586 = vpow.pop %v3585
        %v3587 = vmul.f32 %v3524, 1.442695
        %v3588 = vpow.pop %v3587
        %v3589 = vadd.f32 %v3076, %v3526
        %v3590 = vadd.f32 %v3077, %v3528
        %v3591 = vadd.f32 %v3078, %v3530
        %v3592 = vadd.f32 %v3079, %v3532
        %v3593 = vadd.f32 %v3080, %v3534
        %v3594 = vadd.f32 %v3081, %v3536
        %v3595 = vadd.f32 %v3082, %v3538
        %v3596 = vadd.f32 %v3083, %v3540
        %v3597 = vadd.f32 %v3084, %v3542
        %v3598 = vadd.f32 %v3085, %v3544
        %v3599 = vadd.f32 %v3086, %v3546
        %v3600 = vadd.f32 %v3087, %v3548
        %v3601 = vadd.f32 %v3088, %v3550
        %v3602 = vadd.f32 %v3089, %v3552
        %v3603 = vadd.f32 %v3090, %v3554
        %v3604 = vadd.f32 %v3091, %v3556
        %v3605 = vadd.f32 %v3092, %v3558
        %v3606 = vadd.f32 %v3093, %v3560
        %v3607 = vadd.f32 %v3094, %v3562
        %v3608 = vadd.f32 %v3095, %v3564
        %v3609 = vadd.f32 %v3096, %v3566
        %v3610 = vadd.f32 %v3097, %v3568
        %v3611 = vadd.f32 %v3098, %v3570
        %v3612 = vadd.f32 %v3099, %v3572
        %v3613 = vadd.f32 %v3100, %v3574
        %v3614 = vadd.f32 %v3101, %v3576
        %v3615 = vadd.f32 %v3102, %v3578
        %v3616 = vadd.f32 %v3103, %v3580
        %v3617 = vadd.f32 %v3104, %v3582
        %v3618 = vadd.f32 %v3105, %v3584
        %v3619 = vadd.f32 %v3106, %v3586
        %v3620 = vadd.f32 %v3107, %v3588
        %3621 = vmatprep.subr.mxu0 0.0
        %3622 = vmatpush1.msra.mxu0 0.0
        %3623 = vmatprep.subr.mxu0 0.0
        %3624 = vmatpush1.msra.mxu0 0.0
        %3625 = vmatprep.subr.mxu0 0.0
        %3626 = vmatpush1.msra.mxu0 0.0
        %3627 = vmatprep.subr.mxu0 0.0
        %3628 = vmatpush1.msra.mxu0 0.0
        %3629 = vmatprep.subr.mxu0 0.0
        %3630 = vmatpush1.msra.mxu0 0.0
        %3631 = vmatprep.subr.mxu0 0.0
        %3632 = vmatpush1.msra.mxu0 0.0
        %3633 = vmatprep.subr.mxu0 0.0
        %3634 = vmatpush1.msra.mxu0 0.0
        %3635 = vmatprep.subr.mxu0 0.0
        %3636 = vmatpush1.msra.mxu0 0.0
        %3637 = vmatprep.subr.mxu0 0.0
        %3638 = vmatpush1.msra.mxu0 0.0
        %3639 = vmatprep.subr.mxu0 0.0
        %3640 = vmatpush1.msra.mxu0 0.0
        %3641 = vmatprep.subr.mxu0 0.0
        %3642 = vmatpush1.msra.mxu0 0.0
        %3643 = vmatprep.subr.mxu0 0.0
        %3644 = vmatpush1.msra.mxu0 0.0
        %3645 = vmatprep.subr.mxu0 0.0
        %3646 = vmatpush1.msra.mxu0 %v1139
        %3647 = vmatprep.subr.mxu0 0.0
        %3648 = vmatpush1.msra.mxu0 %v1138
        %3649 = vmatprep.subr.mxu0 0.0
        %3650 = vmatpush1.msra.mxu0 %v1137
        %3651 = vmatprep.subr.mxu0 0.0
        %3652 = vmatpush1.msra.mxu0 %v1136
        %3653 = vmatprep.subr.mxu0 0.0
        %3654 = vmatpush2.msra.mxu0 0.0
        %3655 = vmatprep.subr.mxu0 0.0
        %3656 = vmatpush2.msra.mxu0 0.0
        %3657 = vmatprep.subr.mxu0 0.0
        %3658 = vmatpush2.msra.mxu0 0.0
        %3659 = vmatprep.subr.mxu0 0.0
        %3660 = vmatpush2.msra.mxu0 0.0
        %3661 = vmatprep.subr.mxu0 0.0
        %3662 = vmatpush2.msra.mxu0 0.0
        %3663 = vmatprep.subr.mxu0 0.0
        %3664 = vmatpush2.msra.mxu0 0.0
        %3665 = vmatprep.subr.mxu0 0.0
        %3666 = vmatpush2.msra.mxu0 0.0
        %3667 = vmatprep.subr.mxu0 0.0
        %3668 = vmatpush2.msra.mxu0 0.0
        %3669 = vmatprep.subr.mxu0 0.0
        %3670 = vmatpush2.msra.mxu0 0.0
        %3671 = vmatprep.subr.mxu0 0.0
        %3672 = vmatpush2.msra.mxu0 0.0
        %3673 = vmatprep.subr.mxu0 0.0
        %3674 = vmatpush2.msra.mxu0 0.0
        %3675 = vmatprep.subr.mxu0 0.0
        %3676 = vmatpush2.msra.mxu0 0.0
        %3677 = vmatprep.subr.mxu0 0.0
        %3678 = vmatpush2.msra.mxu0 0.0
        %3679 = vmatprep.subr.mxu0 0.0
        %3680 = vmatpush2.msra.mxu0 0.0
        %3681 = vmatprep.subr.mxu0 0.0
        %3682 = vmatpush2.msra.mxu0 0.0
        %3683 = vmatprep.subr.mxu0 0.0
        %3684 = vmatpush2.msra.mxu0 0.0
        %3685 = vmatprep.mubr.f32.mxu0 0.0
        %3686 = vmatmul.mubr.f32.gmra.mxu0 %v3109
        %v3687 = vpop.f32.mrf.mxu0
        %v3688 = vadd.f32 0.0, %v3687
        %v3689 = vpop.f32.mrf.mxu0
        %3690 = vmatprep.mubr.f32.mxu0 0.0
        %3691 = vmatmul.mubr.f32.gmra.mxu0 %v3112
        %v3692 = vpop.f32.mrf.mxu0
        %v3693 = vadd.f32 0.0, %v3692
        %v3694 = vpop.f32.mrf.mxu0
        %3695 = vmatprep.mubr.f32.mxu0 0.0
        %3696 = vmatmul.mubr.f32.gmra.mxu0 %v3115
        %v3697 = vpop.f32.mrf.mxu0
        %v3698 = vadd.f32 0.0, %v3697
        %v3699 = vpop.f32.mrf.mxu0
        %3700 = vmatprep.mubr.f32.mxu0 0.0
        %3701 = vmatmul.mubr.f32.gmra.mxu0 %v3118
        %v3702 = vpop.f32.mrf.mxu0
        %v3703 = vadd.f32 0.0, %v3702
        %v3704 = vpop.f32.mrf.mxu0
        %3705 = vmatprep.mubr.f32.mxu0 0.0
        %3706 = vmatmul.mubr.f32.gmra.mxu0 %v3121
        %v3707 = vpop.f32.mrf.mxu0
        %v3708 = vadd.f32 0.0, %v3707
        %v3709 = vpop.f32.mrf.mxu0
        %3710 = vmatprep.mubr.f32.mxu0 0.0
        %3711 = vmatmul.mubr.f32.gmra.mxu0 %v3124
        %v3712 = vpop.f32.mrf.mxu0
        %v3713 = vadd.f32 0.0, %v3712
        %v3714 = vpop.f32.mrf.mxu0
        %3715 = vmatprep.mubr.f32.mxu0 0.0
        %3716 = vmatmul.mubr.f32.gmra.mxu0 %v3127
        %v3717 = vpop.f32.mrf.mxu0
        %v3718 = vadd.f32 0.0, %v3717
        %v3719 = vpop.f32.mrf.mxu0
        %3720 = vmatprep.mubr.f32.mxu0 0.0
        %3721 = vmatmul.mubr.f32.gmra.mxu0 %v3130
        %v3722 = vpop.f32.mrf.mxu0
        %v3723 = vadd.f32 0.0, %v3722
        %v3724 = vpop.f32.mrf.mxu0
        %3725 = vmatprep.mubr.f32.mxu0 0.0
        %3726 = vmatmul.mubr.f32.gmra.mxu0 %v3133
        %v3727 = vpop.f32.mrf.mxu0
        %v3728 = vadd.f32 0.0, %v3727
        %v3729 = vpop.f32.mrf.mxu0
        %3730 = vmatprep.mubr.f32.mxu0 0.0
        %3731 = vmatmul.mubr.f32.gmra.mxu0 %v3136
        %v3732 = vpop.f32.mrf.mxu0
        %v3733 = vadd.f32 0.0, %v3732
        %v3734 = vpop.f32.mrf.mxu0
        %3735 = vmatprep.mubr.f32.mxu0 0.0
        %3736 = vmatmul.mubr.f32.gmra.mxu0 %v3139
        %v3737 = vpop.f32.mrf.mxu0
        %v3738 = vadd.f32 0.0, %v3737
        %v3739 = vpop.f32.mrf.mxu0
        %3740 = vmatprep.mubr.f32.mxu0 0.0
        %3741 = vmatmul.mubr.f32.gmra.mxu0 %v3142
        %v3742 = vpop.f32.mrf.mxu0
        %v3743 = vadd.f32 0.0, %v3742
        %v3744 = vpop.f32.mrf.mxu0
        %3745 = vmatprep.mubr.f32.mxu0 0.0
        %3746 = vmatmul.mubr.f32.gmra.mxu0 %v3145
        %v3747 = vpop.f32.mrf.mxu0
        %v3748 = vadd.f32 0.0, %v3747
        %v3749 = vpop.f32.mrf.mxu0
        %3750 = vmatprep.mubr.f32.mxu0 0.0
        %3751 = vmatmul.mubr.f32.gmra.mxu0 %v3148
        %v3752 = vpop.f32.mrf.mxu0
        %v3753 = vadd.f32 0.0, %v3752
        %v3754 = vpop.f32.mrf.mxu0
        %3755 = vmatprep.mubr.f32.mxu0 0.0
        %3756 = vmatmul.mubr.f32.gmra.mxu0 %v3151
        %v3757 = vpop.f32.mrf.mxu0
        %v3758 = vadd.f32 0.0, %v3757
        %v3759 = vpop.f32.mrf.mxu0
        %3760 = vmatprep.mubr.f32.mxu0 0.0
        %3761 = vmatmul.mubr.f32.gmra.mxu0 %v3154
        %v3762 = vpop.f32.mrf.mxu0
        %v3763 = vadd.f32 0.0, %v3762
        %v3764 = vpop.f32.mrf.mxu0
        %3765 = vmatprep.mubr.f32.mxu0 0.0
        %3766 = vmatmul.mubr.f32.gmra.mxu0 %v3157
        %v3767 = vpop.f32.mrf.mxu0
        %v3768 = vadd.f32 0.0, %v3767
        %v3769 = vpop.f32.mrf.mxu0
        %3770 = vmatprep.mubr.f32.mxu0 0.0
        %3771 = vmatmul.mubr.f32.gmra.mxu0 %v3160
        %v3772 = vpop.f32.mrf.mxu0
        %v3773 = vadd.f32 0.0, %v3772
        %v3774 = vpop.f32.mrf.mxu0
        %3775 = vmatprep.mubr.f32.mxu0 0.0
        %3776 = vmatmul.mubr.f32.gmra.mxu0 %v3163
        %v3777 = vpop.f32.mrf.mxu0
        %v3778 = vadd.f32 0.0, %v3777
        %v3779 = vpop.f32.mrf.mxu0
        %3780 = vmatprep.mubr.f32.mxu0 0.0
        %3781 = vmatmul.mubr.f32.gmra.mxu0 %v3166
        %v3782 = vpop.f32.mrf.mxu0
        %v3783 = vadd.f32 0.0, %v3782
        %v3784 = vpop.f32.mrf.mxu0
        %3785 = vmatprep.mubr.f32.mxu0 0.0
        %3786 = vmatmul.mubr.f32.gmra.mxu0 %v3169
        %v3787 = vpop.f32.mrf.mxu0
        %v3788 = vadd.f32 0.0, %v3787
        %v3789 = vpop.f32.mrf.mxu0
        %3790 = vmatprep.mubr.f32.mxu0 0.0
        %3791 = vmatmul.mubr.f32.gmra.mxu0 %v3172
        %v3792 = vpop.f32.mrf.mxu0
        %v3793 = vadd.f32 0.0, %v3792
        %v3794 = vpop.f32.mrf.mxu0
        %3795 = vmatprep.mubr.f32.mxu0 0.0
        %3796 = vmatmul.mubr.f32.gmra.mxu0 %v3175
        %v3797 = vpop.f32.mrf.mxu0
        %v3798 = vadd.f32 0.0, %v3797
        %v3799 = vpop.f32.mrf.mxu0
        %3800 = vmatprep.mubr.f32.mxu0 0.0
        %3801 = vmatmul.mubr.f32.gmra.mxu0 %v3178
        %v3802 = vpop.f32.mrf.mxu0
        %v3803 = vadd.f32 0.0, %v3802
        %v3804 = vpop.f32.mrf.mxu0
        %3805 = vmatprep.mubr.f32.mxu0 0.0
        %3806 = vmatmul.mubr.f32.gmra.mxu0 %v3181
        %v3807 = vpop.f32.mrf.mxu0
        %v3808 = vadd.f32 0.0, %v3807
        %v3809 = vpop.f32.mrf.mxu0
        %3810 = vmatprep.mubr.f32.mxu0 0.0
        %3811 = vmatmul.mubr.f32.gmra.mxu0 %v3184
        %v3812 = vpop.f32.mrf.mxu0
        %v3813 = vadd.f32 0.0, %v3812
        %v3814 = vpop.f32.mrf.mxu0
        %3815 = vmatprep.mubr.f32.mxu0 0.0
        %3816 = vmatmul.mubr.f32.gmra.mxu0 %v3187
        %v3817 = vpop.f32.mrf.mxu0
        %v3818 = vadd.f32 0.0, %v3817
        %v3819 = vpop.f32.mrf.mxu0
        %3820 = vmatprep.mubr.f32.mxu0 0.0
        %3821 = vmatmul.mubr.f32.gmra.mxu0 %v3190
        %v3822 = vpop.f32.mrf.mxu0
        %v3823 = vadd.f32 0.0, %v3822
        %v3824 = vpop.f32.mrf.mxu0
        %3825 = vmatprep.mubr.f32.mxu0 0.0
        %3826 = vmatmul.mubr.f32.gmra.mxu0 %v3193
        %v3827 = vpop.f32.mrf.mxu0
        %v3828 = vadd.f32 0.0, %v3827
        %v3829 = vpop.f32.mrf.mxu0
        %3830 = vmatprep.mubr.f32.mxu0 0.0
        %3831 = vmatmul.mubr.f32.gmra.mxu0 %v3196
        %v3832 = vpop.f32.mrf.mxu0
        %v3833 = vadd.f32 0.0, %v3832
        %v3834 = vpop.f32.mrf.mxu0
        %3835 = vmatprep.mubr.f32.mxu0 0.0
        %3836 = vmatmul.mubr.f32.gmra.mxu0 %v3199
        %v3837 = vpop.f32.mrf.mxu0
        %v3838 = vadd.f32 0.0, %v3837
        %v3839 = vpop.f32.mrf.mxu0
        %3840 = vmatprep.mubr.f32.mxu0 0.0
        %3841 = vmatmul.mubr.f32.gmra.mxu0 %v3202
        %v3842 = vpop.f32.mrf.mxu0
        %v3843 = vadd.f32 0.0, %v3842
        %v3844 = vpop.f32.mrf.mxu0
        %3845 = vdwg.mxu0
        %v3846 = vmul.f32 %v3526, %v3688
        %v3847 = vmul.f32 %v3528, %v3693
        %v3848 = vmul.f32 %v3530, %v3698
        %v3849 = vmul.f32 %v3532, %v3703
        %v3850 = vmul.f32 %v3534, %v3708
        %v3851 = vmul.f32 %v3536, %v3713
        %v3852 = vmul.f32 %v3538, %v3718
        %v3853 = vmul.f32 %v3540, %v3723
        %v3854 = vmul.f32 %v3542, %v3728
        %v3855 = vmul.f32 %v3544, %v3733
        %v3856 = vmul.f32 %v3546, %v3738
        %v3857 = vmul.f32 %v3548, %v3743
        %v3858 = vmul.f32 %v3550, %v3748
        %v3859 = vmul.f32 %v3552, %v3753
        %v3860 = vmul.f32 %v3554, %v3758
        %v3861 = vmul.f32 %v3556, %v3763
        %v3862 = vmul.f32 %v3558, %v3768
        %v3863 = vmul.f32 %v3560, %v3773
        %v3864 = vmul.f32 %v3562, %v3778
        %v3865 = vmul.f32 %v3564, %v3783
        %v3866 = vmul.f32 %v3566, %v3788
        %v3867 = vmul.f32 %v3568, %v3793
        %v3868 = vmul.f32 %v3570, %v3798
        %v3869 = vmul.f32 %v3572, %v3803
        %v3870 = vmul.f32 %v3574, %v3808
        %v3871 = vmul.f32 %v3576, %v3813
        %v3872 = vmul.f32 %v3578, %v3818
        %v3873 = vmul.f32 %v3580, %v3823
        %v3874 = vmul.f32 %v3582, %v3828
        %v3875 = vmul.f32 %v3584, %v3833
        %v3876 = vmul.f32 %v3586, %v3838
        %v3877 = vmul.f32 %v3588, %v3843
        %v3878 = vadd.f32 %v3461, %v3846
        %v3879 = vadd.f32 %v3462, %v3847
        %v3880 = vadd.f32 %v3463, %v3848
        %v3881 = vadd.f32 %v3464, %v3849
        %v3882 = vadd.f32 %v3465, %v3850
        %v3883 = vadd.f32 %v3466, %v3851
        %v3884 = vadd.f32 %v3467, %v3852
        %v3885 = vadd.f32 %v3468, %v3853
        %v3886 = vadd.f32 %v3469, %v3854
        %v3887 = vadd.f32 %v3470, %v3855
        %v3888 = vadd.f32 %v3471, %v3856
        %v3889 = vadd.f32 %v3472, %v3857
        %v3890 = vadd.f32 %v3473, %v3858
        %v3891 = vadd.f32 %v3474, %v3859
        %v3892 = vadd.f32 %v3475, %v3860
        %v3893 = vadd.f32 %v3476, %v3861
        %v3894 = vadd.f32 %v3477, %v3862
        %v3895 = vadd.f32 %v3478, %v3863
        %v3896 = vadd.f32 %v3479, %v3864
        %v3897 = vadd.f32 %v3480, %v3865
        %v3898 = vadd.f32 %v3481, %v3866
        %v3899 = vadd.f32 %v3482, %v3867
        %v3900 = vadd.f32 %v3483, %v3868
        %v3901 = vadd.f32 %v3484, %v3869
        %v3902 = vadd.f32 %v3485, %v3870
        %v3903 = vadd.f32 %v3486, %v3871
        %v3904 = vadd.f32 %v3487, %v3872
        %v3905 = vadd.f32 %v3488, %v3873
        %v3906 = vadd.f32 %v3489, %v3874
        %v3907 = vadd.f32 %v3490, %v3875
        %v3908 = vadd.f32 %v3491, %v3876
        %v3909 = vadd.f32 %v3492, %v3877
        %v3910 = vsub.f32 %v2143, %v2948
        %v3911 = vsub.f32 %v2148, %v2949
        %v3912 = vsub.f32 %v2153, %v2950
        %v3913 = vsub.f32 %v2158, %v2951
        %v3914 = vsub.f32 %v2163, %v2952
        %v3915 = vsub.f32 %v2168, %v2953
        %v3916 = vsub.f32 %v2173, %v2954
        %v3917 = vsub.f32 %v2178, %v2955
        %v3918 = vsub.f32 %v2183, %v2956
        %v3919 = vsub.f32 %v2188, %v2957
        %v3920 = vsub.f32 %v2193, %v2958
        %v3921 = vsub.f32 %v2198, %v2959
        %v3922 = vsub.f32 %v2203, %v2960
        %v3923 = vsub.f32 %v2208, %v2961
        %v3924 = vsub.f32 %v2213, %v2962
        %v3925 = vsub.f32 %v2218, %v2963
        %v3926 = vsub.f32 %v2223, %v2964
        %v3927 = vsub.f32 %v2228, %v2965
        %v3928 = vsub.f32 %v2233, %v2966
        %v3929 = vsub.f32 %v2238, %v2967
        %v3930 = vsub.f32 %v2243, %v2968
        %v3931 = vsub.f32 %v2248, %v2969
        %v3932 = vsub.f32 %v2253, %v2970
        %v3933 = vsub.f32 %v2258, %v2971
        %v3934 = vsub.f32 %v2263, %v2972
        %v3935 = vsub.f32 %v2268, %v2973
        %v3936 = vsub.f32 %v2273, %v2974
        %v3937 = vsub.f32 %v2278, %v2975
        %v3938 = vsub.f32 %v2283, %v2976
        %v3939 = vsub.f32 %v2288, %v2977
        %v3940 = vsub.f32 %v2293, %v2978
        %v3941 = vsub.f32 %v2298, %v2979
        %v3942 = vmul.f32 %v3910, 1.442695
        %v3943 = vpow.pop %v3942
        %v3944 = vmul.f32 %v3911, 1.442695
        %v3945 = vpow.pop %v3944
        %v3946 = vmul.f32 %v3912, 1.442695
        %v3947 = vpow.pop %v3946
        %v3948 = vmul.f32 %v3913, 1.442695
        %v3949 = vpow.pop %v3948
        %v3950 = vmul.f32 %v3914, 1.442695
        %v3951 = vpow.pop %v3950
        %v3952 = vmul.f32 %v3915, 1.442695
        %v3953 = vpow.pop %v3952
        %v3954 = vmul.f32 %v3916, 1.442695
        %v3955 = vpow.pop %v3954
        %v3956 = vmul.f32 %v3917, 1.442695
        %v3957 = vpow.pop %v3956
        %v3958 = vmul.f32 %v3918, 1.442695
        %v3959 = vpow.pop %v3958
        %v3960 = vmul.f32 %v3919, 1.442695
        %v3961 = vpow.pop %v3960
        %v3962 = vmul.f32 %v3920, 1.442695
        %v3963 = vpow.pop %v3962
        %v3964 = vmul.f32 %v3921, 1.442695
        %v3965 = vpow.pop %v3964
        %v3966 = vmul.f32 %v3922, 1.442695
        %v3967 = vpow.pop %v3966
        %v3968 = vmul.f32 %v3923, 1.442695
        %v3969 = vpow.pop %v3968
        %v3970 = vmul.f32 %v3924, 1.442695
        %v3971 = vpow.pop %v3970
        %v3972 = vmul.f32 %v3925, 1.442695
        %v3973 = vpow.pop %v3972
        %v3974 = vmul.f32 %v3926, 1.442695
        %v3975 = vpow.pop %v3974
        %v3976 = vmul.f32 %v3927, 1.442695
        %v3977 = vpow.pop %v3976
        %v3978 = vmul.f32 %v3928, 1.442695
        %v3979 = vpow.pop %v3978
        %v3980 = vmul.f32 %v3929, 1.442695
        %v3981 = vpow.pop %v3980
        %v3982 = vmul.f32 %v3930, 1.442695
        %v3983 = vpow.pop %v3982
        %v3984 = vmul.f32 %v3931, 1.442695
        %v3985 = vpow.pop %v3984
        %v3986 = vmul.f32 %v3932, 1.442695
        %v3987 = vpow.pop %v3986
        %v3988 = vmul.f32 %v3933, 1.442695
        %v3989 = vpow.pop %v3988
        %v3990 = vmul.f32 %v3934, 1.442695
        %v3991 = vpow.pop %v3990
        %v3992 = vmul.f32 %v3935, 1.442695
        %v3993 = vpow.pop %v3992
        %v3994 = vmul.f32 %v3936, 1.442695
        %v3995 = vpow.pop %v3994
        %v3996 = vmul.f32 %v3937, 1.442695
        %v3997 = vpow.pop %v3996
        %v3998 = vmul.f32 %v3938, 1.442695
        %v3999 = vpow.pop %v3998
        %v4000 = vmul.f32 %v3939, 1.442695
        %v4001 = vpow.pop %v4000
        %v4002 = vmul.f32 %v3940, 1.442695
        %v4003 = vpow.pop %v4002
        %v4004 = vmul.f32 %v3941, 1.442695
        %v4005 = vpow.pop %v4004
        %v4006 = vadd.f32 %v3589, %v3943
        %v4007 = vadd.f32 %v3590, %v3945
        %v4008 = vadd.f32 %v3591, %v3947
        %v4009 = vadd.f32 %v3592, %v3949
        %v4010 = vadd.f32 %v3593, %v3951
        %v4011 = vadd.f32 %v3594, %v3953
        %v4012 = vadd.f32 %v3595, %v3955
        %v4013 = vadd.f32 %v3596, %v3957
        %v4014 = vadd.f32 %v3597, %v3959
        %v4015 = vadd.f32 %v3598, %v3961
        %v4016 = vadd.f32 %v3599, %v3963
        %v4017 = vadd.f32 %v3600, %v3965
        %v4018 = vadd.f32 %v3601, %v3967
        %v4019 = vadd.f32 %v3602, %v3969
        %v4020 = vadd.f32 %v3603, %v3971
        %v4021 = vadd.f32 %v3604, %v3973
        %v4022 = vadd.f32 %v3605, %v3975
        %v4023 = vadd.f32 %v3606, %v3977
        %v4024 = vadd.f32 %v3607, %v3979
        %v4025 = vadd.f32 %v3608, %v3981
        %v4026 = vadd.f32 %v3609, %v3983
        %v4027 = vadd.f32 %v3610, %v3985
        %v4028 = vadd.f32 %v3611, %v3987
        %v4029 = vadd.f32 %v3612, %v3989
        %v4030 = vadd.f32 %v3613, %v3991
        %v4031 = vadd.f32 %v3614, %v3993
        %v4032 = vadd.f32 %v3615, %v3995
        %v4033 = vadd.f32 %v3616, %v3997
        %v4034 = vadd.f32 %v3617, %v3999
        %v4035 = vadd.f32 %v3618, %v4001
        %v4036 = vadd.f32 %v3619, %v4003
        %v4037 = vadd.f32 %v3620, %v4005
        %4038 = vmatprep.subr.mxu0 0.0
        %4039 = vmatpush1.msra.mxu0 0.0
        %4040 = vmatprep.subr.mxu0 0.0
        %4041 = vmatpush1.msra.mxu0 0.0
        %4042 = vmatprep.subr.mxu0 0.0
        %4043 = vmatpush1.msra.mxu0 0.0
        %4044 = vmatprep.subr.mxu0 0.0
        %4045 = vmatpush1.msra.mxu0 0.0
        %4046 = vmatprep.subr.mxu0 0.0
        %4047 = vmatpush1.msra.mxu0 0.0
        %4048 = vmatprep.subr.mxu0 0.0
        %4049 = vmatpush1.msra.mxu0 0.0
        %4050 = vmatprep.subr.mxu0 0.0
        %4051 = vmatpush1.msra.mxu0 0.0
        %4052 = vmatprep.subr.mxu0 0.0
        %4053 = vmatpush1.msra.mxu0 0.0
        %4054 = vmatprep.subr.mxu0 0.0
        %4055 = vmatpush1.msra.mxu0 0.0
        %4056 = vmatprep.subr.mxu0 0.0
        %4057 = vmatpush1.msra.mxu0 0.0
        %4058 = vmatprep.subr.mxu0 0.0
        %4059 = vmatpush1.msra.mxu0 0.0
        %4060 = vmatprep.subr.mxu0 0.0
        %4061 = vmatpush1.msra.mxu0 0.0
        %4062 = vmatprep.subr.mxu0 0.0
        %4063 = vmatpush1.msra.mxu0 %v1722
        %4064 = vmatprep.subr.mxu0 0.0
        %4065 = vmatpush1.msra.mxu0 %v1721
        %4066 = vmatprep.subr.mxu0 0.0
        %4067 = vmatpush1.msra.mxu0 %v1720
        %4068 = vmatprep.subr.mxu0 0.0
        %4069 = vmatpush1.msra.mxu0 %v1719
        %4070 = vmatprep.subr.mxu0 0.0
        %4071 = vmatpush2.msra.mxu0 0.0
        %4072 = vmatprep.subr.mxu0 0.0
        %4073 = vmatpush2.msra.mxu0 0.0
        %4074 = vmatprep.subr.mxu0 0.0
        %4075 = vmatpush2.msra.mxu0 0.0
        %4076 = vmatprep.subr.mxu0 0.0
        %4077 = vmatpush2.msra.mxu0 0.0
        %4078 = vmatprep.subr.mxu0 0.0
        %4079 = vmatpush2.msra.mxu0 0.0
        %4080 = vmatprep.subr.mxu0 0.0
        %4081 = vmatpush2.msra.mxu0 0.0
        %4082 = vmatprep.subr.mxu0 0.0
        %4083 = vmatpush2.msra.mxu0 0.0
        %4084 = vmatprep.subr.mxu0 0.0
        %4085 = vmatpush2.msra.mxu0 0.0
        %4086 = vmatprep.subr.mxu0 0.0
        %4087 = vmatpush2.msra.mxu0 0.0
        %4088 = vmatprep.subr.mxu0 0.0
        %4089 = vmatpush2.msra.mxu0 0.0
        %4090 = vmatprep.subr.mxu0 0.0
        %4091 = vmatpush2.msra.mxu0 0.0
        %4092 = vmatprep.subr.mxu0 0.0
        %4093 = vmatpush2.msra.mxu0 0.0
        %4094 = vmatprep.subr.mxu0 0.0
        %4095 = vmatpush2.msra.mxu0 0.0
        %4096 = vmatprep.subr.mxu0 0.0
        %4097 = vmatpush2.msra.mxu0 0.0
        %4098 = vmatprep.subr.mxu0 0.0
        %4099 = vmatpush2.msra.mxu0 0.0
        %4100 = vmatprep.subr.mxu0 0.0
        %4101 = vmatpush2.msra.mxu0 0.0
        %4102 = vmatprep.mubr.f32.mxu0 0.0
        %4103 = vmatmul.mubr.f32.gmra.mxu0 %v3109
        %v4104 = vpop.f32.mrf.mxu0
        %v4105 = vadd.f32 0.0, %v4104
        %v4106 = vpop.f32.mrf.mxu0
        %4107 = vmatprep.mubr.f32.mxu0 0.0
        %4108 = vmatmul.mubr.f32.gmra.mxu0 %v3112
        %v4109 = vpop.f32.mrf.mxu0
        %v4110 = vadd.f32 0.0, %v4109
        %v4111 = vpop.f32.mrf.mxu0
        %4112 = vmatprep.mubr.f32.mxu0 0.0
        %4113 = vmatmul.mubr.f32.gmra.mxu0 %v3115
        %v4114 = vpop.f32.mrf.mxu0
        %v4115 = vadd.f32 0.0, %v4114
        %v4116 = vpop.f32.mrf.mxu0
        %4117 = vmatprep.mubr.f32.mxu0 0.0
        %4118 = vmatmul.mubr.f32.gmra.mxu0 %v3118
        %v4119 = vpop.f32.mrf.mxu0
        %v4120 = vadd.f32 0.0, %v4119
        %v4121 = vpop.f32.mrf.mxu0
        %4122 = vmatprep.mubr.f32.mxu0 0.0
        %4123 = vmatmul.mubr.f32.gmra.mxu0 %v3121
        %v4124 = vpop.f32.mrf.mxu0
        %v4125 = vadd.f32 0.0, %v4124
        %v4126 = vpop.f32.mrf.mxu0
        %4127 = vmatprep.mubr.f32.mxu0 0.0
        %4128 = vmatmul.mubr.f32.gmra.mxu0 %v3124
        %v4129 = vpop.f32.mrf.mxu0
        %v4130 = vadd.f32 0.0, %v4129
        %v4131 = vpop.f32.mrf.mxu0
        %4132 = vmatprep.mubr.f32.mxu0 0.0
        %4133 = vmatmul.mubr.f32.gmra.mxu0 %v3127
        %v4134 = vpop.f32.mrf.mxu0
        %v4135 = vadd.f32 0.0, %v4134
        %v4136 = vpop.f32.mrf.mxu0
        %4137 = vmatprep.mubr.f32.mxu0 0.0
        %4138 = vmatmul.mubr.f32.gmra.mxu0 %v3130
        %v4139 = vpop.f32.mrf.mxu0
        %v4140 = vadd.f32 0.0, %v4139
        %v4141 = vpop.f32.mrf.mxu0
        %4142 = vmatprep.mubr.f32.mxu0 0.0
        %4143 = vmatmul.mubr.f32.gmra.mxu0 %v3133
        %v4144 = vpop.f32.mrf.mxu0
        %v4145 = vadd.f32 0.0, %v4144
        %v4146 = vpop.f32.mrf.mxu0
        %4147 = vmatprep.mubr.f32.mxu0 0.0
        %4148 = vmatmul.mubr.f32.gmra.mxu0 %v3136
        %v4149 = vpop.f32.mrf.mxu0
        %v4150 = vadd.f32 0.0, %v4149
        %v4151 = vpop.f32.mrf.mxu0
        %4152 = vmatprep.mubr.f32.mxu0 0.0
        %4153 = vmatmul.mubr.f32.gmra.mxu0 %v3139
        %v4154 = vpop.f32.mrf.mxu0
        %v4155 = vadd.f32 0.0, %v4154
        %v4156 = vpop.f32.mrf.mxu0
        %4157 = vmatprep.mubr.f32.mxu0 0.0
        %4158 = vmatmul.mubr.f32.gmra.mxu0 %v3142
        %v4159 = vpop.f32.mrf.mxu0
        %v4160 = vadd.f32 0.0, %v4159
        %v4161 = vpop.f32.mrf.mxu0
        %4162 = vmatprep.mubr.f32.mxu0 0.0
        %4163 = vmatmul.mubr.f32.gmra.mxu0 %v3145
        %v4164 = vpop.f32.mrf.mxu0
        %v4165 = vadd.f32 0.0, %v4164
        %v4166 = vpop.f32.mrf.mxu0
        %4167 = vmatprep.mubr.f32.mxu0 0.0
        %4168 = vmatmul.mubr.f32.gmra.mxu0 %v3148
        %v4169 = vpop.f32.mrf.mxu0
        %v4170 = vadd.f32 0.0, %v4169
        %v4171 = vpop.f32.mrf.mxu0
        %4172 = vmatprep.mubr.f32.mxu0 0.0
        %4173 = vmatmul.mubr.f32.gmra.mxu0 %v3151
        %v4174 = vpop.f32.mrf.mxu0
        %v4175 = vadd.f32 0.0, %v4174
        %v4176 = vpop.f32.mrf.mxu0
        %4177 = vmatprep.mubr.f32.mxu0 0.0
        %4178 = vmatmul.mubr.f32.gmra.mxu0 %v3154
        %v4179 = vpop.f32.mrf.mxu0
        %v4180 = vadd.f32 0.0, %v4179
        %v4181 = vpop.f32.mrf.mxu0
        %4182 = vmatprep.mubr.f32.mxu0 0.0
        %4183 = vmatmul.mubr.f32.gmra.mxu0 %v3157
        %v4184 = vpop.f32.mrf.mxu0
        %v4185 = vadd.f32 0.0, %v4184
        %v4186 = vpop.f32.mrf.mxu0
        %4187 = vmatprep.mubr.f32.mxu0 0.0
        %4188 = vmatmul.mubr.f32.gmra.mxu0 %v3160
        %v4189 = vpop.f32.mrf.mxu0
        %v4190 = vadd.f32 0.0, %v4189
        %v4191 = vpop.f32.mrf.mxu0
        %4192 = vmatprep.mubr.f32.mxu0 0.0
        %4193 = vmatmul.mubr.f32.gmra.mxu0 %v3163
        %v4194 = vpop.f32.mrf.mxu0
        %v4195 = vadd.f32 0.0, %v4194
        %v4196 = vpop.f32.mrf.mxu0
        %4197 = vmatprep.mubr.f32.mxu0 0.0
        %4198 = vmatmul.mubr.f32.gmra.mxu0 %v3166
        %v4199 = vpop.f32.mrf.mxu0
        %v4200 = vadd.f32 0.0, %v4199
        %v4201 = vpop.f32.mrf.mxu0
        %4202 = vmatprep.mubr.f32.mxu0 0.0
        %4203 = vmatmul.mubr.f32.gmra.mxu0 %v3169
        %v4204 = vpop.f32.mrf.mxu0
        %v4205 = vadd.f32 0.0, %v4204
        %v4206 = vpop.f32.mrf.mxu0
        %4207 = vmatprep.mubr.f32.mxu0 0.0
        %4208 = vmatmul.mubr.f32.gmra.mxu0 %v3172
        %v4209 = vpop.f32.mrf.mxu0
        %v4210 = vadd.f32 0.0, %v4209
        %v4211 = vpop.f32.mrf.mxu0
        %4212 = vmatprep.mubr.f32.mxu0 0.0
        %4213 = vmatmul.mubr.f32.gmra.mxu0 %v3175
        %v4214 = vpop.f32.mrf.mxu0
        %v4215 = vadd.f32 0.0, %v4214
        %v4216 = vpop.f32.mrf.mxu0
        %4217 = vmatprep.mubr.f32.mxu0 0.0
        %4218 = vmatmul.mubr.f32.gmra.mxu0 %v3178
        %v4219 = vpop.f32.mrf.mxu0
        %v4220 = vadd.f32 0.0, %v4219
        %v4221 = vpop.f32.mrf.mxu0
        %4222 = vmatprep.mubr.f32.mxu0 0.0
        %4223 = vmatmul.mubr.f32.gmra.mxu0 %v3181
        %v4224 = vpop.f32.mrf.mxu0
        %v4225 = vadd.f32 0.0, %v4224
        %v4226 = vpop.f32.mrf.mxu0
        %4227 = vmatprep.mubr.f32.mxu0 0.0
        %4228 = vmatmul.mubr.f32.gmra.mxu0 %v3184
        %v4229 = vpop.f32.mrf.mxu0
        %v4230 = vadd.f32 0.0, %v4229
        %v4231 = vpop.f32.mrf.mxu0
        %4232 = vmatprep.mubr.f32.mxu0 0.0
        %4233 = vmatmul.mubr.f32.gmra.mxu0 %v3187
        %v4234 = vpop.f32.mrf.mxu0
        %v4235 = vadd.f32 0.0, %v4234
        %v4236 = vpop.f32.mrf.mxu0
        %4237 = vmatprep.mubr.f32.mxu0 0.0
        %4238 = vmatmul.mubr.f32.gmra.mxu0 %v3190
        %v4239 = vpop.f32.mrf.mxu0
        %v4240 = vadd.f32 0.0, %v4239
        %v4241 = vpop.f32.mrf.mxu0
        %4242 = vmatprep.mubr.f32.mxu0 0.0
        %4243 = vmatmul.mubr.f32.gmra.mxu0 %v3193
        %v4244 = vpop.f32.mrf.mxu0
        %v4245 = vadd.f32 0.0, %v4244
        %v4246 = vpop.f32.mrf.mxu0
        %4247 = vmatprep.mubr.f32.mxu0 0.0
        %4248 = vmatmul.mubr.f32.gmra.mxu0 %v3196
        %v4249 = vpop.f32.mrf.mxu0
        %v4250 = vadd.f32 0.0, %v4249
        %v4251 = vpop.f32.mrf.mxu0
        %4252 = vmatprep.mubr.f32.mxu0 0.0
        %4253 = vmatmul.mubr.f32.gmra.mxu0 %v3199
        %v4254 = vpop.f32.mrf.mxu0
        %v4255 = vadd.f32 0.0, %v4254
        %v4256 = vpop.f32.mrf.mxu0
        %4257 = vmatprep.mubr.f32.mxu0 0.0
        %4258 = vmatmul.mubr.f32.gmra.mxu0 %v3202
        %v4259 = vpop.f32.mrf.mxu0
        %v4260 = vadd.f32 0.0, %v4259
        %v4261 = vpop.f32.mrf.mxu0
        %4262 = vdwg.mxu0
        %v4263 = vmul.f32 %v3943, %v4105
        %v4264 = vmul.f32 %v3945, %v4110
        %v4265 = vmul.f32 %v3947, %v4115
        %v4266 = vmul.f32 %v3949, %v4120
        %v4267 = vmul.f32 %v3951, %v4125
        %v4268 = vmul.f32 %v3953, %v4130
        %v4269 = vmul.f32 %v3955, %v4135
        %v4270 = vmul.f32 %v3957, %v4140
        %v4271 = vmul.f32 %v3959, %v4145
        %v4272 = vmul.f32 %v3961, %v4150
        %v4273 = vmul.f32 %v3963, %v4155
        %v4274 = vmul.f32 %v3965, %v4160
        %v4275 = vmul.f32 %v3967, %v4165
        %v4276 = vmul.f32 %v3969, %v4170
        %v4277 = vmul.f32 %v3971, %v4175
        %v4278 = vmul.f32 %v3973, %v4180
        %v4279 = vmul.f32 %v3975, %v4185
        %v4280 = vmul.f32 %v3977, %v4190
        %v4281 = vmul.f32 %v3979, %v4195
        %v4282 = vmul.f32 %v3981, %v4200
        %v4283 = vmul.f32 %v3983, %v4205
        %v4284 = vmul.f32 %v3985, %v4210
        %v4285 = vmul.f32 %v3987, %v4215
        %v4286 = vmul.f32 %v3989, %v4220
        %v4287 = vmul.f32 %v3991, %v4225
        %v4288 = vmul.f32 %v3993, %v4230
        %v4289 = vmul.f32 %v3995, %v4235
        %v4290 = vmul.f32 %v3997, %v4240
        %v4291 = vmul.f32 %v3999, %v4245
        %v4292 = vmul.f32 %v4001, %v4250
        %v4293 = vmul.f32 %v4003, %v4255
        %v4294 = vmul.f32 %v4005, %v4260
        %v4295 = vadd.f32 %v3878, %v4263
        %v4296 = vadd.f32 %v3879, %v4264
        %v4297 = vadd.f32 %v3880, %v4265
        %v4298 = vadd.f32 %v3881, %v4266
        %v4299 = vadd.f32 %v3882, %v4267
        %v4300 = vadd.f32 %v3883, %v4268
        %v4301 = vadd.f32 %v3884, %v4269
        %v4302 = vadd.f32 %v3885, %v4270
        %v4303 = vadd.f32 %v3886, %v4271
        %v4304 = vadd.f32 %v3887, %v4272
        %v4305 = vadd.f32 %v3888, %v4273
        %v4306 = vadd.f32 %v3889, %v4274
        %v4307 = vadd.f32 %v3890, %v4275
        %v4308 = vadd.f32 %v3891, %v4276
        %v4309 = vadd.f32 %v3892, %v4277
        %v4310 = vadd.f32 %v3893, %v4278
        %v4311 = vadd.f32 %v3894, %v4279
        %v4312 = vadd.f32 %v3895, %v4280
        %v4313 = vadd.f32 %v3896, %v4281
        %v4314 = vadd.f32 %v3897, %v4282
        %v4315 = vadd.f32 %v3898, %v4283
        %v4316 = vadd.f32 %v3899, %v4284
        %v4317 = vadd.f32 %v3900, %v4285
        %v4318 = vadd.f32 %v3901, %v4286
        %v4319 = vadd.f32 %v3902, %v4287
        %v4320 = vadd.f32 %v3903, %v4288
        %v4321 = vadd.f32 %v3904, %v4289
        %v4322 = vadd.f32 %v3905, %v4290
        %v4323 = vadd.f32 %v3906, %v4291
        %v4324 = vadd.f32 %v3907, %v4292
        %v4325 = vadd.f32 %v3908, %v4293
        %v4326 = vadd.f32 %v3909, %v4294
        %v4327 = vsub.f32 %v2726, %v2948
        %v4328 = vsub.f32 %v2731, %v2949
        %v4329 = vsub.f32 %v2736, %v2950
        %v4330 = vsub.f32 %v2741, %v2951
        %v4331 = vsub.f32 %v2746, %v2952
        %v4332 = vsub.f32 %v2751, %v2953
        %v4333 = vsub.f32 %v2756, %v2954
        %v4334 = vsub.f32 %v2761, %v2955
        %v4335 = vsub.f32 %v2766, %v2956
        %v4336 = vsub.f32 %v2771, %v2957
        %v4337 = vsub.f32 %v2776, %v2958
        %v4338 = vsub.f32 %v2781, %v2959
        %v4339 = vsub.f32 %v2786, %v2960
        %v4340 = vsub.f32 %v2791, %v2961
        %v4341 = vsub.f32 %v2796, %v2962
        %v4342 = vsub.f32 %v2801, %v2963
        %v4343 = vsub.f32 %v2806, %v2964
        %v4344 = vsub.f32 %v2811, %v2965
        %v4345 = vsub.f32 %v2816, %v2966
        %v4346 = vsub.f32 %v2821, %v2967
        %v4347 = vsub.f32 %v2826, %v2968
        %v4348 = vsub.f32 %v2831, %v2969
        %v4349 = vsub.f32 %v2836, %v2970
        %v4350 = vsub.f32 %v2841, %v2971
        %v4351 = vsub.f32 %v2846, %v2972
        %v4352 = vsub.f32 %v2851, %v2973
        %v4353 = vsub.f32 %v2856, %v2974
        %v4354 = vsub.f32 %v2861, %v2975
        %v4355 = vsub.f32 %v2866, %v2976
        %v4356 = vsub.f32 %v2871, %v2977
        %v4357 = vsub.f32 %v2876, %v2978
        %v4358 = vsub.f32 %v2881, %v2979
        %v4359 = vmul.f32 %v4327, 1.442695
        %v4360 = vpow.pop %v4359
        %v4361 = vmul.f32 %v4328, 1.442695
        %v4362 = vpow.pop %v4361
        %v4363 = vmul.f32 %v4329, 1.442695
        %v4364 = vpow.pop %v4363
        %v4365 = vmul.f32 %v4330, 1.442695
        %v4366 = vpow.pop %v4365
        %v4367 = vmul.f32 %v4331, 1.442695
        %v4368 = vpow.pop %v4367
        %v4369 = vmul.f32 %v4332, 1.442695
        %v4370 = vpow.pop %v4369
        %v4371 = vmul.f32 %v4333, 1.442695
        %v4372 = vpow.pop %v4371
        %v4373 = vmul.f32 %v4334, 1.442695
        %v4374 = vpow.pop %v4373
        %v4375 = vmul.f32 %v4335, 1.442695
        %v4376 = vpow.pop %v4375
        %v4377 = vmul.f32 %v4336, 1.442695
        %v4378 = vpow.pop %v4377
        %v4379 = vmul.f32 %v4337, 1.442695
        %v4380 = vpow.pop %v4379
        %v4381 = vmul.f32 %v4338, 1.442695
        %v4382 = vpow.pop %v4381
        %v4383 = vmul.f32 %v4339, 1.442695
        %v4384 = vpow.pop %v4383
        %v4385 = vmul.f32 %v4340, 1.442695
        %v4386 = vpow.pop %v4385
        %v4387 = vmul.f32 %v4341, 1.442695
        %v4388 = vpow.pop %v4387
        %v4389 = vmul.f32 %v4342, 1.442695
        %v4390 = vpow.pop %v4389
        %v4391 = vmul.f32 %v4343, 1.442695
        %v4392 = vpow.pop %v4391
        %v4393 = vmul.f32 %v4344, 1.442695
        %v4394 = vpow.pop %v4393
        %v4395 = vmul.f32 %v4345, 1.442695
        %v4396 = vpow.pop %v4395
        %v4397 = vmul.f32 %v4346, 1.442695
        %v4398 = vpow.pop %v4397
        %v4399 = vmul.f32 %v4347, 1.442695
        %v4400 = vpow.pop %v4399
        %v4401 = vmul.f32 %v4348, 1.442695
        %v4402 = vpow.pop %v4401
        %v4403 = vmul.f32 %v4349, 1.442695
        %v4404 = vpow.pop %v4403
        %v4405 = vmul.f32 %v4350, 1.442695
        %v4406 = vpow.pop %v4405
        %v4407 = vmul.f32 %v4351, 1.442695
        %v4408 = vpow.pop %v4407
        %v4409 = vmul.f32 %v4352, 1.442695
        %v4410 = vpow.pop %v4409
        %v4411 = vmul.f32 %v4353, 1.442695
        %v4412 = vpow.pop %v4411
        %v4413 = vmul.f32 %v4354, 1.442695
        %v4414 = vpow.pop %v4413
        %v4415 = vmul.f32 %v4355, 1.442695
        %v4416 = vpow.pop %v4415
        %v4417 = vmul.f32 %v4356, 1.442695
        %v4418 = vpow.pop %v4417
        %v4419 = vmul.f32 %v4357, 1.442695
        %v4420 = vpow.pop %v4419
        %v4421 = vmul.f32 %v4358, 1.442695
        %v4422 = vpow.pop %v4421
        %v4423 = vadd.f32 %v4006, %v4360
        %v4424 = vadd.f32 %v4007, %v4362
        %v4425 = vadd.f32 %v4008, %v4364
        %v4426 = vadd.f32 %v4009, %v4366
        %v4427 = vadd.f32 %v4010, %v4368
        %v4428 = vadd.f32 %v4011, %v4370
        %v4429 = vadd.f32 %v4012, %v4372
        %v4430 = vadd.f32 %v4013, %v4374
        %v4431 = vadd.f32 %v4014, %v4376
        %v4432 = vadd.f32 %v4015, %v4378
        %v4433 = vadd.f32 %v4016, %v4380
        %v4434 = vadd.f32 %v4017, %v4382
        %v4435 = vadd.f32 %v4018, %v4384
        %v4436 = vadd.f32 %v4019, %v4386
        %v4437 = vadd.f32 %v4020, %v4388
        %v4438 = vadd.f32 %v4021, %v4390
        %v4439 = vadd.f32 %v4022, %v4392
        %v4440 = vadd.f32 %v4023, %v4394
        %v4441 = vadd.f32 %v4024, %v4396
        %v4442 = vadd.f32 %v4025, %v4398
        %v4443 = vadd.f32 %v4026, %v4400
        %v4444 = vadd.f32 %v4027, %v4402
        %v4445 = vadd.f32 %v4028, %v4404
        %v4446 = vadd.f32 %v4029, %v4406
        %v4447 = vadd.f32 %v4030, %v4408
        %v4448 = vadd.f32 %v4031, %v4410
        %v4449 = vadd.f32 %v4032, %v4412
        %v4450 = vadd.f32 %v4033, %v4414
        %v4451 = vadd.f32 %v4034, %v4416
        %v4452 = vadd.f32 %v4035, %v4418
        %v4453 = vadd.f32 %v4036, %v4420
        %v4454 = vadd.f32 %v4037, %v4422
        %4455 = vmatprep.subr.mxu0 0.0
        %4456 = vmatpush1.msra.mxu0 0.0
        %4457 = vmatprep.subr.mxu0 0.0
        %4458 = vmatpush1.msra.mxu0 0.0
        %4459 = vmatprep.subr.mxu0 0.0
        %4460 = vmatpush1.msra.mxu0 0.0
        %4461 = vmatprep.subr.mxu0 0.0
        %4462 = vmatpush1.msra.mxu0 0.0
        %4463 = vmatprep.subr.mxu0 0.0
        %4464 = vmatpush1.msra.mxu0 0.0
        %4465 = vmatprep.subr.mxu0 0.0
        %4466 = vmatpush1.msra.mxu0 0.0
        %4467 = vmatprep.subr.mxu0 0.0
        %4468 = vmatpush1.msra.mxu0 0.0
        %4469 = vmatprep.subr.mxu0 0.0
        %4470 = vmatpush1.msra.mxu0 0.0
        %4471 = vmatprep.subr.mxu0 0.0
        %4472 = vmatpush1.msra.mxu0 0.0
        %4473 = vmatprep.subr.mxu0 0.0
        %4474 = vmatpush1.msra.mxu0 0.0
        %4475 = vmatprep.subr.mxu0 0.0
        %4476 = vmatpush1.msra.mxu0 0.0
        %4477 = vmatprep.subr.mxu0 0.0
        %4478 = vmatpush1.msra.mxu0 0.0
        %4479 = vmatprep.subr.mxu0 0.0
        %4480 = vmatpush1.msra.mxu0 %v2305
        %4481 = vmatprep.subr.mxu0 0.0
        %4482 = vmatpush1.msra.mxu0 %v2304
        %4483 = vmatprep.subr.mxu0 0.0
        %4484 = vmatpush1.msra.mxu0 %v2303
        %4485 = vmatprep.subr.mxu0 0.0
        %4486 = vmatpush1.msra.mxu0 %v2302
        %4487 = vmatprep.subr.mxu0 0.0
        %4488 = vmatpush2.msra.mxu0 0.0
        %4489 = vmatprep.subr.mxu0 0.0
        %4490 = vmatpush2.msra.mxu0 0.0
        %4491 = vmatprep.subr.mxu0 0.0
        %4492 = vmatpush2.msra.mxu0 0.0
        %4493 = vmatprep.subr.mxu0 0.0
        %4494 = vmatpush2.msra.mxu0 0.0
        %4495 = vmatprep.subr.mxu0 0.0
        %4496 = vmatpush2.msra.mxu0 0.0
        %4497 = vmatprep.subr.mxu0 0.0
        %4498 = vmatpush2.msra.mxu0 0.0
        %4499 = vmatprep.subr.mxu0 0.0
        %4500 = vmatpush2.msra.mxu0 0.0
        %4501 = vmatprep.subr.mxu0 0.0
        %4502 = vmatpush2.msra.mxu0 0.0
        %4503 = vmatprep.subr.mxu0 0.0
        %4504 = vmatpush2.msra.mxu0 0.0
        %4505 = vmatprep.subr.mxu0 0.0
        %4506 = vmatpush2.msra.mxu0 0.0
        %4507 = vmatprep.subr.mxu0 0.0
        %4508 = vmatpush2.msra.mxu0 0.0
        %4509 = vmatprep.subr.mxu0 0.0
        %4510 = vmatpush2.msra.mxu0 0.0
        %4511 = vmatprep.subr.mxu0 0.0
        %4512 = vmatpush2.msra.mxu0 0.0
        %4513 = vmatprep.subr.mxu0 0.0
        %4514 = vmatpush2.msra.mxu0 0.0
        %4515 = vmatprep.subr.mxu0 0.0
        %4516 = vmatpush2.msra.mxu0 0.0
        %4517 = vmatprep.subr.mxu0 0.0
        %4518 = vmatpush2.msra.mxu0 0.0
        %4519 = vmatprep.mubr.f32.mxu0 0.0
        %4520 = vmatmul.mubr.f32.gmra.mxu0 %v3109
        %v4521 = vpop.f32.mrf.mxu0
        %v4522 = vadd.f32 0.0, %v4521
        %v4523 = vpop.f32.mrf.mxu0
        %4524 = vmatprep.mubr.f32.mxu0 0.0
        %4525 = vmatmul.mubr.f32.gmra.mxu0 %v3112
        %v4526 = vpop.f32.mrf.mxu0
        %v4527 = vadd.f32 0.0, %v4526
        %v4528 = vpop.f32.mrf.mxu0
        %4529 = vmatprep.mubr.f32.mxu0 0.0
        %4530 = vmatmul.mubr.f32.gmra.mxu0 %v3115
        %v4531 = vpop.f32.mrf.mxu0
        %v4532 = vadd.f32 0.0, %v4531
        %v4533 = vpop.f32.mrf.mxu0
        %4534 = vmatprep.mubr.f32.mxu0 0.0
        %4535 = vmatmul.mubr.f32.gmra.mxu0 %v3118
        %v4536 = vpop.f32.mrf.mxu0
        %v4537 = vadd.f32 0.0, %v4536
        %v4538 = vpop.f32.mrf.mxu0
        %4539 = vmatprep.mubr.f32.mxu0 0.0
        %4540 = vmatmul.mubr.f32.gmra.mxu0 %v3121
        %v4541 = vpop.f32.mrf.mxu0
        %v4542 = vadd.f32 0.0, %v4541
        %v4543 = vpop.f32.mrf.mxu0
        %4544 = vmatprep.mubr.f32.mxu0 0.0
        %4545 = vmatmul.mubr.f32.gmra.mxu0 %v3124
        %v4546 = vpop.f32.mrf.mxu0
        %v4547 = vadd.f32 0.0, %v4546
        %v4548 = vpop.f32.mrf.mxu0
        %4549 = vmatprep.mubr.f32.mxu0 0.0
        %4550 = vmatmul.mubr.f32.gmra.mxu0 %v3127
        %v4551 = vpop.f32.mrf.mxu0
        %v4552 = vadd.f32 0.0, %v4551
        %v4553 = vpop.f32.mrf.mxu0
        %4554 = vmatprep.mubr.f32.mxu0 0.0
        %4555 = vmatmul.mubr.f32.gmra.mxu0 %v3130
        %v4556 = vpop.f32.mrf.mxu0
        %v4557 = vadd.f32 0.0, %v4556
        %v4558 = vpop.f32.mrf.mxu0
        %4559 = vmatprep.mubr.f32.mxu0 0.0
        %4560 = vmatmul.mubr.f32.gmra.mxu0 %v3133
        %v4561 = vpop.f32.mrf.mxu0
        %v4562 = vadd.f32 0.0, %v4561
        %v4563 = vpop.f32.mrf.mxu0
        %4564 = vmatprep.mubr.f32.mxu0 0.0
        %4565 = vmatmul.mubr.f32.gmra.mxu0 %v3136
        %v4566 = vpop.f32.mrf.mxu0
        %v4567 = vadd.f32 0.0, %v4566
        %v4568 = vpop.f32.mrf.mxu0
        %4569 = vmatprep.mubr.f32.mxu0 0.0
        %4570 = vmatmul.mubr.f32.gmra.mxu0 %v3139
        %v4571 = vpop.f32.mrf.mxu0
        %v4572 = vadd.f32 0.0, %v4571
        %v4573 = vpop.f32.mrf.mxu0
        %4574 = vmatprep.mubr.f32.mxu0 0.0
        %4575 = vmatmul.mubr.f32.gmra.mxu0 %v3142
        %v4576 = vpop.f32.mrf.mxu0
        %v4577 = vadd.f32 0.0, %v4576
        %v4578 = vpop.f32.mrf.mxu0
        %4579 = vmatprep.mubr.f32.mxu0 0.0
        %4580 = vmatmul.mubr.f32.gmra.mxu0 %v3145
        %v4581 = vpop.f32.mrf.mxu0
        %v4582 = vadd.f32 0.0, %v4581
        %v4583 = vpop.f32.mrf.mxu0
        %4584 = vmatprep.mubr.f32.mxu0 0.0
        %4585 = vmatmul.mubr.f32.gmra.mxu0 %v3148
        %v4586 = vpop.f32.mrf.mxu0
        %v4587 = vadd.f32 0.0, %v4586
        %v4588 = vpop.f32.mrf.mxu0
        %4589 = vmatprep.mubr.f32.mxu0 0.0
        %4590 = vmatmul.mubr.f32.gmra.mxu0 %v3151
        %v4591 = vpop.f32.mrf.mxu0
        %v4592 = vadd.f32 0.0, %v4591
        %v4593 = vpop.f32.mrf.mxu0
        %4594 = vmatprep.mubr.f32.mxu0 0.0
        %4595 = vmatmul.mubr.f32.gmra.mxu0 %v3154
        %v4596 = vpop.f32.mrf.mxu0
        %v4597 = vadd.f32 0.0, %v4596
        %v4598 = vpop.f32.mrf.mxu0
        %4599 = vmatprep.mubr.f32.mxu0 0.0
        %4600 = vmatmul.mubr.f32.gmra.mxu0 %v3157
        %v4601 = vpop.f32.mrf.mxu0
        %v4602 = vadd.f32 0.0, %v4601
        %v4603 = vpop.f32.mrf.mxu0
        %4604 = vmatprep.mubr.f32.mxu0 0.0
        %4605 = vmatmul.mubr.f32.gmra.mxu0 %v3160
        %v4606 = vpop.f32.mrf.mxu0
        %v4607 = vadd.f32 0.0, %v4606
        %v4608 = vpop.f32.mrf.mxu0
        %4609 = vmatprep.mubr.f32.mxu0 0.0
        %4610 = vmatmul.mubr.f32.gmra.mxu0 %v3163
        %v4611 = vpop.f32.mrf.mxu0
        %v4612 = vadd.f32 0.0, %v4611
        %v4613 = vpop.f32.mrf.mxu0
        %4614 = vmatprep.mubr.f32.mxu0 0.0
        %4615 = vmatmul.mubr.f32.gmra.mxu0 %v3166
        %v4616 = vpop.f32.mrf.mxu0
        %v4617 = vadd.f32 0.0, %v4616
        %v4618 = vpop.f32.mrf.mxu0
        %4619 = vmatprep.mubr.f32.mxu0 0.0
        %4620 = vmatmul.mubr.f32.gmra.mxu0 %v3169
        %v4621 = vpop.f32.mrf.mxu0
        %v4622 = vadd.f32 0.0, %v4621
        %v4623 = vpop.f32.mrf.mxu0
        %4624 = vmatprep.mubr.f32.mxu0 0.0
        %4625 = vmatmul.mubr.f32.gmra.mxu0 %v3172
        %v4626 = vpop.f32.mrf.mxu0
        %v4627 = vadd.f32 0.0, %v4626
        %v4628 = vpop.f32.mrf.mxu0
        %4629 = vmatprep.mubr.f32.mxu0 0.0
        %4630 = vmatmul.mubr.f32.gmra.mxu0 %v3175
        %v4631 = vpop.f32.mrf.mxu0
        %v4632 = vadd.f32 0.0, %v4631
        %v4633 = vpop.f32.mrf.mxu0
        %4634 = vmatprep.mubr.f32.mxu0 0.0
        %4635 = vmatmul.mubr.f32.gmra.mxu0 %v3178
        %v4636 = vpop.f32.mrf.mxu0
        %v4637 = vadd.f32 0.0, %v4636
        %v4638 = vpop.f32.mrf.mxu0
        %4639 = vmatprep.mubr.f32.mxu0 0.0
        %4640 = vmatmul.mubr.f32.gmra.mxu0 %v3181
        %v4641 = vpop.f32.mrf.mxu0
        %v4642 = vadd.f32 0.0, %v4641
        %v4643 = vpop.f32.mrf.mxu0
        %4644 = vmatprep.mubr.f32.mxu0 0.0
        %4645 = vmatmul.mubr.f32.gmra.mxu0 %v3184
        %v4646 = vpop.f32.mrf.mxu0
        %v4647 = vadd.f32 0.0, %v4646
        %v4648 = vpop.f32.mrf.mxu0
        %4649 = vmatprep.mubr.f32.mxu0 0.0
        %4650 = vmatmul.mubr.f32.gmra.mxu0 %v3187
        %v4651 = vpop.f32.mrf.mxu0
        %v4652 = vadd.f32 0.0, %v4651
        %v4653 = vpop.f32.mrf.mxu0
        %4654 = vmatprep.mubr.f32.mxu0 0.0
        %4655 = vmatmul.mubr.f32.gmra.mxu0 %v3190
        %v4656 = vpop.f32.mrf.mxu0
        %v4657 = vadd.f32 0.0, %v4656
        %v4658 = vpop.f32.mrf.mxu0
        %4659 = vmatprep.mubr.f32.mxu0 0.0
        %4660 = vmatmul.mubr.f32.gmra.mxu0 %v3193
        %v4661 = vpop.f32.mrf.mxu0
        %v4662 = vadd.f32 0.0, %v4661
        %v4663 = vpop.f32.mrf.mxu0
        %4664 = vmatprep.mubr.f32.mxu0 0.0
        %4665 = vmatmul.mubr.f32.gmra.mxu0 %v3196
        %v4666 = vpop.f32.mrf.mxu0
        %v4667 = vadd.f32 0.0, %v4666
        %v4668 = vpop.f32.mrf.mxu0
        %4669 = vmatprep.mubr.f32.mxu0 0.0
        %4670 = vmatmul.mubr.f32.gmra.mxu0 %v3199
        %v4671 = vpop.f32.mrf.mxu0
        %v4672 = vadd.f32 0.0, %v4671
        %v4673 = vpop.f32.mrf.mxu0
        %4674 = vmatprep.mubr.f32.mxu0 0.0
        %4675 = vmatmul.mubr.f32.gmra.mxu0 %v3202
        %v4676 = vpop.f32.mrf.mxu0
        %v4677 = vadd.f32 0.0, %v4676
        %v4678 = vpop.f32.mrf.mxu0
        %4679 = vdwg.mxu0
        %v4680 = vmul.f32 %v4360, %v4522
        %v4681 = vmul.f32 %v4362, %v4527
        %v4682 = vmul.f32 %v4364, %v4532
        %v4683 = vmul.f32 %v4366, %v4537
        %v4684 = vmul.f32 %v4368, %v4542
        %v4685 = vmul.f32 %v4370, %v4547
        %v4686 = vmul.f32 %v4372, %v4552
        %v4687 = vmul.f32 %v4374, %v4557
        %v4688 = vmul.f32 %v4376, %v4562
        %v4689 = vmul.f32 %v4378, %v4567
        %v4690 = vmul.f32 %v4380, %v4572
        %v4691 = vmul.f32 %v4382, %v4577
        %v4692 = vmul.f32 %v4384, %v4582
        %v4693 = vmul.f32 %v4386, %v4587
        %v4694 = vmul.f32 %v4388, %v4592
        %v4695 = vmul.f32 %v4390, %v4597
        %v4696 = vmul.f32 %v4392, %v4602
        %v4697 = vmul.f32 %v4394, %v4607
        %v4698 = vmul.f32 %v4396, %v4612
        %v4699 = vmul.f32 %v4398, %v4617
        %v4700 = vmul.f32 %v4400, %v4622
        %v4701 = vmul.f32 %v4402, %v4627
        %v4702 = vmul.f32 %v4404, %v4632
        %v4703 = vmul.f32 %v4406, %v4637
        %v4704 = vmul.f32 %v4408, %v4642
        %v4705 = vmul.f32 %v4410, %v4647
        %v4706 = vmul.f32 %v4412, %v4652
        %v4707 = vmul.f32 %v4414, %v4657
        %v4708 = vmul.f32 %v4416, %v4662
        %v4709 = vmul.f32 %v4418, %v4667
        %v4710 = vmul.f32 %v4420, %v4672
        %v4711 = vmul.f32 %v4422, %v4677
        %v4712 = vadd.f32 %v4295, %v4680
        %v4713 = vadd.f32 %v4296, %v4681
        %v4714 = vadd.f32 %v4297, %v4682
        %v4715 = vadd.f32 %v4298, %v4683
        %v4716 = vadd.f32 %v4299, %v4684
        %v4717 = vadd.f32 %v4300, %v4685
        %v4718 = vadd.f32 %v4301, %v4686
        %v4719 = vadd.f32 %v4302, %v4687
        %v4720 = vadd.f32 %v4303, %v4688
        %v4721 = vadd.f32 %v4304, %v4689
        %v4722 = vadd.f32 %v4305, %v4690
        %v4723 = vadd.f32 %v4306, %v4691
        %v4724 = vadd.f32 %v4307, %v4692
        %v4725 = vadd.f32 %v4308, %v4693
        %v4726 = vadd.f32 %v4309, %v4694
        %v4727 = vadd.f32 %v4310, %v4695
        %v4728 = vadd.f32 %v4311, %v4696
        %v4729 = vadd.f32 %v4312, %v4697
        %v4730 = vadd.f32 %v4313, %v4698
        %v4731 = vadd.f32 %v4314, %v4699
        %v4732 = vadd.f32 %v4315, %v4700
        %v4733 = vadd.f32 %v4316, %v4701
        %v4734 = vadd.f32 %v4317, %v4702
        %v4735 = vadd.f32 %v4318, %v4703
        %v4736 = vadd.f32 %v4319, %v4704
        %v4737 = vadd.f32 %v4320, %v4705
        %v4738 = vadd.f32 %v4321, %v4706
        %v4739 = vadd.f32 %v4322, %v4707
        %v4740 = vadd.f32 %v4323, %v4708
        %v4741 = vadd.f32 %v4324, %v4709
        %v4742 = vadd.f32 %v4325, %v4710
        %v4743 = vadd.f32 %v4326, %v4711
        %v4744 = vrcp.pop %v4423
        %v4745 = vrcp.pop %v4424
        %v4746 = vrcp.pop %v4425
        %v4747 = vrcp.pop %v4426
        %v4748 = vrcp.pop %v4427
        %v4749 = vrcp.pop %v4428
        %v4750 = vrcp.pop %v4429
        %v4751 = vrcp.pop %v4430
        %v4752 = vrcp.pop %v4431
        %v4753 = vrcp.pop %v4432
        %v4754 = vrcp.pop %v4433
        %v4755 = vrcp.pop %v4434
        %v4756 = vrcp.pop %v4435
        %v4757 = vrcp.pop %v4436
        %v4758 = vrcp.pop %v4437
        %v4759 = vrcp.pop %v4438
        %v4760 = vrcp.pop %v4439
        %v4761 = vrcp.pop %v4440
        %v4762 = vrcp.pop %v4441
        %v4763 = vrcp.pop %v4442
        %v4764 = vrcp.pop %v4443
        %v4765 = vrcp.pop %v4444
        %v4766 = vrcp.pop %v4445
        %v4767 = vrcp.pop %v4446
        %v4768 = vrcp.pop %v4447
        %v4769 = vrcp.pop %v4448
        %v4770 = vrcp.pop %v4449
        %v4771 = vrcp.pop %v4450
        %v4772 = vrcp.pop %v4451
        %v4773 = vrcp.pop %v4452
        %v4774 = vrcp.pop %v4453
        %v4775 = vrcp.pop %v4454
        %v4776 = vmul.f32 %v4712, %v4744
        %v4777 = vmul.f32 %v4713, %v4745
        %v4778 = vmul.f32 %v4714, %v4746
        %v4779 = vmul.f32 %v4715, %v4747
        %v4780 = vmul.f32 %v4716, %v4748
        %v4781 = vmul.f32 %v4717, %v4749
        %v4782 = vmul.f32 %v4718, %v4750
        %v4783 = vmul.f32 %v4719, %v4751
        %v4784 = vmul.f32 %v4720, %v4752
        %v4785 = vmul.f32 %v4721, %v4753
        %v4786 = vmul.f32 %v4722, %v4754
        %v4787 = vmul.f32 %v4723, %v4755
        %v4788 = vmul.f32 %v4724, %v4756
        %v4789 = vmul.f32 %v4725, %v4757
        %v4790 = vmul.f32 %v4726, %v4758
        %v4791 = vmul.f32 %v4727, %v4759
        %v4792 = vmul.f32 %v4728, %v4760
        %v4793 = vmul.f32 %v4729, %v4761
        %v4794 = vmul.f32 %v4730, %v4762
        %v4795 = vmul.f32 %v4731, %v4763
        %v4796 = vmul.f32 %v4732, %v4764
        %v4797 = vmul.f32 %v4733, %v4765
        %v4798 = vmul.f32 %v4734, %v4766
        %v4799 = vmul.f32 %v4735, %v4767
        %v4800 = vmul.f32 %v4736, %v4768
        %v4801 = vmul.f32 %v4737, %v4769
        %v4802 = vmul.f32 %v4738, %v4770
        %v4803 = vmul.f32 %v4739, %v4771
        %v4804 = vmul.f32 %v4740, %v4772
        %v4805 = vmul.f32 %v4741, %v4773
        %v4806 = vmul.f32 %v4742, %v4774
        %v4807 = vmul.f32 %v4743, %v4775
        %v4808 = vld [vmem:[%s5] sm:$0xff]
        %v4809 = vld [vmem:[%s5 + $0x8] sm:$0xff]
        %v4810 = vld [vmem:[%s5 + $0x10] sm:$0xff]
        %v4811 = vld [vmem:[%s5 + $0x18] sm:$0xff]
        %v4812 = vld [vmem:[%s6] sm:$0x1]
        %v4814 = vlaneseq
        %v4815 = vshrl.u32 %v4814, 7
        %v4816 = vsub.s32 0, %v4815
        %v4817 = vrot.slane %v4812, %v4816
        %v4820 = vsel %vm460, %v4776, 0
        %v4823 = vsel %vm460, %v4777, 0
        %v4826 = vsel %vm460, %v4778, 0
        %v4829 = vsel %vm460, %v4779, 0
        %v4832 = vsel %vm460, %v4780, 0
        %v4835 = vsel %vm460, %v4781, 0
        %v4838 = vsel %vm460, %v4782, 0
        %v4841 = vsel %vm460, %v4783, 0
        %v4844 = vsel %vm460, %v4784, 0
        %v4847 = vsel %vm460, %v4785, 0
        %v4850 = vsel %vm460, %v4786, 0
        %v4853 = vsel %vm460, %v4787, 0
        %v4856 = vsel %vm460, %v4788, 0
        %v4859 = vsel %vm460, %v4789, 0
        %v4862 = vsel %vm460, %v4790, 0
        %v4865 = vsel %vm460, %v4791, 0
        %v4868 = vsel %vm460, %v4792, 0
        %v4871 = vsel %vm460, %v4793, 0
        %v4874 = vsel %vm460, %v4794, 0
        %v4877 = vsel %vm460, %v4795, 0
        %v4880 = vsel %vm460, %v4796, 0
        %v4883 = vsel %vm460, %v4797, 0
        %v4886 = vsel %vm460, %v4798, 0
        %v4889 = vsel %vm460, %v4799, 0
        %v4892 = vsel %vm460, %v4800, 0
        %v4895 = vsel %vm460, %v4801, 0
        %v4898 = vsel %vm460, %v4802, 0
        %v4901 = vsel %vm460, %v4803, 0
        %v4904 = vsel %vm460, %v4804, 0
        %v4907 = vsel %vm460, %v4805, 0
        %v4910 = vsel %vm460, %v4806, 0
        %v4913 = vsel %vm460, %v4807, 0
        %4915 = vmatprep.subr.mxu0 0.0
        %4916 = vmatpush1.msra.mxu0 0.0
        %4917 = vmatprep.subr.mxu0 0.0
        %4918 = vmatpush1.msra.mxu0 0.0
        %4919 = vmatprep.subr.mxu0 0.0
        %4920 = vmatpush1.msra.mxu0 0.0
        %4921 = vmatprep.subr.mxu0 0.0
        %4922 = vmatpush1.msra.mxu0 0.0
        %4923 = vmatprep.subr.mxu0 0.0
        %4924 = vmatpush1.msra.mxu0 0.0
        %4925 = vmatprep.subr.mxu0 0.0
        %4926 = vmatpush1.msra.mxu0 0.0
        %4927 = vmatprep.subr.mxu0 0.0
        %4928 = vmatpush1.msra.mxu0 0.0
        %4929 = vmatprep.subr.mxu0 0.0
        %4930 = vmatpush1.msra.mxu0 0.0
        %4931 = vmatprep.subr.mxu0 0.0
        %4932 = vmatpush1.msra.mxu0 0.0
        %4933 = vmatprep.subr.mxu0 0.0
        %4934 = vmatpush1.msra.mxu0 0.0
        %4935 = vmatprep.subr.mxu0 0.0
        %4936 = vmatpush1.msra.mxu0 0.0
        %4937 = vmatprep.subr.mxu0 0.0
        %4938 = vmatpush1.msra.mxu0 0.0
        %4939 = vmatprep.subr.mxu0 0.0
        %4940 = vmatpush1.msra.mxu0 %v4811
        %4941 = vmatprep.subr.mxu0 0.0
        %4942 = vmatpush1.msra.mxu0 %v4810
        %4943 = vmatprep.subr.mxu0 0.0
        %4944 = vmatpush1.msra.mxu0 %v4809
        %4945 = vmatprep.subr.mxu0 0.0
        %4946 = vmatpush1.msra.mxu0 %v4808
        %4947 = vmatprep.subr.mxu0 0.0
        %4948 = vmatpush2.msra.mxu0 0.0
        %4949 = vmatprep.subr.mxu0 0.0
        %4950 = vmatpush2.msra.mxu0 0.0
        %4951 = vmatprep.subr.mxu0 0.0
        %4952 = vmatpush2.msra.mxu0 0.0
        %4953 = vmatprep.subr.mxu0 0.0
        %4954 = vmatpush2.msra.mxu0 0.0
        %4955 = vmatprep.subr.mxu0 0.0
        %4956 = vmatpush2.msra.mxu0 0.0
        %4957 = vmatprep.subr.mxu0 0.0
        %4958 = vmatpush2.msra.mxu0 0.0
        %4959 = vmatprep.subr.mxu0 0.0
        %4960 = vmatpush2.msra.mxu0 0.0
        %4961 = vmatprep.subr.mxu0 0.0
        %4962 = vmatpush2.msra.mxu0 0.0
        %4963 = vmatprep.subr.mxu0 0.0
        %4964 = vmatpush2.msra.mxu0 0.0
        %4965 = vmatprep.subr.mxu0 0.0
        %4966 = vmatpush2.msra.mxu0 0.0
        %4967 = vmatprep.subr.mxu0 0.0
        %4968 = vmatpush2.msra.mxu0 0.0
        %4969 = vmatprep.subr.mxu0 0.0
        %4970 = vmatpush2.msra.mxu0 0.0
        %4971 = vmatprep.subr.mxu0 0.0
        %4972 = vmatpush2.msra.mxu0 0.0
        %4973 = vmatprep.subr.mxu0 0.0
        %4974 = vmatpush2.msra.mxu0 0.0
        %4975 = vmatprep.subr.mxu0 0.0
        %4976 = vmatpush2.msra.mxu0 0.0
        %4977 = vmatprep.subr.mxu0 0.0
        %4978 = vmatpush2.msra.mxu0 0.0
        %4979 = vmatprep.mubr.f32.mxu0 0.0
        %4980 = vmatmul.mubr.f32.gmra.mxu0 %v4820
        %v4981 = vpop.f32.mrf.mxu0
        %v4982 = vadd.f32 %v4817, %v4981
        %v4983 = vpop.f32.mrf.mxu0
        %4984 = vmatprep.mubr.f32.mxu0 0.0
        %4985 = vmatmul.mubr.f32.gmra.mxu0 %v4823
        %v4986 = vpop.f32.mrf.mxu0
        %v4987 = vadd.f32 %v4817, %v4986
        %v4988 = vpop.f32.mrf.mxu0
        %4989 = vmatprep.mubr.f32.mxu0 0.0
        %4990 = vmatmul.mubr.f32.gmra.mxu0 %v4826
        %v4991 = vpop.f32.mrf.mxu0
        %v4992 = vadd.f32 %v4817, %v4991
        %v4993 = vpop.f32.mrf.mxu0
        %4994 = vmatprep.mubr.f32.mxu0 0.0
        %4995 = vmatmul.mubr.f32.gmra.mxu0 %v4829
        %v4996 = vpop.f32.mrf.mxu0
        %v4997 = vadd.f32 %v4817, %v4996
        %v4998 = vpop.f32.mrf.mxu0
        %4999 = vmatprep.mubr.f32.mxu0 0.0
        %5000 = vmatmul.mubr.f32.gmra.mxu0 %v4832
        %v5001 = vpop.f32.mrf.mxu0
        %v5002 = vadd.f32 %v4817, %v5001
        %v5003 = vpop.f32.mrf.mxu0
        %5004 = vmatprep.mubr.f32.mxu0 0.0
        %5005 = vmatmul.mubr.f32.gmra.mxu0 %v4835
        %v5006 = vpop.f32.mrf.mxu0
        %v5007 = vadd.f32 %v4817, %v5006
        %v5008 = vpop.f32.mrf.mxu0
        %5009 = vmatprep.mubr.f32.mxu0 0.0
        %5010 = vmatmul.mubr.f32.gmra.mxu0 %v4838
        %v5011 = vpop.f32.mrf.mxu0
        %v5012 = vadd.f32 %v4817, %v5011
        %v5013 = vpop.f32.mrf.mxu0
        %5014 = vmatprep.mubr.f32.mxu0 0.0
        %5015 = vmatmul.mubr.f32.gmra.mxu0 %v4841
        %v5016 = vpop.f32.mrf.mxu0
        %v5017 = vadd.f32 %v4817, %v5016
        %v5018 = vpop.f32.mrf.mxu0
        %5019 = vmatprep.mubr.f32.mxu0 0.0
        %5020 = vmatmul.mubr.f32.gmra.mxu0 %v4844
        %v5021 = vpop.f32.mrf.mxu0
        %v5022 = vadd.f32 %v4817, %v5021
        %v5023 = vpop.f32.mrf.mxu0
        %5024 = vmatprep.mubr.f32.mxu0 0.0
        %5025 = vmatmul.mubr.f32.gmra.mxu0 %v4847
        %v5026 = vpop.f32.mrf.mxu0
        %v5027 = vadd.f32 %v4817, %v5026
        %v5028 = vpop.f32.mrf.mxu0
        %5029 = vmatprep.mubr.f32.mxu0 0.0
        %5030 = vmatmul.mubr.f32.gmra.mxu0 %v4850
        %v5031 = vpop.f32.mrf.mxu0
        %v5032 = vadd.f32 %v4817, %v5031
        %v5033 = vpop.f32.mrf.mxu0
        %5034 = vmatprep.mubr.f32.mxu0 0.0
        %5035 = vmatmul.mubr.f32.gmra.mxu0 %v4853
        %v5036 = vpop.f32.mrf.mxu0
        %v5037 = vadd.f32 %v4817, %v5036
        %v5038 = vpop.f32.mrf.mxu0
        %5039 = vmatprep.mubr.f32.mxu0 0.0
        %5040 = vmatmul.mubr.f32.gmra.mxu0 %v4856
        %v5041 = vpop.f32.mrf.mxu0
        %v5042 = vadd.f32 %v4817, %v5041
        %v5043 = vpop.f32.mrf.mxu0
        %5044 = vmatprep.mubr.f32.mxu0 0.0
        %5045 = vmatmul.mubr.f32.gmra.mxu0 %v4859
        %v5046 = vpop.f32.mrf.mxu0
        %v5047 = vadd.f32 %v4817, %v5046
        %v5048 = vpop.f32.mrf.mxu0
        %5049 = vmatprep.mubr.f32.mxu0 0.0
        %5050 = vmatmul.mubr.f32.gmra.mxu0 %v4862
        %v5051 = vpop.f32.mrf.mxu0
        %v5052 = vadd.f32 %v4817, %v5051
        %v5053 = vpop.f32.mrf.mxu0
        %5054 = vmatprep.mubr.f32.mxu0 0.0
        %5055 = vmatmul.mubr.f32.gmra.mxu0 %v4865
        %v5056 = vpop.f32.mrf.mxu0
        %v5057 = vadd.f32 %v4817, %v5056
        %v5058 = vpop.f32.mrf.mxu0
        %5059 = vmatprep.mubr.f32.mxu0 0.0
        %5060 = vmatmul.mubr.f32.gmra.mxu0 %v4868
        %v5061 = vpop.f32.mrf.mxu0
        %v5062 = vadd.f32 %v4817, %v5061
        %v5063 = vpop.f32.mrf.mxu0
        %5064 = vmatprep.mubr.f32.mxu0 0.0
        %5065 = vmatmul.mubr.f32.gmra.mxu0 %v4871
        %v5066 = vpop.f32.mrf.mxu0
        %v5067 = vadd.f32 %v4817, %v5066
        %v5068 = vpop.f32.mrf.mxu0
        %5069 = vmatprep.mubr.f32.mxu0 0.0
        %5070 = vmatmul.mubr.f32.gmra.mxu0 %v4874
        %v5071 = vpop.f32.mrf.mxu0
        %v5072 = vadd.f32 %v4817, %v5071
        %v5073 = vpop.f32.mrf.mxu0
        %5074 = vmatprep.mubr.f32.mxu0 0.0
        %5075 = vmatmul.mubr.f32.gmra.mxu0 %v4877
        %v5076 = vpop.f32.mrf.mxu0
        %v5077 = vadd.f32 %v4817, %v5076
        %v5078 = vpop.f32.mrf.mxu0
        %5079 = vmatprep.mubr.f32.mxu0 0.0
        %5080 = vmatmul.mubr.f32.gmra.mxu0 %v4880
        %v5081 = vpop.f32.mrf.mxu0
        %v5082 = vadd.f32 %v4817, %v5081
        %v5083 = vpop.f32.mrf.mxu0
        %5084 = vmatprep.mubr.f32.mxu0 0.0
        %5085 = vmatmul.mubr.f32.gmra.mxu0 %v4883
        %v5086 = vpop.f32.mrf.mxu0
        %v5087 = vadd.f32 %v4817, %v5086
        %v5088 = vpop.f32.mrf.mxu0
        %5089 = vmatprep.mubr.f32.mxu0 0.0
        %5090 = vmatmul.mubr.f32.gmra.mxu0 %v4886
        %v5091 = vpop.f32.mrf.mxu0
        %v5092 = vadd.f32 %v4817, %v5091
        %v5093 = vpop.f32.mrf.mxu0
        %5094 = vmatprep.mubr.f32.mxu0 0.0
        %5095 = vmatmul.mubr.f32.gmra.mxu0 %v4889
        %v5096 = vpop.f32.mrf.mxu0
        %v5097 = vadd.f32 %v4817, %v5096
        %v5098 = vpop.f32.mrf.mxu0
        %5099 = vmatprep.mubr.f32.mxu0 0.0
        %5100 = vmatmul.mubr.f32.gmra.mxu0 %v4892
        %v5101 = vpop.f32.mrf.mxu0
        %v5102 = vadd.f32 %v4817, %v5101
        %v5103 = vpop.f32.mrf.mxu0
        %5104 = vmatprep.mubr.f32.mxu0 0.0
        %5105 = vmatmul.mubr.f32.gmra.mxu0 %v4895
        %v5106 = vpop.f32.mrf.mxu0
        %v5107 = vadd.f32 %v4817, %v5106
        %v5108 = vpop.f32.mrf.mxu0
        %5109 = vmatprep.mubr.f32.mxu0 0.0
        %5110 = vmatmul.mubr.f32.gmra.mxu0 %v4898
        %v5111 = vpop.f32.mrf.mxu0
        %v5112 = vadd.f32 %v4817, %v5111
        %v5113 = vpop.f32.mrf.mxu0
        %5114 = vmatprep.mubr.f32.mxu0 0.0
        %5115 = vmatmul.mubr.f32.gmra.mxu0 %v4901
        %v5116 = vpop.f32.mrf.mxu0
        %v5117 = vadd.f32 %v4817, %v5116
        %v5118 = vpop.f32.mrf.mxu0
        %5119 = vmatprep.mubr.f32.mxu0 0.0
        %5120 = vmatmul.mubr.f32.gmra.mxu0 %v4904
        %v5121 = vpop.f32.mrf.mxu0
        %v5122 = vadd.f32 %v4817, %v5121
        %v5123 = vpop.f32.mrf.mxu0
        %5124 = vmatprep.mubr.f32.mxu0 0.0
        %5125 = vmatmul.mubr.f32.gmra.mxu0 %v4907
        %v5126 = vpop.f32.mrf.mxu0
        %v5127 = vadd.f32 %v4817, %v5126
        %v5128 = vpop.f32.mrf.mxu0
        %5129 = vmatprep.mubr.f32.mxu0 0.0
        %5130 = vmatmul.mubr.f32.gmra.mxu0 %v4910
        %v5131 = vpop.f32.mrf.mxu0
        %v5132 = vadd.f32 %v4817, %v5131
        %v5133 = vpop.f32.mrf.mxu0
        %5134 = vmatprep.mubr.f32.mxu0 0.0
        %5135 = vmatmul.mubr.f32.gmra.mxu0 %v4913
        %v5136 = vpop.f32.mrf.mxu0
        %v5137 = vadd.f32 %v4817, %v5136
        %v5138 = vpop.f32.mrf.mxu0
        %5139 = vdwg.mxu0
        %5140 = vst [vmem:[%s304] sm:$0xff] %v4982
        %5141 = vst [vmem:[%s304 + $0x8] sm:$0xff] %v4987
        %5142 = vst [vmem:[%s304 + $0x10] sm:$0xff] %v4992
        %5143 = vst [vmem:[%s304 + $0x18] sm:$0xff] %v4997
        %5144 = vst [vmem:[%s304 + $0x20] sm:$0xff] %v5002
        %5145 = vst [vmem:[%s304 + $0x28] sm:$0xff] %v5007
        %5146 = vst [vmem:[%s304 + $0x30] sm:$0xff] %v5012
        %5147 = vst [vmem:[%s304 + $0x38] sm:$0xff] %v5017
        %5148 = vst [vmem:[%s304 + $0x40] sm:$0xff] %v5022
        %5149 = vst [vmem:[%s304 + $0x48] sm:$0xff] %v5027
        %5150 = vst [vmem:[%s304 + $0x50] sm:$0xff] %v5032
        %5151 = vst [vmem:[%s304 + $0x58] sm:$0xff] %v5037
        %5152 = vst [vmem:[%s304 + $0x60] sm:$0xff] %v5042
        %5153 = vst [vmem:[%s304 + $0x68] sm:$0xff] %v5047
        %5154 = vst [vmem:[%s304 + $0x70] sm:$0xff] %v5052
        %5155 = vst [vmem:[%s304 + $0x78] sm:$0xff] %v5057
        %5156 = vst [vmem:[%s304 + $0x80] sm:$0xff] %v5062
        %5157 = vst [vmem:[%s304 + $0x88] sm:$0xff] %v5067
        %5158 = vst [vmem:[%s304 + $0x90] sm:$0xff] %v5072
        %5159 = vst [vmem:[%s304 + $0x98] sm:$0xff] %v5077
        %5160 = vst [vmem:[%s304 + $0xa0] sm:$0xff] %v5082
        %5161 = vst [vmem:[%s304 + $0xa8] sm:$0xff] %v5087
        %5162 = vst [vmem:[%s304 + $0xb0] sm:$0xff] %v5092
        %5163 = vst [vmem:[%s304 + $0xb8] sm:$0xff] %v5097
        %5164 = vst [vmem:[%s304 + $0xc0] sm:$0xff] %v5102
        %5165 = vst [vmem:[%s304 + $0xc8] sm:$0xff] %v5107
        %5166 = vst [vmem:[%s304 + $0xd0] sm:$0xff] %v5112
        %5167 = vst [vmem:[%s304 + $0xd8] sm:$0xff] %v5117
        %5168 = vst [vmem:[%s304 + $0xe0] sm:$0xff] %v5122
        %5169 = vst [vmem:[%s304 + $0xe8] sm:$0xff] %v5127
        %5170 = vst [vmem:[%s304 + $0xf0] sm:$0xff] %v5132
        %5171 = vst [vmem:[%s304 + $0xf8] sm:$0xff] %v5137
        %s5172 = sand.u32 %s191, 1
        %s5173 = scalar_lea.sflag [#allocation3], %s5172
        %s5174 = sand.u32 %s191, 1
        %s5175 = smul.addr %s5174, 256
        %s5176 = scalar_lea.vmem [#allocation2], %s5175
        // Predicated region
        $region49: #{tpu_custom_call.1} parent=47 // pred_check
          %p5177 = pneg %p201
        $region50: #{tpu_custom_call.1} parent=47 // pred_check_branch
          %5179 = sbr.rel (%p5177) target = $region52
        $region51: #{tpu_custom_call.1} parent=47 // pred_region
          %s5180 = smul.u32 32, %s21
          %s5182 = ssub.s32 4096, 4096
          %5183 = vsyncadd %s5173, %s5182
          %s5184 = smul.addr %s5180, 128
          %s5185 = scalar_lea.hbm %s7, %s5184
          %s5186 = sshll.u32 %s5176, 4
          %s5187 = int_to_ptr.vmem [resolvable:$true] %s5186
          %5192 = dma.vmem_to_hbm [thread:$0]  %s5187, 4096, %s5185, %s5173, 128, 128, 8
        $region52: #{tpu_custom_call.1} parent=47 // pred_fallthru
          _
      $region48: #{tpu_custom_call.1} parent=5 // pred_fallthru
        _
      %p5193 = scmp.le.s32.totalorder 2, %s16
      // Predicated region
      $region53: #{tpu_custom_call.1} parent=5 // pred_check
        %p5194 = pneg %p5193
      $region54: #{tpu_custom_call.1} parent=5 // pred_check_branch
        %5196 = sbr.rel (%p5194) target = $region56
      $region55: #{tpu_custom_call.1} parent=5 // pred_region
        %s5197 = ssub.s32 %s16, 2
        // Predicated region
        $region57: #{tpu_custom_call.1} parent=55 // pred_check
          %p5198 = pneg %p207
        $region58: #{tpu_custom_call.1} parent=55 // pred_check_branch
          %5200 = sbr.rel (%p5198) target = $region60
        $region59: #{tpu_custom_call.1} parent=55 // pred_region
          %s5201 = sand.u32 %s192, 1
          %s5202 = scalar_lea.sflag [#allocation3], %s5201
          %s5203 = sand.u32 %s192, 1
          %s5204 = smul.addr %s5203, 256
          %s5205 = scalar_lea.vmem [#allocation2], %s5204
          %5206 = dma.done %s5202, 4096
        $region60: #{tpu_custom_call.1} parent=55 // pred_fallthru
          _
      $region56: #{tpu_custom_call.1} parent=5 // pred_fallthru
        _
    $region6: #{tpu_custom_call.1} parent=1 // loop_footer
      %s20 = sadd.s32 1, %s16
    $region7: #{tpu_custom_call.1} parent=1 // loop_footer_branch
      %15 = sbr.rel target = $region3
    $region8: #{tpu_custom_call.1} parent=1 // loop_exit
      _
    %5207 = vsyncpa [#allocation3], 1
    %s5208 = scalar_lea.sflag [#allocation3], 1
    %5209 = vsyncpa %s5208, 1

</llo_original>
